<compile_context>
chip_gen: v7x
topology: tpu7x:2x2x1
jax: 0.10.0
libtpu: 0.0.40
codegen_flags: <defaults>
</compile_context>

<pallas_src>
import functools

import jax
import jax.numpy as jnp
from jax.experimental import pallas as pl
from jax.experimental.pallas import tpu as pltpu

LANE = 128          # TPU lane width
SUBLANE = 16        # bf16-native sublane granularity for the target-row tiles
CDIM = 8            # xyz coords zero-padded to 8 -> sublane-aligned MXU K for the cross term
_LIVE_TEMPS = 6     # live (TILE_NT, Ns) f32 temporaries in the kernel (d2, d, wsel, hit, ...)


def _round_up(v, m):
    return ((v + m - 1) // m) * m


def _pad_axis(a, axis, new_size, value=0):
    pad = new_size - a.shape[axis]
    if pad <= 0:
        return a
    widths = [(0, 0)] * a.ndim
    widths[axis] = (0, pad)
    return jnp.pad(a, widths, constant_values=value)


def _vmem_capacity_bytes():
    """Per-TensorCore VMEM capacity; conservative default if the query is unavailable."""
    try:
        cap = getattr(pltpu.get_tpu_info(), "vmem_capacity_bytes", None)
        if cap:
            return int(cap)
    except Exception:
        pass
    return 64 * 1024 * 1024  # v7x per-TensorCore VMEM (smallest of the targeted generations)


def _pick_tile_nt(nt, ns_p, resident_bytes, stream_row_bytes, budget_bytes, cap):
    """Largest 16-row-aligned target tile such that streamed tiles (double-buffered) plus
    the live (tile, Ns) f32 temporaries fit the budget after subtracting the resident
    operands; then rebalanced so the final tile carries minimal row padding."""
    avail = max(budget_bytes - resident_bytes, 0)
    per_row = stream_row_bytes + _LIVE_TEMPS * 4 * ns_p
    tile = avail // max(per_row, 1)
    tile = max((tile // SUBLANE) * SUBLANE, SUBLANE)
    tile = min(tile, cap)
    n_tiles = -(-nt // tile)
    tile = min(tile, _round_up(-(-nt // n_tiles), SUBLANE))
    return max(tile, SUBLANE)


def _knn_interpolate(pos_t_ref, batch_t_ref, pos_s_t_ref, snorm_ref, batch_s_ref, x_ref, k):
    """Inverse-squared-distance weighted k-NN interpolation for one target-row tile.
    Returns the interpolated features (T, Cx_p) in f32."""
    pos_t = pos_t_ref[...]                      # (T, 8)   f32 target positions (coord-padded)
    bt = batch_t_ref[...]                       # (T, 1)   i32 target batch ids

    BIG = jnp.float32(1e30)
    EPS = jnp.float32(1e-16)

    # |t - s|^2 = |t|^2 + |s|^2 - 2 t.s : the cross term is an f32 MXU matmul (K = 8),
    # |s|^2 is a resident (1, Ns) input, |t|^2 is a cheap per-tile reduction.
    cross = jnp.dot(pos_t, pos_s_t_ref[...], preferred_element_type=jnp.float32)   # (T, Ns)
    tnorm = jnp.sum(pos_t * pos_t, axis=1, keepdims=True)                           # (T, 1)
    d2 = jnp.maximum(tnorm + snorm_ref[...] - 2.0 * cross, 0.0)

    # mask cross-batch and padded source columns (padded cols carry batch id -2)
    d = jnp.where(bt == batch_s_ref[...], d2, BIG)

    # Iterative k-NN: accumulate a (T, Ns) selection-weight matrix so the feature gather
    # collapses into a single MXU matmul afterwards.  No per-iteration tie-count / wsum
    # reductions: each selected point gets its full weight, wsum is taken once at the end.
    wsel = jnp.zeros_like(d)
    for _ in range(k):
        dmin = jnp.min(d, axis=-1, keepdims=True)                                   # (T, 1)
        hit = d == dmin                                                             # (T, Ns)
        wgt = jnp.where(dmin >= BIG, 0.0,
                        pl.reciprocal(jnp.maximum(dmin, EPS), approx=True))         # torch clamp 1e-16
        wsel = jnp.where(hit, wsel + wgt, wsel)
        d = jnp.where(hit, BIG, d)                                                  # drop chosen point(s)
    wsum = jnp.sum(wsel, axis=-1, keepdims=True)                                    # one XLU reduction

    # single fused gather matmul (bf16 operands, f32 accumulate)
    acc = jnp.dot(wsel.astype(jnp.bfloat16), x_ref[...], preferred_element_type=jnp.float32)
    inv = pl.reciprocal(jnp.maximum(wsum, EPS), approx=True)   # also guards wsum == 0 rows
    return acc * inv


def _fp_kernel_fused(pos_t_ref, batch_t_ref, pos_s_t_ref, snorm_ref, batch_s_ref,
                     x_ref, x_skip_ref, w_ref, b_ref, o_ref, *, k):
    y = _knn_interpolate(pos_t_ref, batch_t_ref, pos_s_t_ref, snorm_ref, batch_s_ref, x_ref, k)
    # x_skip was pre-shifted into lanes [Cin, Cin+Cskip); y occupies lanes [0, Cin):
    # cat([y, x_skip], 1) @ W  ==  (y + x_skip_shifted) @ W_cat  -> one MXU matmul.
    feat = (y + x_skip_ref[...].astype(jnp.float32)).astype(jnp.bfloat16)
    h = jnp.dot(feat, w_ref[...], preferred_element_type=jnp.float32) + b_ref[...]
    o_ref[...] = jnp.maximum(h, 0.2 * h).astype(o_ref.dtype)   # LeakyReLU(0.2); BN folded in (W, b)


def _fp_kernel_split(pos_t_ref, batch_t_ref, pos_s_t_ref, snorm_ref, batch_s_ref,
                     x_ref, x_skip_ref, w1_ref, w2_ref, b_ref, o_ref, *, k):
    y = _knn_interpolate(pos_t_ref, batch_t_ref, pos_s_t_ref, snorm_ref, batch_s_ref, x_ref, k)
    # cat([y, x_skip], 1) @ W + b  ==  y @ W1 + x_skip @ W2 + b
    h = jnp.dot(y.astype(jnp.bfloat16), w1_ref[...], preferred_element_type=jnp.float32)
    h = h + jnp.dot(x_skip_ref[...], w2_ref[...], preferred_element_type=jnp.float32)
    h = h + b_ref[...]
    o_ref[...] = jnp.maximum(h, 0.2 * h).astype(o_ref.dtype)


def fp_module_forward(x, pos, batch, x_skip, pos_skip, batch_skip,
                      lin_w, lin_b,
                      bn_gamma=None, bn_beta=None, bn_mean=None, bn_var=None,
                      bn_eps=1e-5, k=3):
    """Pallas implementation of FPModule.forward. Returns (out, pos_skip, batch_skip)."""
    Ns, Cin = x.shape
    Nt, Cskip = x_skip.shape
    Cout = lin_w.shape[1]
    assert lin_w.shape[0] == Cin + Cskip

    # ---- fold BatchNorm1d (eval) into the Linear: y = ((xW+b)-mu)*g/sqrt(v+eps)+beta ----
    w = lin_w.astype(jnp.float32)
    b = lin_b.astype(jnp.float32)
    if bn_gamma is not None:
        scale = bn_gamma.astype(jnp.float32) / jnp.sqrt(bn_var.astype(jnp.float32) + bn_eps)
        w = w * scale[None, :]
        b = (b - bn_mean.astype(jnp.float32)) * scale + bn_beta.astype(jnp.float32)

    cout_p = _round_up(Cout, LANE)
    ns_p = _round_up(Ns, LANE)                 # lane-dense (T, Ns) temporaries + full MXU K
    fuse_mlp = (Cin + Cskip) <= LANE

    # ---- feature / weight slabs (bf16 MXU operands, channel dims padded to 128-lane mults) ----
    if fuse_mlp:
        cx_p = LANE
        cxs_p = LANE
        x_p = _pad_axis(x.astype(jnp.bfloat16), 1, cx_p)                           # x in lanes [0,Cin)
        xs_p = jnp.pad(x_skip, ((0, 0), (Cin, cx_p - Cin - Cskip))).astype(jnp.bfloat16)
        w_cat = _pad_axis(_pad_axis(w, 0, cx_p), 1, cout_p).astype(jnp.bfloat16)   # (128, Cout_p)
        weight_args = (w_cat,)
        kernel = functools.partial(_fp_kernel_fused, k=k)
    else:
        cx_p = _round_up(Cin, LANE)
        cxs_p = _round_up(Cskip, LANE)
        x_p = _pad_axis(x.astype(jnp.bfloat16), 1, cx_p)
        xs_p = _pad_axis(x_skip.astype(jnp.bfloat16), 1, cxs_p)
        w1_p = _pad_axis(_pad_axis(w[:Cin], 0, cx_p), 1, cout_p).astype(jnp.bfloat16)
        w2_p = _pad_axis(_pad_axis(w[Cin:], 0, cxs_p), 1, cout_p).astype(jnp.bfloat16)
        weight_args = (w1_p, w2_p)
        kernel = functools.partial(_fp_kernel_split, k=k)
    b_p = _pad_axis(b.reshape(1, Cout), 1, cout_p)                                 # (1, Cout_p) f32

    # ---- source-side resident operands (padded along Ns; padded cols masked by batch=-2) ----
    pos32 = pos.astype(jnp.float32)
    pos_s_t = _pad_axis(_pad_axis(pos32.T, 0, CDIM), 1, ns_p)                      # (8, Ns_p)
    snorm = _pad_axis(jnp.sum(pos32 * pos32, axis=1).reshape(1, Ns), 1, ns_p)      # (1, Ns_p)
    bs = _pad_axis(batch.reshape(1, Ns).astype(jnp.int32), 1, ns_p, value=-2)      # (1, Ns_p)
    x_p = _pad_axis(x_p, 0, ns_p)                                                  # (Ns_p, Cx_p)

    # ---- generation-aware VMEM budget -> target-row tile ----
    vmem_cap = _vmem_capacity_bytes()
    vmem_limit = min(int(vmem_cap * 0.82), 100 * 1024 * 1024)   # ~52 MiB v7x, ~100 MiB v5e/v6e
    budget = vmem_limit - 6 * 1024 * 1024                       # headroom for compiler scratch

    n_weight_rows = sum(a.shape[0] for a in weight_args)
    resident_bytes = (3 * 8 * ns_p * 4                          # pos^T, |s|^2, batch (sublane pad)
                      + ns_p * cx_p * 2                         # x (bf16)
                      + n_weight_rows * cout_p * 2              # folded weight(s) (bf16)
                      + 8 * cout_p * 4)                         # bias
    stream_row_bytes = 2 * (LANE * 4 + LANE * 4 + cxs_p * 2 + cout_p * 4)   # double-buffered tiles
    cap = 512 if budget >= 80 * 1024 * 1024 else 256
    tile_nt = _pick_tile_nt(Nt, ns_p, resident_bytes, stream_row_bytes, budget, cap)
    nt_p = _round_up(Nt, tile_nt)

    # ---- target-side (streamed) operands ----
    pos_t_p = _pad_axis(_pad_axis(pos_skip.astype(jnp.float32), 1, CDIM), 0, nt_p)  # (Nt_p, 8)
    bt_p = _pad_axis(batch_skip.reshape(Nt, 1).astype(jnp.int32), 0, nt_p, value=-1)
    xs_p = _pad_axis(xs_p, 0, nt_p)

    grid = (nt_p // tile_nt,)

    # TODO(synk): for very large source clouds, add an "arbitrary" grid axis over Ns chunks with
    # an online k-NN (running best-k distances/weights in VMEM scratch) so the row tile does not
    # collapse on v7x's 64 MiB VMEM; v5e/v6e need it only at much larger Ns.

    def _call(single_buffer_residents):
        def res_spec(shape):
            if single_buffer_residents:
                # constant block index -> no double-buffering needed
                return pl.BlockSpec(shape, lambda i: (0, 0), pipeline_mode=pl.Buffered(1))
            return pl.BlockSpec(shape, lambda i: (0, 0))

        in_specs = [
            pl.BlockSpec((tile_nt, CDIM), lambda i: (i, 0)),     # pos_skip tile
            pl.BlockSpec((tile_nt, 1), lambda i: (i, 0)),        # batch_skip tile
            res_spec((CDIM, ns_p)),                              # pos^T       (resident)
            res_spec((1, ns_p)),                                 # |pos|^2     (resident)
            res_spec((1, ns_p)),                                 # batch       (resident)
            res_spec((ns_p, cx_p)),                              # x           (resident)
            pl.BlockSpec((tile_nt, cxs_p), lambda i: (i, 0)),    # x_skip tile
        ]
        in_specs += [res_spec(a.shape) for a in weight_args]     # folded weight(s) (resident)
        in_specs += [res_spec((1, cout_p))]                      # bias        (resident)

        return pl.pallas_call(
            kernel,
            grid=grid,
            in_specs=in_specs,
            out_specs=pl.BlockSpec((tile_nt, cout_p), lambda i: (i, 0)),
            out_shape=jax.ShapeDtypeStruct((nt_p, cout_p), jnp.float32),
            compiler_params=pltpu.CompilerParams(
                dimension_semantics=("parallel",),       # megacore split on v7x, harmless elsewhere
                vmem_limit_bytes=vmem_limit,
            ),
        )(pos_t_p, bt_p, pos_s_t, snorm, bs, x_p, xs_p, *weight_args, b_p)

    try:
        out_p = _call(True)    # single-buffer the resident (constant-index) operands
    except Exception:
        out_p = _call(False)   # fall back to default pipelining if Buffered(1) is unsupported

    return out_p[:Nt, :Cout], pos_skip, batch_skip


def fp_reference(x, pos, batch, x_skip, pos_skip, batch_skip,
                 lin_w, lin_b, bn_gamma, bn_beta, bn_mean, bn_var,
                 bn_eps=1e-5, k=3):
    """Pure-JAX f32 reference mirroring the PyTorch module (Linear -> BN(eval) -> LeakyReLU)."""
    d2 = jnp.sum((pos_skip[:, None, :] - pos[None, :, :]) ** 2, axis=-1)
    d2 = jnp.where(batch_skip[:, None] == batch[None, :], d2, jnp.inf)
    neg, idx = jax.lax.top_k(-d2, k)
    dk = jnp.maximum(-neg, 0.0)
    wgt = jnp.where(jnp.isfinite(dk), 1.0 / jnp.maximum(dk, 1e-16), 0.0)
    y = jnp.sum(wgt[..., None] * x[idx], axis=1) / jnp.maximum(
        jnp.sum(wgt, axis=1, keepdims=True), 1e-16)
    h = jnp.concatenate([y, x_skip], axis=1) @ lin_w + lin_b
    h = (h - bn_mean) / jnp.sqrt(bn_var + bn_eps) * bn_gamma + bn_beta
    return jnp.where(h > 0, h, 0.2 * h)


if __name__ == "__main__":
    key = jax.random.PRNGKey(0)
    keys = jax.random.split(key, 10)

    # Coarse (source) set of 128 points, fine (skip/target) set of 600 points, 2 batch elements.
    # Nt > the 512-row tile cap so the grid has >1 step and a padded final tile is exercised.
    Ns, Nt = 128, 600
    Cin, Cskip, Cout = 8, 8, 16
    K = 3

    batch = jnp.concatenate([jnp.zeros(Ns // 2, jnp.int32),
                             jnp.ones(Ns - Ns // 2, jnp.int32)])
    batch_skip = jnp.concatenate([jnp.zeros(Nt // 2, jnp.int32),
                                  jnp.ones(Nt - Nt // 2, jnp.int32)])

    pos = jax.random.normal(keys[0], (Ns, 3), jnp.float32)
    pos_skip = jax.random.normal(keys[1], (Nt, 3), jnp.float32)
    x = jax.random.normal(keys[2], (Ns, Cin), jnp.float32)
    x_skip = jax.random.normal(keys[3], (Nt, Cskip), jnp.float32)

    # Linear(Cin + Cskip, Cout) + BatchNorm1d(Cout) with non-trivial eval-mode statistics.
    lin_w = jax.random.normal(keys[4], (Cin + Cskip, Cout), jnp.float32) * 0.1
    lin_b = jax.random.normal(keys[5], (Cout,), jnp.float32) * 0.1
    bn_gamma = 1.0 + 0.1 * jax.random.normal(keys[6], (Cout,), jnp.float32)
    bn_beta = 0.1 * jax.random.normal(keys[7], (Cout,), jnp.float32)
    bn_mean = 0.1 * jax.random.normal(keys[8], (Cout,), jnp.float32)
    bn_var = 1.0 + 0.1 * jax.random.uniform(keys[9], (Cout,), jnp.float32)

    out, pos_out, batch_out = fp_module_forward(
        x, pos, batch, x_skip, pos_skip, batch_skip, lin_w, lin_b,
        bn_gamma, bn_beta, bn_mean, bn_var, k=K)
    out = jax.block_until_ready(out)

    ref = fp_reference(x, pos, batch, x_skip, pos_skip, batch_skip,
                       lin_w, lin_b, bn_gamma, bn_beta, bn_mean, bn_var, k=K)

    assert out.shape == (Nt, Cout)
    assert bool(jnp.all(jnp.isfinite(out)))
    # Loose tolerance: kernel uses bf16 feature/weight operands and approx EUP reciprocals.
    assert bool(jnp.allclose(out, ref, rtol=5e-2, atol=5e-2)), \
        float(jnp.max(jnp.abs(out - ref)))
    print("KERNEL_OK")
</pallas_src>

<mosaic_0001>
module attributes {stable_mosaic.version = 11 : i64} {
  func.func @_fp_kernel_fused(%arg0: i32, %arg1: memref<208x8xf32, #tpu.memory_space<vmem>>, %arg2: memref<208x1xi32, #tpu.memory_space<vmem>>, %arg3: memref<8x128xf32, #tpu.memory_space<vmem>>, %arg4: memref<1x128xf32, #tpu.memory_space<vmem>>, %arg5: memref<1x128xi32, #tpu.memory_space<vmem>>, %arg6: memref<128x128xbf16, #tpu.memory_space<vmem>>, %arg7: memref<208x128xbf16, #tpu.memory_space<vmem>>, %arg8: memref<128x128xbf16, #tpu.memory_space<vmem>>, %arg9: memref<1x128xf32, #tpu.memory_space<vmem>>, %arg10: memref<208x128xf32, #tpu.memory_space<vmem>>) attributes {dimension_semantics = [#tpu.dimension_semantics<parallel>], iteration_bounds = array<i64: 3>, scalar_prefetch = 0 : i64, scratch_operands = 0 : i64, tpu.core_type = #tpu.core_type<tc>, window_params = [{transform_indices = @transform_0, window_bounds = array<i64: 208, 8>}, {transform_indices = @transform_1, window_bounds = array<i64: 208, 1>}, {pipeline_mode = #tpu.pipeline_mode<synchronous>, transform_indices = @transform_2, window_bounds = array<i64: 8, 128>}, {pipeline_mode = #tpu.pipeline_mode<synchronous>, transform_indices = @transform_3, window_bounds = array<i64: 1, 128>}, {pipeline_mode = #tpu.pipeline_mode<synchronous>, transform_indices = @transform_4, window_bounds = array<i64: 1, 128>}, {pipeline_mode = #tpu.pipeline_mode<synchronous>, transform_indices = @transform_5, window_bounds = array<i64: 128, 128>}, {transform_indices = @transform_6, window_bounds = array<i64: 208, 128>}, {pipeline_mode = #tpu.pipeline_mode<synchronous>, transform_indices = @transform_7, window_bounds = array<i64: 128, 128>}, {pipeline_mode = #tpu.pipeline_mode<synchronous>, transform_indices = @transform_8, window_bounds = array<i64: 1, 128>}, {transform_indices = @transform_9, window_bounds = array<i64: 208, 128>}]} {
    %c0 = arith.constant 0 : index
    %c0_0 = arith.constant 0 : index
    %0 = vector.load %arg1[%c0, %c0_0] : memref<208x8xf32, #tpu.memory_space<vmem>>, vector<208x8xf32>
    %c0_1 = arith.constant 0 : index
    %c0_2 = arith.constant 0 : index
    %1 = vector.load %arg2[%c0_1, %c0_2] : memref<208x1xi32, #tpu.memory_space<vmem>>, vector<208x1xi32>
    %c0_3 = arith.constant 0 : index
    %c0_4 = arith.constant 0 : index
    %2 = vector.load %arg3[%c0_3, %c0_4] : memref<8x128xf32, #tpu.memory_space<vmem>>, vector<8x128xf32>
    %cst = arith.constant dense<0.000000e+00> : vector<208x128xf32>
    %3 = tpu.matmul %0, %2, %cst {dimension_numbers = #tpu.dot_dimension_numbers<[1], [0], [0], [1], [0, 0, 1, 1], [], []>} : vector<208x8xf32>, vector<8x128xf32>, vector<208x128xf32> -> vector<208x128xf32>
    %4 = arith.mulf %0, %0 : vector<208x8xf32>
    %cst_5 = arith.constant dense<0.000000e+00> : vector<208xf32>
    %5 = vector.multi_reduction <add>, %4, %cst_5 [1] : vector<208x8xf32> to vector<208xf32>
    %6 = vector.shape_cast %5 : vector<208xf32> to vector<208x1xf32>
    %c0_6 = arith.constant 0 : index
    %c0_7 = arith.constant 0 : index
    %7 = vector.load %arg4[%c0_6, %c0_7] : memref<1x128xf32, #tpu.memory_space<vmem>>, vector<1x128xf32>
    %8 = vector.broadcast %6 : vector<208x1xf32> to vector<208x128xf32>
    %9 = vector.broadcast %7 : vector<1x128xf32> to vector<208x128xf32>
    %10 = arith.addf %8, %9 : vector<208x128xf32>
    %cst_8 = arith.constant 2.000000e+00 : f32
    %11 = vector.broadcast %cst_8 : f32 to vector<208x128xf32>
    %12 = arith.mulf %11, %3 : vector<208x128xf32>
    %13 = arith.subf %10, %12 : vector<208x128xf32>
    %cst_9 = arith.constant 0.000000e+00 : f32
    %14 = vector.broadcast %cst_9 : f32 to vector<208x128xf32>
    %15 = arith.maximumf %13, %14 : vector<208x128xf32>
    %c0_10 = arith.constant 0 : index
    %c0_11 = arith.constant 0 : index
    %16 = vector.load %arg5[%c0_10, %c0_11] : memref<1x128xi32, #tpu.memory_space<vmem>>, vector<1x128xi32>
    %17 = vector.broadcast %1 : vector<208x1xi32> to vector<208x128xi32>
    %18 = vector.broadcast %16 : vector<1x128xi32> to vector<208x128xi32>
    %19 = arith.cmpi eq, %17, %18 : vector<208x128xi32>
    %cst_12 = arith.constant 1.000000e+30 : f32
    %20 = vector.broadcast %cst_12 : f32 to vector<208x128xf32>
    %21 = arith.select %19, %15, %20 : vector<208x128xi1>, vector<208x128xf32>
    %cst_13 = arith.constant 0.000000e+00 : f32
    %22 = vector.broadcast %cst_13 : f32 to vector<208x128xf32>
    %cst_14 = arith.constant dense<0x7F800000> : vector<208xf32>
    %23 = vector.multi_reduction <minimumf>, %21, %cst_14 [1] : vector<208x128xf32> to vector<208xf32>
    %24 = vector.shape_cast %23 : vector<208xf32> to vector<208x1xf32>
    %25 = vector.broadcast %24 : vector<208x1xf32> to vector<208x128xf32>
    %26 = arith.cmpf oeq, %21, %25 : vector<208x128xf32>
    %cst_15 = arith.constant 1.000000e+30 : f32
    %27 = vector.broadcast %cst_15 : f32 to vector<208x1xf32>
    %28 = arith.cmpf oge, %24, %27 : vector<208x1xf32>
    %cst_16 = arith.constant 1.000000e-16 : f32
    %29 = vector.broadcast %cst_16 : f32 to vector<208x1xf32>
    %30 = arith.maximumf %24, %29 : vector<208x1xf32>
    %31 = tpu.reciprocal %30 {approx = true} : vector<208x1xf32> -> vector<208x1xf32>
    %cst_17 = arith.constant 0.000000e+00 : f32
    %32 = vector.broadcast %cst_17 : f32 to vector<208x1xf32>
    %33 = arith.select %28, %32, %31 : vector<208x1xi1>, vector<208x1xf32>
    %34 = vector.broadcast %33 : vector<208x1xf32> to vector<208x128xf32>
    %35 = arith.addf %22, %34 : vector<208x128xf32>
    %36 = arith.select %26, %35, %22 : vector<208x128xi1>, vector<208x128xf32>
    %cst_18 = arith.constant 1.000000e+30 : f32
    %37 = vector.broadcast %cst_18 : f32 to vector<208x128xf32>
    %38 = arith.select %26, %37, %21 : vector<208x128xi1>, vector<208x128xf32>
    %cst_19 = arith.constant dense<0x7F800000> : vector<208xf32>
    %39 = vector.multi_reduction <minimumf>, %38, %cst_19 [1] : vector<208x128xf32> to vector<208xf32>
    %40 = vector.shape_cast %39 : vector<208xf32> to vector<208x1xf32>
    %41 = vector.broadcast %40 : vector<208x1xf32> to vector<208x128xf32>
    %42 = arith.cmpf oeq, %38, %41 : vector<208x128xf32>
    %cst_20 = arith.constant 1.000000e+30 : f32
    %43 = vector.broadcast %cst_20 : f32 to vector<208x1xf32>
    %44 = arith.cmpf oge, %40, %43 : vector<208x1xf32>
    %cst_21 = arith.constant 1.000000e-16 : f32
    %45 = vector.broadcast %cst_21 : f32 to vector<208x1xf32>
    %46 = arith.maximumf %40, %45 : vector<208x1xf32>
    %47 = tpu.reciprocal %46 {approx = true} : vector<208x1xf32> -> vector<208x1xf32>
    %cst_22 = arith.constant 0.000000e+00 : f32
    %48 = vector.broadcast %cst_22 : f32 to vector<208x1xf32>
    %49 = arith.select %44, %48, %47 : vector<208x1xi1>, vector<208x1xf32>
    %50 = vector.broadcast %49 : vector<208x1xf32> to vector<208x128xf32>
    %51 = arith.addf %36, %50 : vector<208x128xf32>
    %52 = arith.select %42, %51, %36 : vector<208x128xi1>, vector<208x128xf32>
    %cst_23 = arith.constant 1.000000e+30 : f32
    %53 = vector.broadcast %cst_23 : f32 to vector<208x128xf32>
    %54 = arith.select %42, %53, %38 : vector<208x128xi1>, vector<208x128xf32>
    %cst_24 = arith.constant dense<0x7F800000> : vector<208xf32>
    %55 = vector.multi_reduction <minimumf>, %54, %cst_24 [1] : vector<208x128xf32> to vector<208xf32>
    %56 = vector.shape_cast %55 : vector<208xf32> to vector<208x1xf32>
    %57 = vector.broadcast %56 : vector<208x1xf32> to vector<208x128xf32>
    %58 = arith.cmpf oeq, %54, %57 : vector<208x128xf32>
    %cst_25 = arith.constant 1.000000e+30 : f32
    %59 = vector.broadcast %cst_25 : f32 to vector<208x1xf32>
    %60 = arith.cmpf oge, %56, %59 : vector<208x1xf32>
    %cst_26 = arith.constant 1.000000e-16 : f32
    %61 = vector.broadcast %cst_26 : f32 to vector<208x1xf32>
    %62 = arith.maximumf %56, %61 : vector<208x1xf32>
    %63 = tpu.reciprocal %62 {approx = true} : vector<208x1xf32> -> vector<208x1xf32>
    %cst_27 = arith.constant 0.000000e+00 : f32
    %64 = vector.broadcast %cst_27 : f32 to vector<208x1xf32>
    %65 = arith.select %60, %64, %63 : vector<208x1xi1>, vector<208x1xf32>
    %66 = vector.broadcast %65 : vector<208x1xf32> to vector<208x128xf32>
    %67 = arith.addf %52, %66 : vector<208x128xf32>
    %68 = arith.select %58, %67, %52 : vector<208x128xi1>, vector<208x128xf32>
    %cst_28 = arith.constant dense<0.000000e+00> : vector<208xf32>
    %69 = vector.multi_reduction <add>, %68, %cst_28 [1] : vector<208x128xf32> to vector<208xf32>
    %70 = vector.shape_cast %69 : vector<208xf32> to vector<208x1xf32>
    %71 = arith.truncf %68 : vector<208x128xf32> to vector<208x128xbf16>
    %c0_29 = arith.constant 0 : index
    %c0_30 = arith.constant 0 : index
    %72 = vector.load %arg6[%c0_29, %c0_30] : memref<128x128xbf16, #tpu.memory_space<vmem>>, vector<128x128xbf16>
    %cst_31 = arith.constant dense<0.000000e+00> : vector<208x128xf32>
    %73 = tpu.matmul %71, %72, %cst_31 {dimension_numbers = #tpu.dot_dimension_numbers<[1], [0], [0], [1], [0, 0, 1, 1], [], []>} : vector<208x128xbf16>, vector<128x128xbf16>, vector<208x128xf32> -> vector<208x128xf32>
    %cst_32 = arith.constant 1.000000e-16 : f32
    %74 = vector.broadcast %cst_32 : f32 to vector<208x1xf32>
    %75 = arith.maximumf %70, %74 : vector<208x1xf32>
    %76 = tpu.reciprocal %75 {approx = true} : vector<208x1xf32> -> vector<208x1xf32>
    %77 = vector.broadcast %76 : vector<208x1xf32> to vector<208x128xf32>
    %78 = arith.mulf %73, %77 : vector<208x128xf32>
    %c0_33 = arith.constant 0 : index
    %c0_34 = arith.constant 0 : index
    %79 = vector.load %arg7[%c0_33, %c0_34] : memref<208x128xbf16, #tpu.memory_space<vmem>>, vector<208x128xbf16>
    %80 = arith.extf %79 : vector<208x128xbf16> to vector<208x128xf32>
    %81 = arith.addf %78, %80 : vector<208x128xf32>
    %82 = arith.truncf %81 : vector<208x128xf32> to vector<208x128xbf16>
    %c0_35 = arith.constant 0 : index
    %c0_36 = arith.constant 0 : index
    %83 = vector.load %arg8[%c0_35, %c0_36] : memref<128x128xbf16, #tpu.memory_space<vmem>>, vector<128x128xbf16>
    %cst_37 = arith.constant dense<0.000000e+00> : vector<208x128xf32>
    %84 = tpu.matmul %82, %83, %cst_37 {dimension_numbers = #tpu.dot_dimension_numbers<[1], [0], [0], [1], [0, 0, 1, 1], [], []>} : vector<208x128xbf16>, vector<128x128xbf16>, vector<208x128xf32> -> vector<208x128xf32>
    %c0_38 = arith.constant 0 : index
    %c0_39 = arith.constant 0 : index
    %85 = vector.load %arg9[%c0_38, %c0_39] : memref<1x128xf32, #tpu.memory_space<vmem>>, vector<1x128xf32>
    %86 = vector.broadcast %85 : vector<1x128xf32> to vector<208x128xf32>
    %87 = arith.addf %84, %86 : vector<208x128xf32>
    %cst_40 = arith.constant 2.000000e-01 : f32
    %88 = vector.broadcast %cst_40 : f32 to vector<208x128xf32>
    %89 = arith.mulf %88, %87 : vector<208x128xf32>
    %90 = arith.maximumf %87, %89 : vector<208x128xf32>
    %c0_41 = arith.constant 0 : index
    %c0_42 = arith.constant 0 : index
    %91 = vector.load %arg10[%c0_41, %c0_42] : memref<208x128xf32, #tpu.memory_space<vmem>>, vector<208x128xf32>
    tpu.vector_store %arg10[%c0_41, %c0_42], %90 {strides = array<i32>} : memref<208x128xf32, #tpu.memory_space<vmem>>, vector<208x128xf32>,
    return
  }
  func.func @transform_0(%arg0: i32) -> (i32, i32) {
    %c0_i32 = arith.constant 0 : i32
    %c0_i32_0 = arith.constant 0 : i32
    return %arg0, %c0_i32 : i32, i32
  }
  func.func @transform_1(%arg0: i32) -> (i32, i32) {
    %c0_i32 = arith.constant 0 : i32
    %c0_i32_0 = arith.constant 0 : i32
    return %arg0, %c0_i32 : i32, i32
  }
  func.func @transform_2(%arg0: i32) -> (i32, i32) {
    %c0_i32 = arith.constant 0 : i32
    %c0_i32_0 = arith.constant 0 : i32
    %c0_i32_1 = arith.constant 0 : i32
    return %c0_i32, %c0_i32_0 : i32, i32
  }
  func.func @transform_3(%arg0: i32) -> (i32, i32) {
    %c0_i32 = arith.constant 0 : i32
    %c0_i32_0 = arith.constant 0 : i32
    %c0_i32_1 = arith.constant 0 : i32
    return %c0_i32, %c0_i32_0 : i32, i32
  }
  func.func @transform_4(%arg0: i32) -> (i32, i32) {
    %c0_i32 = arith.constant 0 : i32
    %c0_i32_0 = arith.constant 0 : i32
    %c0_i32_1 = arith.constant 0 : i32
    return %c0_i32, %c0_i32_0 : i32, i32
  }
  func.func @transform_5(%arg0: i32) -> (i32, i32) {
    %c0_i32 = arith.constant 0 : i32
    %c0_i32_0 = arith.constant 0 : i32
    %c0_i32_1 = arith.constant 0 : i32
    return %c0_i32, %c0_i32_0 : i32, i32
  }
  func.func @transform_6(%arg0: i32) -> (i32, i32) {
    %c0_i32 = arith.constant 0 : i32
    %c0_i32_0 = arith.constant 0 : i32
    return %arg0, %c0_i32 : i32, i32
  }
  func.func @transform_7(%arg0: i32) -> (i32, i32) {
    %c0_i32 = arith.constant 0 : i32
    %c0_i32_0 = arith.constant 0 : i32
    %c0_i32_1 = arith.constant 0 : i32
    return %c0_i32, %c0_i32_0 : i32, i32
  }
  func.func @transform_8(%arg0: i32) -> (i32, i32) {
    %c0_i32 = arith.constant 0 : i32
    %c0_i32_0 = arith.constant 0 : i32
    %c0_i32_1 = arith.constant 0 : i32
    return %c0_i32, %c0_i32_0 : i32, i32
  }
  func.func @transform_9(%arg0: i32) -> (i32, i32) {
    %c0_i32 = arith.constant 0 : i32
    %c0_i32_0 = arith.constant 0 : i32
    return %arg0, %c0_i32 : i32, i32
  }
}

module attributes {stable_mosaic.version = 11 : i64} {
  func.func @_fp_kernel_fused(%arg0: i32, %arg1: memref<208x8xf32, #tpu.memory_space<vmem>>, %arg2: memref<208x1xi32, #tpu.memory_space<vmem>>, %arg3: memref<8x128xf32, #tpu.memory_space<vmem>>, %arg4: memref<1x128xf32, #tpu.memory_space<vmem>>, %arg5: memref<1x128xi32, #tpu.memory_space<vmem>>, %arg6: memref<128x128xbf16, #tpu.memory_space<vmem>>, %arg7: memref<208x128xbf16, #tpu.memory_space<vmem>>, %arg8: memref<128x128xbf16, #tpu.memory_space<vmem>>, %arg9: memref<1x128xf32, #tpu.memory_space<vmem>>, %arg10: memref<208x128xf32, #tpu.memory_space<vmem>>) attributes {dimension_semantics = [#tpu.dimension_semantics<parallel>], iteration_bounds = array<i64: 3>, scalar_prefetch = 0 : i64, scratch_operands = 0 : i64, tpu.core_type = #tpu.core_type<tc>, window_params = [{transform_indices = @transform_0, window_bounds = array<i64: 208, 8>}, {transform_indices = @transform_1, window_bounds = array<i64: 208, 1>}, {pipeline_mode = #tpu.pipeline_mode<synchronous>, transform_indices = @transform_2, window_bounds = array<i64: 8, 128>}, {pipeline_mode = #tpu.pipeline_mode<synchronous>, transform_indices = @transform_3, window_bounds = array<i64: 1, 128>}, {pipeline_mode = #tpu.pipeline_mode<synchronous>, transform_indices = @transform_4, window_bounds = array<i64: 1, 128>}, {pipeline_mode = #tpu.pipeline_mode<synchronous>, transform_indices = @transform_5, window_bounds = array<i64: 128, 128>}, {transform_indices = @transform_6, window_bounds = array<i64: 208, 128>}, {pipeline_mode = #tpu.pipeline_mode<synchronous>, transform_indices = @transform_7, window_bounds = array<i64: 128, 128>}, {pipeline_mode = #tpu.pipeline_mode<synchronous>, transform_indices = @transform_8, window_bounds = array<i64: 1, 128>}, {transform_indices = @transform_9, window_bounds = array<i64: 208, 128>}]} {
    %c0 = arith.constant 0 : index
    %c0_0 = arith.constant 0 : index
    %0 = vector.load %arg1[%c0, %c0_0] : memref<208x8xf32, #tpu.memory_space<vmem>>, vector<208x8xf32>
    %c0_1 = arith.constant 0 : index
    %c0_2 = arith.constant 0 : index
    %1 = vector.load %arg2[%c0_1, %c0_2] : memref<208x1xi32, #tpu.memory_space<vmem>>, vector<208x1xi32>
    %c0_3 = arith.constant 0 : index
    %c0_4 = arith.constant 0 : index
    %2 = vector.load %arg3[%c0_3, %c0_4] : memref<8x128xf32, #tpu.memory_space<vmem>>, vector<8x128xf32>
    %cst = arith.constant dense<0.000000e+00> : vector<208x128xf32>
    %3 = tpu.matmul %0, %2, %cst {dimension_numbers = #tpu.dot_dimension_numbers<[1], [0], [0], [1], [0, 0, 1, 1], [], []>} : vector<208x8xf32>, vector<8x128xf32>, vector<208x128xf32> -> vector<208x128xf32>
    %4 = arith.mulf %0, %0 : vector<208x8xf32>
    %cst_5 = arith.constant dense<0.000000e+00> : vector<208xf32>
    %5 = vector.multi_reduction <add>, %4, %cst_5 [1] : vector<208x8xf32> to vector<208xf32>
    %6 = vector.shape_cast %5 : vector<208xf32> to vector<208x1xf32>
    %c0_6 = arith.constant 0 : index
    %c0_7 = arith.constant 0 : index
    %7 = vector.load %arg4[%c0_6, %c0_7] : memref<1x128xf32, #tpu.memory_space<vmem>>, vector<1x128xf32>
    %8 = vector.broadcast %6 : vector<208x1xf32> to vector<208x128xf32>
    %9 = vector.broadcast %7 : vector<1x128xf32> to vector<208x128xf32>
    %10 = arith.addf %8, %9 : vector<208x128xf32>
    %cst_8 = arith.constant 2.000000e+00 : f32
    %11 = vector.broadcast %cst_8 : f32 to vector<208x128xf32>
    %12 = arith.mulf %11, %3 : vector<208x128xf32>
    %13 = arith.subf %10, %12 : vector<208x128xf32>
    %cst_9 = arith.constant 0.000000e+00 : f32
    %14 = vector.broadcast %cst_9 : f32 to vector<208x128xf32>
    %15 = arith.maximumf %13, %14 : vector<208x128xf32>
    %c0_10 = arith.constant 0 : index
    %c0_11 = arith.constant 0 : index
    %16 = vector.load %arg5[%c0_10, %c0_11] : memref<1x128xi32, #tpu.memory_space<vmem>>, vector<1x128xi32>
    %17 = vector.broadcast %1 : vector<208x1xi32> to vector<208x128xi32>
    %18 = vector.broadcast %16 : vector<1x128xi32> to vector<208x128xi32>
    %19 = arith.cmpi eq, %17, %18 : vector<208x128xi32>
    %cst_12 = arith.constant 1.000000e+30 : f32
    %20 = vector.broadcast %cst_12 : f32 to vector<208x128xf32>
    %21 = arith.select %19, %15, %20 : vector<208x128xi1>, vector<208x128xf32>
    %cst_13 = arith.constant 0.000000e+00 : f32
    %22 = vector.broadcast %cst_13 : f32 to vector<208x128xf32>
    %cst_14 = arith.constant dense<0x7F800000> : vector<208xf32>
    %23 = vector.multi_reduction <minimumf>, %21, %cst_14 [1] : vector<208x128xf32> to vector<208xf32>
    %24 = vector.shape_cast %23 : vector<208xf32> to vector<208x1xf32>
    %25 = vector.broadcast %24 : vector<208x1xf32> to vector<208x128xf32>
    %26 = arith.cmpf oeq, %21, %25 : vector<208x128xf32>
    %cst_15 = arith.constant 1.000000e+30 : f32
    %27 = vector.broadcast %cst_15 : f32 to vector<208x1xf32>
    %28 = arith.cmpf oge, %24, %27 : vector<208x1xf32>
    %cst_16 = arith.constant 1.000000e-16 : f32
    %29 = vector.broadcast %cst_16 : f32 to vector<208x1xf32>
    %30 = arith.maximumf %24, %29 : vector<208x1xf32>
    %31 = tpu.reciprocal %30 {approx = true} : vector<208x1xf32> -> vector<208x1xf32>
    %cst_17 = arith.constant 0.000000e+00 : f32
    %32 = vector.broadcast %cst_17 : f32 to vector<208x1xf32>
    %33 = arith.select %28, %32, %31 : vector<208x1xi1>, vector<208x1xf32>
    %34 = vector.broadcast %33 : vector<208x1xf32> to vector<208x128xf32>
    %35 = arith.addf %22, %34 : vector<208x128xf32>
    %36 = arith.select %26, %35, %22 : vector<208x128xi1>, vector<208x128xf32>
    %cst_18 = arith.constant 1.000000e+30 : f32
    %37 = vector.broadcast %cst_18 : f32 to vector<208x128xf32>
    %38 = arith.select %26, %37, %21 : vector<208x128xi1>, vector<208x128xf32>
    %cst_19 = arith.constant dense<0x7F800000> : vector<208xf32>
    %39 = vector.multi_reduction <minimumf>, %38, %cst_19 [1] : vector<208x128xf32> to vector<208xf32>
    %40 = vector.shape_cast %39 : vector<208xf32> to vector<208x1xf32>
    %41 = vector.broadcast %40 : vector<208x1xf32> to vector<208x128xf32>
    %42 = arith.cmpf oeq, %38, %41 : vector<208x128xf32>
    %cst_20 = arith.constant 1.000000e+30 : f32
    %43 = vector.broadcast %cst_20 : f32 to vector<208x1xf32>
    %44 = arith.cmpf oge, %40, %43 : vector<208x1xf32>
    %cst_21 = arith.constant 1.000000e-16 : f32
    %45 = vector.broadcast %cst_21 : f32 to vector<208x1xf32>
    %46 = arith.maximumf %40, %45 : vector<208x1xf32>
    %47 = tpu.reciprocal %46 {approx = true} : vector<208x1xf32> -> vector<208x1xf32>
    %cst_22 = arith.constant 0.000000e+00 : f32
    %48 = vector.broadcast %cst_22 : f32 to vector<208x1xf32>
    %49 = arith.select %44, %48, %47 : vector<208x1xi1>, vector<208x1xf32>
    %50 = vector.broadcast %49 : vector<208x1xf32> to vector<208x128xf32>
    %51 = arith.addf %36, %50 : vector<208x128xf32>
    %52 = arith.select %42, %51, %36 : vector<208x128xi1>, vector<208x128xf32>
    %cst_23 = arith.constant 1.000000e+30 : f32
    %53 = vector.broadcast %cst_23 : f32 to vector<208x128xf32>
    %54 = arith.select %42, %53, %38 : vector<208x128xi1>, vector<208x128xf32>
    %cst_24 = arith.constant dense<0x7F800000> : vector<208xf32>
    %55 = vector.multi_reduction <minimumf>, %54, %cst_24 [1] : vector<208x128xf32> to vector<208xf32>
    %56 = vector.shape_cast %55 : vector<208xf32> to vector<208x1xf32>
    %57 = vector.broadcast %56 : vector<208x1xf32> to vector<208x128xf32>
    %58 = arith.cmpf oeq, %54, %57 : vector<208x128xf32>
    %cst_25 = arith.constant 1.000000e+30 : f32
    %59 = vector.broadcast %cst_25 : f32 to vector<208x1xf32>
    %60 = arith.cmpf oge, %56, %59 : vector<208x1xf32>
    %cst_26 = arith.constant 1.000000e-16 : f32
    %61 = vector.broadcast %cst_26 : f32 to vector<208x1xf32>
    %62 = arith.maximumf %56, %61 : vector<208x1xf32>
    %63 = tpu.reciprocal %62 {approx = true} : vector<208x1xf32> -> vector<208x1xf32>
    %cst_27 = arith.constant 0.000000e+00 : f32
    %64 = vector.broadcast %cst_27 : f32 to vector<208x1xf32>
    %65 = arith.select %60, %64, %63 : vector<208x1xi1>, vector<208x1xf32>
    %66 = vector.broadcast %65 : vector<208x1xf32> to vector<208x128xf32>
    %67 = arith.addf %52, %66 : vector<208x128xf32>
    %68 = arith.select %58, %67, %52 : vector<208x128xi1>, vector<208x128xf32>
    %cst_28 = arith.constant dense<0.000000e+00> : vector<208xf32>
    %69 = vector.multi_reduction <add>, %68, %cst_28 [1] : vector<208x128xf32> to vector<208xf32>
    %70 = vector.shape_cast %69 : vector<208xf32> to vector<208x1xf32>
    %71 = arith.truncf %68 : vector<208x128xf32> to vector<208x128xbf16>
    %c0_29 = arith.constant 0 : index
    %c0_30 = arith.constant 0 : index
    %72 = vector.load %arg6[%c0_29, %c0_30] : memref<128x128xbf16, #tpu.memory_space<vmem>>, vector<128x128xbf16>
    %cst_31 = arith.constant dense<0.000000e+00> : vector<208x128xf32>
    %73 = tpu.matmul %71, %72, %cst_31 {dimension_numbers = #tpu.dot_dimension_numbers<[1], [0], [0], [1], [0, 0, 1, 1], [], []>} : vector<208x128xbf16>, vector<128x128xbf16>, vector<208x128xf32> -> vector<208x128xf32>
    %cst_32 = arith.constant 1.000000e-16 : f32
    %74 = vector.broadcast %cst_32 : f32 to vector<208x1xf32>
    %75 = arith.maximumf %70, %74 : vector<208x1xf32>
    %76 = tpu.reciprocal %75 {approx = true} : vector<208x1xf32> -> vector<208x1xf32>
    %77 = vector.broadcast %76 : vector<208x1xf32> to vector<208x128xf32>
    %78 = arith.mulf %73, %77 : vector<208x128xf32>
    %c0_33 = arith.constant 0 : index
    %c0_34 = arith.constant 0 : index
    %79 = vector.load %arg7[%c0_33, %c0_34] : memref<208x128xbf16, #tpu.memory_space<vmem>>, vector<208x128xbf16>
    %80 = arith.extf %79 : vector<208x128xbf16> to vector<208x128xf32>
    %81 = arith.addf %78, %80 : vector<208x128xf32>
    %82 = arith.truncf %81 : vector<208x128xf32> to vector<208x128xbf16>
    %c0_35 = arith.constant 0 : index
    %c0_36 = arith.constant 0 : index
    %83 = vector.load %arg8[%c0_35, %c0_36] : memref<128x128xbf16, #tpu.memory_space<vmem>>, vector<128x128xbf16>
    %cst_37 = arith.constant dense<0.000000e+00> : vector<208x128xf32>
    %84 = tpu.matmul %82, %83, %cst_37 {dimension_numbers = #tpu.dot_dimension_numbers<[1], [0], [0], [1], [0, 0, 1, 1], [], []>} : vector<208x128xbf16>, vector<128x128xbf16>, vector<208x128xf32> -> vector<208x128xf32>
    %c0_38 = arith.constant 0 : index
    %c0_39 = arith.constant 0 : index
    %85 = vector.load %arg9[%c0_38, %c0_39] : memref<1x128xf32, #tpu.memory_space<vmem>>, vector<1x128xf32>
    %86 = vector.broadcast %85 : vector<1x128xf32> to vector<208x128xf32>
    %87 = arith.addf %84, %86 : vector<208x128xf32>
    %cst_40 = arith.constant 2.000000e-01 : f32
    %88 = vector.broadcast %cst_40 : f32 to vector<208x128xf32>
    %89 = arith.mulf %88, %87 : vector<208x128xf32>
    %90 = arith.maximumf %87, %89 : vector<208x128xf32>
    %c0_41 = arith.constant 0 : index
    %c0_42 = arith.constant 0 : index
    %91 = vector.load %arg10[%c0_41, %c0_42] : memref<208x128xf32, #tpu.memory_space<vmem>>, vector<208x128xf32>
    tpu.vector_store %arg10[%c0_41, %c0_42], %90 {strides = array<i32>} : memref<208x128xf32, #tpu.memory_space<vmem>>, vector<208x128xf32>,
    return
  }
  func.func @transform_0(%arg0: i32) -> (i32, i32) {
    %c0_i32 = arith.constant 0 : i32
    %c0_i32_0 = arith.constant 0 : i32
    return %arg0, %c0_i32 : i32, i32
  }
  func.func @transform_1(%arg0: i32) -> (i32, i32) {
    %c0_i32 = arith.constant 0 : i32
    %c0_i32_0 = arith.constant 0 : i32
    return %arg0, %c0_i32 : i32, i32
  }
  func.func @transform_2(%arg0: i32) -> (i32, i32) {
    %c0_i32 = arith.constant 0 : i32
    %c0_i32_0 = arith.constant 0 : i32
    %c0_i32_1 = arith.constant 0 : i32
    return %c0_i32, %c0_i32_0 : i32, i32
  }
  func.func @transform_3(%arg0: i32) -> (i32, i32) {
    %c0_i32 = arith.constant 0 : i32
    %c0_i32_0 = arith.constant 0 : i32
    %c0_i32_1 = arith.constant 0 : i32
    return %c0_i32, %c0_i32_0 : i32, i32
  }
  func.func @transform_4(%arg0: i32) -> (i32, i32) {
    %c0_i32 = arith.constant 0 : i32
    %c0_i32_0 = arith.constant 0 : i32
    %c0_i32_1 = arith.constant 0 : i32
    return %c0_i32, %c0_i32_0 : i32, i32
  }
  func.func @transform_5(%arg0: i32) -> (i32, i32) {
    %c0_i32 = arith.constant 0 : i32
    %c0_i32_0 = arith.constant 0 : i32
    %c0_i32_1 = arith.constant 0 : i32
    return %c0_i32, %c0_i32_0 : i32, i32
  }
  func.func @transform_6(%arg0: i32) -> (i32, i32) {
    %c0_i32 = arith.constant 0 : i32
    %c0_i32_0 = arith.constant 0 : i32
    return %arg0, %c0_i32 : i32, i32
  }
  func.func @transform_7(%arg0: i32) -> (i32, i32) {
    %c0_i32 = arith.constant 0 : i32
    %c0_i32_0 = arith.constant 0 : i32
    %c0_i32_1 = arith.constant 0 : i32
    return %c0_i32, %c0_i32_0 : i32, i32
  }
  func.func @transform_8(%arg0: i32) -> (i32, i32) {
    %c0_i32 = arith.constant 0 : i32
    %c0_i32_0 = arith.constant 0 : i32
    %c0_i32_1 = arith.constant 0 : i32
    return %c0_i32, %c0_i32_0 : i32, i32
  }
  func.func @transform_9(%arg0: i32) -> (i32, i32) {
    %c0_i32 = arith.constant 0 : i32
    %c0_i32_0 = arith.constant 0 : i32
    return %arg0, %c0_i32 : i32, i32
  }
}

</mosaic_0001>

<llo_original>
// kernel: tpu_custom_call.1
$region0: #{tpu_custom_call.1}
  #allocation0 [shape = 'u32[]', space=smem, size = 0x4, offset = 0x4, fixed_abs, tag = 'smem constant byte address 0x4 - core index']
  #allocation1 [shape = 'u32[144,128]{1,0:T(1,128)}', space=vmem, size = 0x12000, scoped, tag = 'internal scratch']
  %s0 = inlined_call_operand.vmem [shape: f32[624,8], index: 0, kind: input, shape index: {}]
  %s1 = inlined_call_operand.vmem [shape: s32[624,1], index: 1, kind: input, shape index: {}]
  %s2 = inlined_call_operand.vmem [shape: f32[8,128], index: 2, kind: input, shape index: {}]
  %s3 = inlined_call_operand.vmem [shape: f32[1,128], index: 3, kind: input, shape index: {}]
  %s4 = inlined_call_operand.vmem [shape: s32[1,128], index: 4, kind: input, shape index: {}]
  %s5 = inlined_call_operand.vmem [shape: bf16[128,128], index: 5, kind: input, shape index: {}]
  %s6 = inlined_call_operand.vmem [shape: bf16[624,128], index: 6, kind: input, shape index: {}]
  %s7 = inlined_call_operand.vmem [shape: bf16[128,128], index: 7, kind: input, shape index: {}]
  %s8 = inlined_call_operand.vmem [shape: f32[1,128], index: 8, kind: input, shape index: {}]
  %s9 = inlined_call_operand.hbm [shape: f32[624,128], index: 9, kind: output, shape index: {}]
  %s10 = sld [smem:[#allocation0]]
  $region69: #{tpu_custom_call.1} parent=0
    _
  %s12 = ssub.s32 1, %s10
  %s13 = scalar_select 0, %s12, %s10
  $region1: #{tpu_custom_call.1} parent=0
    #allocation2 [shape = 'u8[212992]{0}', space=vmem, size = 0x34000, scoped, tag = 'output window, operand 0']
    #allocation3 [shape = 's32[2]{0}', space=sflag, size = 0x8, scoped, tag = 'scoped memory for tpu_custom_call.1']
    %14 = vsyncpa [#allocation3], 0
    %s15 = scalar_lea.sflag [#allocation3], 1
    %16 = vsyncpa %s15, 0
    loop: start=0, step=1, limit=5
    $region2: #{tpu_custom_call.1} parent=1 // loop_pre_header
      _
    $region3: #{tpu_custom_call.1} parent=1 // loop_header
      %s18 = sphi 0, %s22
      %p19 = scmp.ge.s32.totalorder %s18, 5
      %s28 = sphi 0, %s30
      %s31 = sphi 0, %s28
      %s32 = sphi 0, %s31
      %s48 = sphi 0, %s32
      %s54 = sphi 0, %s56
      %s57 = sphi 0, %s54
      %s58 = sphi 0, %s57
      %s74 = sphi 0, %s58
      %s78 = sphi 0, %s78
      %s80 = sphi 0, %s78
      %s81 = sphi 0, %s80
      %s95 = sphi 0, %s81
      %s99 = sphi 0, %s99
      %s101 = sphi 0, %s99
      %s102 = sphi 0, %s101
      %s116 = sphi 0, %s102
      %s120 = sphi 0, %s120
      %s122 = sphi 0, %s120
      %s123 = sphi 0, %s122
      %s137 = sphi 0, %s123
      %s141 = sphi 0, %s141
      %s143 = sphi 0, %s141
      %s144 = sphi 0, %s143
      %s158 = sphi 0, %s144
      %s164 = sphi 0, %s166
      %s167 = sphi 0, %s164
      %s168 = sphi 0, %s167
      %s184 = sphi 0, %s168
      %s188 = sphi 0, %s188
      %s190 = sphi 0, %s188
      %s191 = sphi 0, %s190
      %s205 = sphi 0, %s191
      %s209 = sphi 0, %s209
      %s211 = sphi 0, %s209
      %s212 = sphi 0, %s211
      %s226 = sphi 0, %s212
      %s232 = sphi 0, %s234
      %s235 = sphi 0, %s232
      %s236 = sphi 0, %s235
      %s252 = sphi 0, %s236
    $region4: #{tpu_custom_call.1} parent=1 // loop_header_branch
      %21 = sbr.rel (%p19) target = $region8
    $region5: #{tpu_custom_call.1} parent=1 // loop_body
      %s23 = ssub.s32 %s18, 1
      %s24 = ssub.s32 %s18, 2
      %s25 = sadd.s32 %s18, 1
      %s26 = ssub.s32 %s18, %s25
      %p27 = scmp.eq.s32.totalorder %s26, 0
      %s29 = sadd.s32 %s28, 1
      %s30 = scalar_select %p27, %s28, %s29
      %p33 = pneg %p27
      %p34 = scmp.eq.s32.totalorder %s18, 2
      %p35 = por %p33, %p34
      %p36 = scmp.ne.s32.totalorder %s28, %s31
      %p37 = scmp.eq.s32.totalorder %s18, 0
      %p38 = por %p36, %p37
      %p39 = scmp.ne.s32.totalorder %s28, %s31
      %p40 = scmp.eq.s32.totalorder %s23, 2
      %p41 = por %p39, %p40
      %p42 = scmp.ne.s32.totalorder %s31, %s32
      %p43 = scmp.eq.s32.totalorder %s23, 0
      %p44 = por %p42, %p43
      %p45 = scmp.ne.s32.totalorder %s31, %s32
      %p46 = scmp.eq.s32.totalorder %s24, 2
      %p47 = por %p45, %p46
      %p49 = scmp.ne.s32.totalorder %s32, %s48
      %p50 = scmp.eq.s32.totalorder %s24, 0
      %p51 = por %p49, %p50
      %s52 = ssub.s32 %s18, %s25
      %p53 = scmp.eq.s32.totalorder %s52, 0
      %s55 = sadd.s32 %s54, 1
      %s56 = scalar_select %p53, %s54, %s55
      %p59 = pneg %p53
      %p60 = scmp.eq.s32.totalorder %s18, 2
      %p61 = por %p59, %p60
      %p62 = scmp.ne.s32.totalorder %s54, %s57
      %p63 = scmp.eq.s32.totalorder %s18, 0
      %p64 = por %p62, %p63
      %p65 = scmp.ne.s32.totalorder %s54, %s57
      %p66 = scmp.eq.s32.totalorder %s23, 2
      %p67 = por %p65, %p66
      %p68 = scmp.ne.s32.totalorder %s57, %s58
      %p69 = scmp.eq.s32.totalorder %s23, 0
      %p70 = por %p68, %p69
      %p71 = scmp.ne.s32.totalorder %s57, %s58
      %p72 = scmp.eq.s32.totalorder %s24, 2
      %p73 = por %p71, %p72
      %p75 = scmp.ne.s32.totalorder %s58, %s74
      %p76 = scmp.eq.s32.totalorder %s24, 0
      %p77 = por %p75, %p76
      %s79 = sadd.s32 %s78, 1
      %p82 = scmp.eq.s32.totalorder %s18, 2
      %p83 = scmp.ne.s32.totalorder %s78, %s80
      %p84 = scmp.eq.s32.totalorder %s18, 0
      %p85 = por %p83, %p84
      %p86 = scmp.ne.s32.totalorder %s78, %s80
      %p87 = scmp.eq.s32.totalorder %s23, 2
      %p88 = por %p86, %p87
      %p89 = scmp.ne.s32.totalorder %s80, %s81
      %p90 = scmp.eq.s32.totalorder %s23, 0
      %p91 = por %p89, %p90
      %p92 = scmp.ne.s32.totalorder %s80, %s81
      %p93 = scmp.eq.s32.totalorder %s24, 2
      %p94 = por %p92, %p93
      %p96 = scmp.ne.s32.totalorder %s81, %s95
      %p97 = scmp.eq.s32.totalorder %s24, 0
      %p98 = por %p96, %p97
      %s100 = sadd.s32 %s99, 1
      %p103 = scmp.eq.s32.totalorder %s18, 2
      %p104 = scmp.ne.s32.totalorder %s99, %s101
      %p105 = scmp.eq.s32.totalorder %s18, 0
      %p106 = por %p104, %p105
      %p107 = scmp.ne.s32.totalorder %s99, %s101
      %p108 = scmp.eq.s32.totalorder %s23, 2
      %p109 = por %p107, %p108
      %p110 = scmp.ne.s32.totalorder %s101, %s102
      %p111 = scmp.eq.s32.totalorder %s23, 0
      %p112 = por %p110, %p111
      %p113 = scmp.ne.s32.totalorder %s101, %s102
      %p114 = scmp.eq.s32.totalorder %s24, 2
      %p115 = por %p113, %p114
      %p117 = scmp.ne.s32.totalorder %s102, %s116
      %p118 = scmp.eq.s32.totalorder %s24, 0
      %p119 = por %p117, %p118
      %s121 = sadd.s32 %s120, 1
      %p124 = scmp.eq.s32.totalorder %s18, 2
      %p125 = scmp.ne.s32.totalorder %s120, %s122
      %p126 = scmp.eq.s32.totalorder %s18, 0
      %p127 = por %p125, %p126
      %p128 = scmp.ne.s32.totalorder %s120, %s122
      %p129 = scmp.eq.s32.totalorder %s23, 2
      %p130 = por %p128, %p129
      %p131 = scmp.ne.s32.totalorder %s122, %s123
      %p132 = scmp.eq.s32.totalorder %s23, 0
      %p133 = por %p131, %p132
      %p134 = scmp.ne.s32.totalorder %s122, %s123
      %p135 = scmp.eq.s32.totalorder %s24, 2
      %p136 = por %p134, %p135
      %p138 = scmp.ne.s32.totalorder %s123, %s137
      %p139 = scmp.eq.s32.totalorder %s24, 0
      %p140 = por %p138, %p139
      %s142 = sadd.s32 %s141, 1
      %p145 = scmp.eq.s32.totalorder %s18, 2
      %p146 = scmp.ne.s32.totalorder %s141, %s143
      %p147 = scmp.eq.s32.totalorder %s18, 0
      %p148 = por %p146, %p147
      %p149 = scmp.ne.s32.totalorder %s141, %s143
      %p150 = scmp.eq.s32.totalorder %s23, 2
      %p151 = por %p149, %p150
      %p152 = scmp.ne.s32.totalorder %s143, %s144
      %p153 = scmp.eq.s32.totalorder %s23, 0
      %p154 = por %p152, %p153
      %p155 = scmp.ne.s32.totalorder %s143, %s144
      %p156 = scmp.eq.s32.totalorder %s24, 2
      %p157 = por %p155, %p156
      %p159 = scmp.ne.s32.totalorder %s144, %s158
      %p160 = scmp.eq.s32.totalorder %s24, 0
      %p161 = por %p159, %p160
      %s162 = ssub.s32 %s18, %s25
      %p163 = scmp.eq.s32.totalorder %s162, 0
      %s165 = sadd.s32 %s164, 1
      %s166 = scalar_select %p163, %s164, %s165
      %p169 = pneg %p163
      %p170 = scmp.eq.s32.totalorder %s18, 2
      %p171 = por %p169, %p170
      %p172 = scmp.ne.s32.totalorder %s164, %s167
      %p173 = scmp.eq.s32.totalorder %s18, 0
      %p174 = por %p172, %p173
      %p175 = scmp.ne.s32.totalorder %s164, %s167
      %p176 = scmp.eq.s32.totalorder %s23, 2
      %p177 = por %p175, %p176
      %p178 = scmp.ne.s32.totalorder %s167, %s168
      %p179 = scmp.eq.s32.totalorder %s23, 0
      %p180 = por %p178, %p179
      %p181 = scmp.ne.s32.totalorder %s167, %s168
      %p182 = scmp.eq.s32.totalorder %s24, 2
      %p183 = por %p181, %p182
      %p185 = scmp.ne.s32.totalorder %s168, %s184
      %p186 = scmp.eq.s32.totalorder %s24, 0
      %p187 = por %p185, %p186
      %s189 = sadd.s32 %s188, 1
      %p192 = scmp.eq.s32.totalorder %s18, 2
      %p193 = scmp.ne.s32.totalorder %s188, %s190
      %p194 = scmp.eq.s32.totalorder %s18, 0
      %p195 = por %p193, %p194
      %p196 = scmp.ne.s32.totalorder %s188, %s190
      %p197 = scmp.eq.s32.totalorder %s23, 2
      %p198 = por %p196, %p197
      %p199 = scmp.ne.s32.totalorder %s190, %s191
      %p200 = scmp.eq.s32.totalorder %s23, 0
      %p201 = por %p199, %p200
      %p202 = scmp.ne.s32.totalorder %s190, %s191
      %p203 = scmp.eq.s32.totalorder %s24, 2
      %p204 = por %p202, %p203
      %p206 = scmp.ne.s32.totalorder %s191, %s205
      %p207 = scmp.eq.s32.totalorder %s24, 0
      %p208 = por %p206, %p207
      %s210 = sadd.s32 %s209, 1
      %p213 = scmp.eq.s32.totalorder %s18, 2
      %p214 = scmp.ne.s32.totalorder %s209, %s211
      %p215 = scmp.eq.s32.totalorder %s18, 0
      %p216 = por %p214, %p215
      %p217 = scmp.ne.s32.totalorder %s209, %s211
      %p218 = scmp.eq.s32.totalorder %s23, 2
      %p219 = por %p217, %p218
      %p220 = scmp.ne.s32.totalorder %s211, %s212
      %p221 = scmp.eq.s32.totalorder %s23, 0
      %p222 = por %p220, %p221
      %p223 = scmp.ne.s32.totalorder %s211, %s212
      %p224 = scmp.eq.s32.totalorder %s24, 2
      %p225 = por %p223, %p224
      %p227 = scmp.ne.s32.totalorder %s212, %s226
      %p228 = scmp.eq.s32.totalorder %s24, 0
      %p229 = por %p227, %p228
      %s230 = ssub.s32 %s18, %s25
      %p231 = scmp.eq.s32.totalorder %s230, 0
      %s233 = sadd.s32 %s232, 1
      %s234 = scalar_select %p231, %s232, %s233
      %p237 = pneg %p231
      %p238 = scmp.eq.s32.totalorder %s18, 2
      %p239 = por %p237, %p238
      %p240 = scmp.ne.s32.totalorder %s232, %s235
      %p241 = scmp.eq.s32.totalorder %s18, 0
      %p242 = por %p240, %p241
      %p243 = scmp.ne.s32.totalorder %s232, %s235
      %p244 = scmp.eq.s32.totalorder %s23, 2
      %p245 = por %p243, %p244
      %p246 = scmp.ne.s32.totalorder %s235, %s236
      %p247 = scmp.eq.s32.totalorder %s23, 0
      %p248 = por %p246, %p247
      %p249 = scmp.ne.s32.totalorder %s235, %s236
      %p250 = scmp.eq.s32.totalorder %s24, 2
      %p251 = por %p249, %p250
      %p253 = scmp.ne.s32.totalorder %s236, %s252
      %p254 = scmp.eq.s32.totalorder %s24, 0
      %p255 = por %p253, %p254
      %p256 = scmp.le.s32.totalorder 1, %s18
      %p257 = scmp.lt.s32.totalorder %s18, 4
      %p258 = pnand %p256, %p257
      %p259 = pneg %p258
      // Predicated region
      $region9: #{tpu_custom_call.1} parent=5 // pred_check
        _
      $region10: #{tpu_custom_call.1} parent=5 // pred_check_branch
        %261 = sbr.rel (%p258) target = $region12
      $region11: #{tpu_custom_call.1} parent=5 // pred_region
        %s262 = ssub.s32 %s18, 1
        // Predicated region
        $region13: #{tpu_custom_call.1} parent=11 // pred_check
          %p263 = pneg %p91
        $region14: #{tpu_custom_call.1} parent=11 // pred_check_branch
          %265 = sbr.rel (%p263) target = $region16
        $region15: #{tpu_custom_call.1} parent=11 // pred_region
          _
        $region16: #{tpu_custom_call.1} parent=11 // pred_fallthru
          _
        // Predicated region
        $region17: #{tpu_custom_call.1} parent=11 // pred_check
          %p266 = pneg %p112
        $region18: #{tpu_custom_call.1} parent=11 // pred_check_branch
          %268 = sbr.rel (%p266) target = $region20
        $region19: #{tpu_custom_call.1} parent=11 // pred_region
          _
        $region20: #{tpu_custom_call.1} parent=11 // pred_fallthru
          _
        // Predicated region
        $region21: #{tpu_custom_call.1} parent=11 // pred_check
          %p269 = pneg %p133
        $region22: #{tpu_custom_call.1} parent=11 // pred_check_branch
          %271 = sbr.rel (%p269) target = $region24
        $region23: #{tpu_custom_call.1} parent=11 // pred_region
          _
        $region24: #{tpu_custom_call.1} parent=11 // pred_fallthru
          _
        // Predicated region
        $region25: #{tpu_custom_call.1} parent=11 // pred_check
          %p272 = pneg %p154
        $region26: #{tpu_custom_call.1} parent=11 // pred_check_branch
          %274 = sbr.rel (%p272) target = $region28
        $region27: #{tpu_custom_call.1} parent=11 // pred_region
          _
        $region28: #{tpu_custom_call.1} parent=11 // pred_fallthru
          _
        // Predicated region
        $region29: #{tpu_custom_call.1} parent=11 // pred_check
          %p275 = pneg %p201
        $region30: #{tpu_custom_call.1} parent=11 // pred_check_branch
          %277 = sbr.rel (%p275) target = $region32
        $region31: #{tpu_custom_call.1} parent=11 // pred_region
          _
        $region32: #{tpu_custom_call.1} parent=11 // pred_fallthru
          _
        // Predicated region
        $region33: #{tpu_custom_call.1} parent=11 // pred_check
          %p278 = pneg %p222
        $region34: #{tpu_custom_call.1} parent=11 // pred_check_branch
          %280 = sbr.rel (%p278) target = $region36
        $region35: #{tpu_custom_call.1} parent=11 // pred_region
          _
        $region36: #{tpu_custom_call.1} parent=11 // pred_fallthru
          _
      $region12: #{tpu_custom_call.1} parent=5 // pred_fallthru
        _
      %p281 = scmp.lt.s32.totalorder %s18, 3
      // Predicated region
      $region37: #{tpu_custom_call.1} parent=5 // pred_check
        %p282 = pneg %p281
      $region38: #{tpu_custom_call.1} parent=5 // pred_check_branch
        %284 = sbr.rel (%p282) target = $region40
      $region39: #{tpu_custom_call.1} parent=5 // pred_region
        // Predicated region
        $region41: #{tpu_custom_call.1} parent=39 // pred_check
          %p285 = pneg %p38
        $region42: #{tpu_custom_call.1} parent=39 // pred_check_branch
          %287 = sbr.rel (%p285) target = $region44
        $region43: #{tpu_custom_call.1} parent=39 // pred_region
          %s288 = smul.u32 26, %s18
          %p289 = scmp.lt.s32.totalorder %s288, 77
          %s290 = scalar_select %p289, %s288, 77
          %s291 = smul.addr %s290, 8
          %s292 = scalar_lea.vmem %s0, %s291
          %s293 = smul.u32 26, %s18
        $region44: #{tpu_custom_call.1} parent=39 // pred_fallthru
          _
        // Predicated region
        $region45: #{tpu_custom_call.1} parent=39 // pred_check
          %p294 = pneg %p64
        $region46: #{tpu_custom_call.1} parent=39 // pred_check_branch
          %296 = sbr.rel (%p294) target = $region48
        $region47: #{tpu_custom_call.1} parent=39 // pred_region
          %s297 = smul.u32 26, %s18
          %p298 = scmp.lt.s32.totalorder %s297, 77
          %s299 = scalar_select %p298, %s297, 77
          %s300 = smul.addr %s299, 8
          %s301 = scalar_lea.vmem %s1, %s300
          %s302 = smul.u32 26, %s18
        $region48: #{tpu_custom_call.1} parent=39 // pred_fallthru
          _
        // Predicated region
        $region49: #{tpu_custom_call.1} parent=39 // pred_check
          %p303 = pneg %p174
        $region50: #{tpu_custom_call.1} parent=39 // pred_check_branch
          %305 = sbr.rel (%p303) target = $region52
        $region51: #{tpu_custom_call.1} parent=39 // pred_region
          %s306 = smul.u32 26, %s18
          %p307 = scmp.lt.s32.totalorder %s306, 77
          %s308 = scalar_select %p307, %s306, 77
          %s309 = smul.addr %s308, 4
          %s310 = scalar_lea.vmem %s6, %s309
          %s311 = smul.u32 26, %s18
        $region52: #{tpu_custom_call.1} parent=39 // pred_fallthru
          _
      $region40: #{tpu_custom_call.1} parent=5 // pred_fallthru
        _
      %p312 = scmp.le.s32.totalorder 1, %s18
      %p313 = scmp.lt.s32.totalorder %s18, 4
      %p314 = pnand %p312, %p313
      %p315 = pneg %p314
      // Predicated region
      $region53: #{tpu_custom_call.1} parent=5 // pred_check
        _
      $region54: #{tpu_custom_call.1} parent=5 // pred_check_branch
        %317 = sbr.rel (%p314) target = $region56
      $region55: #{tpu_custom_call.1} parent=5 // pred_region
        %s318 = ssub.s32 %s18, 1
        %s319 = smul.u32 26, %s23
        %p320 = scmp.lt.s32.totalorder %s319, 77
        %s321 = scalar_select %p320, %s319, 77
        %s322 = smul.addr %s321, 8
        %s323 = scalar_lea.vmem %s0, %s322
        %p324 = pneg %p44
        %p325 = pneg %p41
        %s326 = smul.u32 26, %s23
        %p327 = scmp.lt.s32.totalorder %s326, 77
        %s328 = scalar_select %p327, %s326, 77
        %s329 = smul.addr %s328, 8
        %s330 = scalar_lea.vmem %s1, %s329
        %p331 = pneg %p70
        %p332 = pneg %p67
        %p333 = pneg %p91
        %p334 = pneg %p88
        %p335 = pneg %p112
        %p336 = pneg %p109
        %p337 = pneg %p133
        %p338 = pneg %p130
        %p339 = pneg %p154
        %p340 = pneg %p151
        %s341 = smul.u32 26, %s23
        %p342 = scmp.lt.s32.totalorder %s341, 77
        %s343 = scalar_select %p342, %s341, 77
        %s344 = smul.addr %s343, 4
        %s345 = scalar_lea.vmem %s6, %s344
        %p346 = pneg %p180
        %p347 = pneg %p177
        %p348 = pneg %p201
        %p349 = pneg %p198
        %p350 = pneg %p222
        %p351 = pneg %p219
        %p352 = pneg %p248
        %p353 = pneg %p245
        %s354 = sand.u32 %s235, 1
        %s355 = scalar_lea.sflag [#allocation3], %s354
        %s356 = sand.u32 %s235, 1
        %s357 = smul.addr %s356, 208
        %s358 = scalar_lea.vmem [#allocation2], %s357
        %s359 = smul.u32 26, %s23
        %p360 = scmp.lt.s32.totalorder %s359, 77
        %s361 = scalar_select %p360, %s359, 77
        %s362 = smul.addr %s361, 8
        %s363 = scalar_lea.vmem %s0, %s362
        %s364 = smul.u32 26, %s23
        %s365 = smul.u32 26, %s23
        %p366 = scmp.lt.s32.totalorder %s365, 77
        %s367 = scalar_select %p366, %s365, 77
        %s368 = smul.addr %s367, 8
        %s369 = scalar_lea.vmem %s1, %s368
        %s370 = smul.u32 26, %s23
        %s371 = smul.u32 26, %s23
        %p372 = scmp.lt.s32.totalorder %s371, 77
        %s373 = scalar_select %p372, %s371, 77
        %s374 = smul.addr %s373, 4
        %s375 = scalar_lea.vmem %s6, %s374
        %s376 = smul.u32 26, %s23
        %s377 = smul.u32 26, %s23
        %v379 = vld [vmem:[%s363] sm:$0xff]
        %v380 = vld [vmem:[%s363 + $0x8] sm:$0xff]
        %v381 = vld [vmem:[%s363 + $0x10] sm:$0xff]
        %v382 = vld [vmem:[%s363 + $0x18] sm:$0xff]
        %v383 = vld [vmem:[%s363 + $0x20] sm:$0xff]
        %v384 = vld [vmem:[%s363 + $0x28] sm:$0xff]
        %v385 = vld [vmem:[%s363 + $0x30] sm:$0xff]
        %v386 = vld [vmem:[%s363 + $0x38] sm:$0xff]
        %v387 = vld [vmem:[%s363 + $0x40] sm:$0xff]
        %v388 = vld [vmem:[%s363 + $0x48] sm:$0xff]
        %v389 = vld [vmem:[%s363 + $0x50] sm:$0xff]
        %v390 = vld [vmem:[%s363 + $0x58] sm:$0xff]
        %v391 = vld [vmem:[%s363 + $0x60] sm:$0xff]
        %v392 = vld [vmem:[%s363 + $0x68] sm:$0xff]
        %v393 = vld [vmem:[%s363 + $0x70] sm:$0xff]
        %v394 = vld [vmem:[%s363 + $0x78] sm:$0xff]
        %v395 = vld [vmem:[%s363 + $0x80] sm:$0xff]
        %v396 = vld [vmem:[%s363 + $0x88] sm:$0xff]
        %v397 = vld [vmem:[%s363 + $0x90] sm:$0xff]
        %v398 = vld [vmem:[%s363 + $0x98] sm:$0xff]
        %v399 = vld [vmem:[%s363 + $0xa0] sm:$0xff]
        %v400 = vld [vmem:[%s363 + $0xa8] sm:$0xff]
        %v401 = vld [vmem:[%s363 + $0xb0] sm:$0xff]
        %v402 = vld [vmem:[%s363 + $0xb8] sm:$0xff]
        %v403 = vld [vmem:[%s363 + $0xc0] sm:$0xff]
        %v404 = vld [vmem:[%s363 + $0xc8] sm:$0xff]
        %v405 = vld [vmem:[%s369] sm:$0xff]
        %v406 = vld [vmem:[%s369 + $0x8] sm:$0xff]
        %v407 = vld [vmem:[%s369 + $0x10] sm:$0xff]
        %v408 = vld [vmem:[%s369 + $0x18] sm:$0xff]
        %v409 = vld [vmem:[%s369 + $0x20] sm:$0xff]
        %v410 = vld [vmem:[%s369 + $0x28] sm:$0xff]
        %v411 = vld [vmem:[%s369 + $0x30] sm:$0xff]
        %v412 = vld [vmem:[%s369 + $0x38] sm:$0xff]
        %v413 = vld [vmem:[%s369 + $0x40] sm:$0xff]
        %v414 = vld [vmem:[%s369 + $0x48] sm:$0xff]
        %v415 = vld [vmem:[%s369 + $0x50] sm:$0xff]
        %v416 = vld [vmem:[%s369 + $0x58] sm:$0xff]
        %v417 = vld [vmem:[%s369 + $0x60] sm:$0xff]
        %v418 = vld [vmem:[%s369 + $0x68] sm:$0xff]
        %v419 = vld [vmem:[%s369 + $0x70] sm:$0xff]
        %v420 = vld [vmem:[%s369 + $0x78] sm:$0xff]
        %v421 = vld [vmem:[%s369 + $0x80] sm:$0xff]
        %v422 = vld [vmem:[%s369 + $0x88] sm:$0xff]
        %v423 = vld [vmem:[%s369 + $0x90] sm:$0xff]
        %v424 = vld [vmem:[%s369 + $0x98] sm:$0xff]
        %v425 = vld [vmem:[%s369 + $0xa0] sm:$0xff]
        %v426 = vld [vmem:[%s369 + $0xa8] sm:$0xff]
        %v427 = vld [vmem:[%s369 + $0xb0] sm:$0xff]
        %v428 = vld [vmem:[%s369 + $0xb8] sm:$0xff]
        %v429 = vld [vmem:[%s369 + $0xc0] sm:$0xff]
        %v430 = vld [vmem:[%s369 + $0xc8] sm:$0xff]
        %v431 = vld [vmem:[%s2] sm:$0xff]
        %vm432 = vcmask 64512
        %v434 = vsel %vm432, %v379, 0
        %v437 = vsel %vm432, %v380, 0
        %v440 = vsel %vm432, %v381, 0
        %v443 = vsel %vm432, %v382, 0
        %v446 = vsel %vm432, %v383, 0
        %v449 = vsel %vm432, %v384, 0
        %v452 = vsel %vm432, %v385, 0
        %v455 = vsel %vm432, %v386, 0
        %v458 = vsel %vm432, %v387, 0
        %v461 = vsel %vm432, %v388, 0
        %v464 = vsel %vm432, %v389, 0
        %v467 = vsel %vm432, %v390, 0
        %v470 = vsel %vm432, %v391, 0
        %v473 = vsel %vm432, %v392, 0
        %v476 = vsel %vm432, %v393, 0
        %v479 = vsel %vm432, %v394, 0
        %v482 = vsel %vm432, %v395, 0
        %v485 = vsel %vm432, %v396, 0
        %v488 = vsel %vm432, %v397, 0
        %v491 = vsel %vm432, %v398, 0
        %v494 = vsel %vm432, %v399, 0
        %v497 = vsel %vm432, %v400, 0
        %v500 = vsel %vm432, %v401, 0
        %v503 = vsel %vm432, %v402, 0
        %v506 = vsel %vm432, %v403, 0
        %v509 = vsel %vm432, %v404, 0
        %511 = vmatprep.subr.mxu0 0.0
        %512 = vmatpush1.msra.mxu0 %v431
        %513 = vmatprep.subr.mxu0 0.0
        %514 = vmatpush1.msra.mxu0 0.0
        %515 = vmatprep.subr.mxu0 0.0
        %516 = vmatpush1.msra.mxu0 0.0
        %517 = vmatprep.subr.mxu0 0.0
        %518 = vmatpush1.msra.mxu0 0.0
        %519 = vmatprep.subr.mxu0 0.0
        %520 = vmatpush1.msra.mxu0 0.0
        %521 = vmatprep.subr.mxu0 0.0
        %522 = vmatpush1.msra.mxu0 0.0
        %523 = vmatprep.subr.mxu0 0.0
        %524 = vmatpush1.msra.mxu0 0.0
        %525 = vmatprep.subr.mxu0 0.0
        %526 = vmatpush1.msra.mxu0 0.0
        %527 = vmatprep.subr.mxu0 0.0
        %528 = vmatpush1.msra.mxu0 0.0
        %529 = vmatprep.subr.mxu0 0.0
        %530 = vmatpush1.msra.mxu0 0.0
        %531 = vmatprep.subr.mxu0 0.0
        %532 = vmatpush1.msra.mxu0 0.0
        %533 = vmatprep.subr.mxu0 0.0
        %534 = vmatpush1.msra.mxu0 0.0
        %535 = vmatprep.subr.mxu0 0.0
        %536 = vmatpush1.msra.mxu0 0.0
        %537 = vmatprep.subr.mxu0 0.0
        %538 = vmatpush1.msra.mxu0 0.0
        %539 = vmatprep.subr.mxu0 0.0
        %540 = vmatpush1.msra.mxu0 0.0
        %541 = vmatprep.subr.mxu0 0.0
        %542 = vmatpush1.msra.mxu0 0.0
        %543 = vmatprep.subr.mxu0 0.0
        %544 = vmatpush1.msra.mxu0 0.0
        %545 = vmatprep.subr.mxu0 0.0
        %546 = vmatpush1.msra.mxu0 0.0
        %547 = vmatprep.subr.mxu0 0.0
        %548 = vmatpush1.msra.mxu0 0.0
        %549 = vmatprep.subr.mxu0 0.0
        %550 = vmatpush1.msra.mxu0 0.0
        %551 = vmatprep.subr.mxu0 0.0
        %552 = vmatpush1.msra.mxu0 0.0
        %553 = vmatprep.subr.mxu0 0.0
        %554 = vmatpush1.msra.mxu0 0.0
        %555 = vmatprep.subr.mxu0 0.0
        %556 = vmatpush1.msra.mxu0 0.0
        %557 = vmatprep.subr.mxu0 0.0
        %558 = vmatpush1.msra.mxu0 0.0
        %559 = vmatprep.subr.mxu0 0.0
        %560 = vmatpush1.msra.mxu0 0.0
        %561 = vmatprep.subr.mxu0 0.0
        %562 = vmatpush1.msra.mxu0 0.0
        %563 = vmatprep.subr.mxu0 0.0
        %564 = vmatpush1.msra.mxu0 0.0
        %565 = vmatprep.subr.mxu0 0.0
        %566 = vmatpush1.msra.mxu0 0.0
        %567 = vmatprep.subr.mxu0 0.0
        %568 = vmatpush1.msra.mxu0 0.0
        %569 = vmatprep.subr.mxu0 0.0
        %570 = vmatpush1.msra.mxu0 0.0
        %571 = vmatprep.subr.mxu0 0.0
        %572 = vmatpush1.msra.mxu0 0.0
        %573 = vmatprep.subr.mxu0 0.0
        %574 = vmatpush1.msra.mxu0 0.0
        %575 = vmatprep.mubr.f32.mxu0 0.0
        %576 = vmatmul.mubr.f32.gmra.mrb[0].mxu0 %v434
        %v577 = vpop.f32.mrb[0].mxu0
        %v578 = vadd.f32 0.0, %v577
        %v579 = vpop.f32.mrb[0].mxu0
        %580 = vmatprep.mubr.f32.mxu0 0.0
        %581 = vmatmul.mubr.f32.gmra.mrb[0].mxu0 %v437
        %v582 = vpop.f32.mrb[0].mxu0
        %v583 = vadd.f32 0.0, %v582
        %v584 = vpop.f32.mrb[0].mxu0
        %585 = vmatprep.mubr.f32.mxu0 0.0
        %586 = vmatmul.mubr.f32.gmra.mrb[0].mxu0 %v440
        %v587 = vpop.f32.mrb[0].mxu0
        %v588 = vadd.f32 0.0, %v587
        %v589 = vpop.f32.mrb[0].mxu0
        %590 = vmatprep.mubr.f32.mxu0 0.0
        %591 = vmatmul.mubr.f32.gmra.mrb[0].mxu0 %v443
        %v592 = vpop.f32.mrb[0].mxu0
        %v593 = vadd.f32 0.0, %v592
        %v594 = vpop.f32.mrb[0].mxu0
        %595 = vmatprep.mubr.f32.mxu0 0.0
        %596 = vmatmul.mubr.f32.gmra.mrb[0].mxu0 %v446
        %v597 = vpop.f32.mrb[0].mxu0
        %v598 = vadd.f32 0.0, %v597
        %v599 = vpop.f32.mrb[0].mxu0
        %600 = vmatprep.mubr.f32.mxu0 0.0
        %601 = vmatmul.mubr.f32.gmra.mrb[0].mxu0 %v449
        %v602 = vpop.f32.mrb[0].mxu0
        %v603 = vadd.f32 0.0, %v602
        %v604 = vpop.f32.mrb[0].mxu0
        %605 = vmatprep.mubr.f32.mxu0 0.0
        %606 = vmatmul.mubr.f32.gmra.mrb[0].mxu0 %v452
        %v607 = vpop.f32.mrb[0].mxu0
        %v608 = vadd.f32 0.0, %v607
        %v609 = vpop.f32.mrb[0].mxu0
        %610 = vmatprep.mubr.f32.mxu0 0.0
        %611 = vmatmul.mubr.f32.gmra.mrb[0].mxu0 %v455
        %v612 = vpop.f32.mrb[0].mxu0
        %v613 = vadd.f32 0.0, %v612
        %v614 = vpop.f32.mrb[0].mxu0
        %615 = vmatprep.mubr.f32.mxu0 0.0
        %616 = vmatmul.mubr.f32.gmra.mrb[0].mxu0 %v458
        %v617 = vpop.f32.mrb[0].mxu0
        %v618 = vadd.f32 0.0, %v617
        %v619 = vpop.f32.mrb[0].mxu0
        %620 = vmatprep.mubr.f32.mxu0 0.0
        %621 = vmatmul.mubr.f32.gmra.mrb[0].mxu0 %v461
        %v622 = vpop.f32.mrb[0].mxu0
        %v623 = vadd.f32 0.0, %v622
        %v624 = vpop.f32.mrb[0].mxu0
        %625 = vmatprep.mubr.f32.mxu0 0.0
        %626 = vmatmul.mubr.f32.gmra.mrb[0].mxu0 %v464
        %v627 = vpop.f32.mrb[0].mxu0
        %v628 = vadd.f32 0.0, %v627
        %v629 = vpop.f32.mrb[0].mxu0
        %630 = vmatprep.mubr.f32.mxu0 0.0
        %631 = vmatmul.mubr.f32.gmra.mrb[0].mxu0 %v467
        %v632 = vpop.f32.mrb[0].mxu0
        %v633 = vadd.f32 0.0, %v632
        %v634 = vpop.f32.mrb[0].mxu0
        %635 = vmatprep.mubr.f32.mxu0 0.0
        %636 = vmatmul.mubr.f32.gmra.mrb[0].mxu0 %v470
        %v637 = vpop.f32.mrb[0].mxu0
        %v638 = vadd.f32 0.0, %v637
        %v639 = vpop.f32.mrb[0].mxu0
        %640 = vmatprep.mubr.f32.mxu0 0.0
        %641 = vmatmul.mubr.f32.gmra.mrb[0].mxu0 %v473
        %v642 = vpop.f32.mrb[0].mxu0
        %v643 = vadd.f32 0.0, %v642
        %v644 = vpop.f32.mrb[0].mxu0
        %645 = vmatprep.mubr.f32.mxu0 0.0
        %646 = vmatmul.mubr.f32.gmra.mrb[0].mxu0 %v476
        %v647 = vpop.f32.mrb[0].mxu0
        %v648 = vadd.f32 0.0, %v647
        %v649 = vpop.f32.mrb[0].mxu0
        %650 = vmatprep.mubr.f32.mxu0 0.0
        %651 = vmatmul.mubr.f32.gmra.mrb[0].mxu0 %v479
        %v652 = vpop.f32.mrb[0].mxu0
        %v653 = vadd.f32 0.0, %v652
        %v654 = vpop.f32.mrb[0].mxu0
        %655 = vmatprep.mubr.f32.mxu0 0.0
        %656 = vmatmul.mubr.f32.gmra.mrb[0].mxu0 %v482
        %v657 = vpop.f32.mrb[0].mxu0
        %v658 = vadd.f32 0.0, %v657
        %v659 = vpop.f32.mrb[0].mxu0
        %660 = vmatprep.mubr.f32.mxu0 0.0
        %661 = vmatmul.mubr.f32.gmra.mrb[0].mxu0 %v485
        %v662 = vpop.f32.mrb[0].mxu0
        %v663 = vadd.f32 0.0, %v662
        %v664 = vpop.f32.mrb[0].mxu0
        %665 = vmatprep.mubr.f32.mxu0 0.0
        %666 = vmatmul.mubr.f32.gmra.mrb[0].mxu0 %v488
        %v667 = vpop.f32.mrb[0].mxu0
        %v668 = vadd.f32 0.0, %v667
        %v669 = vpop.f32.mrb[0].mxu0
        %670 = vmatprep.mubr.f32.mxu0 0.0
        %671 = vmatmul.mubr.f32.gmra.mrb[0].mxu0 %v491
        %v672 = vpop.f32.mrb[0].mxu0
        %v673 = vadd.f32 0.0, %v672
        %v674 = vpop.f32.mrb[0].mxu0
        %675 = vmatprep.mubr.f32.mxu0 0.0
        %676 = vmatmul.mubr.f32.gmra.mrb[0].mxu0 %v494
        %v677 = vpop.f32.mrb[0].mxu0
        %v678 = vadd.f32 0.0, %v677
        %v679 = vpop.f32.mrb[0].mxu0
        %680 = vmatprep.mubr.f32.mxu0 0.0
        %681 = vmatmul.mubr.f32.gmra.mrb[0].mxu0 %v497
        %v682 = vpop.f32.mrb[0].mxu0
        %v683 = vadd.f32 0.0, %v682
        %v684 = vpop.f32.mrb[0].mxu0
        %685 = vmatprep.mubr.f32.mxu0 0.0
        %686 = vmatmul.mubr.f32.gmra.mrb[0].mxu0 %v500
        %v687 = vpop.f32.mrb[0].mxu0
        %v688 = vadd.f32 0.0, %v687
        %v689 = vpop.f32.mrb[0].mxu0
        %690 = vmatprep.mubr.f32.mxu0 0.0
        %691 = vmatmul.mubr.f32.gmra.mrb[0].mxu0 %v503
        %v692 = vpop.f32.mrb[0].mxu0
        %v693 = vadd.f32 0.0, %v692
        %v694 = vpop.f32.mrb[0].mxu0
        %695 = vmatprep.mubr.f32.mxu0 0.0
        %696 = vmatmul.mubr.f32.gmra.mrb[0].mxu0 %v506
        %v697 = vpop.f32.mrb[0].mxu0
        %v698 = vadd.f32 0.0, %v697
        %v699 = vpop.f32.mrb[0].mxu0
        %700 = vmatprep.mubr.f32.mxu0 0.0
        %701 = vmatmul.mubr.f32.gmra.mrb[0].mxu0 %v509
        %v702 = vpop.f32.mrb[0].mxu0
        %v703 = vadd.f32 0.0, %v702
        %v704 = vpop.f32.mrb[0].mxu0
        %705 = vdwg.mxu0
        %v706 = vmul.f32 %v379, %v379
        %v707 = vmul.f32 %v380, %v380
        %v708 = vmul.f32 %v381, %v381
        %v709 = vmul.f32 %v382, %v382
        %v710 = vmul.f32 %v383, %v383
        %v711 = vmul.f32 %v384, %v384
        %v712 = vmul.f32 %v385, %v385
        %v713 = vmul.f32 %v386, %v386
        %v714 = vmul.f32 %v387, %v387
        %v715 = vmul.f32 %v388, %v388
        %v716 = vmul.f32 %v389, %v389
        %v717 = vmul.f32 %v390, %v390
        %v718 = vmul.f32 %v391, %v391
        %v719 = vmul.f32 %v392, %v392
        %v720 = vmul.f32 %v393, %v393
        %v721 = vmul.f32 %v394, %v394
        %v722 = vmul.f32 %v395, %v395
        %v723 = vmul.f32 %v396, %v396
        %v724 = vmul.f32 %v397, %v397
        %v725 = vmul.f32 %v398, %v398
        %v726 = vmul.f32 %v399, %v399
        %v727 = vmul.f32 %v400, %v400
        %v728 = vmul.f32 %v401, %v401
        %v729 = vmul.f32 %v402, %v402
        %v730 = vmul.f32 %v403, %v403
        %v731 = vmul.f32 %v404, %v404
        %v732 = vsel %vm432, %v706, 0.0
        %733 = vadd.xlane.f32.xlu0 %v732
        %v734 = vpop.xlane.xlu0 %733
        %v735 = vsel %vm432, %v707, 0.0
        %736 = vadd.xlane.f32.xlu0 %v735
        %v737 = vpop.xlane.xlu0 %736
        %v738 = vsel %vm432, %v708, 0.0
        %739 = vadd.xlane.f32.xlu0 %v738
        %v740 = vpop.xlane.xlu0 %739
        %v741 = vsel %vm432, %v709, 0.0
        %742 = vadd.xlane.f32.xlu0 %v741
        %v743 = vpop.xlane.xlu0 %742
        %v744 = vsel %vm432, %v710, 0.0
        %745 = vadd.xlane.f32.xlu0 %v744
        %v746 = vpop.xlane.xlu0 %745
        %v747 = vsel %vm432, %v711, 0.0
        %748 = vadd.xlane.f32.xlu0 %v747
        %v749 = vpop.xlane.xlu0 %748
        %v750 = vsel %vm432, %v712, 0.0
        %751 = vadd.xlane.f32.xlu0 %v750
        %v752 = vpop.xlane.xlu0 %751
        %v753 = vsel %vm432, %v713, 0.0
        %754 = vadd.xlane.f32.xlu0 %v753
        %v755 = vpop.xlane.xlu0 %754
        %v756 = vsel %vm432, %v714, 0.0
        %757 = vadd.xlane.f32.xlu0 %v756
        %v758 = vpop.xlane.xlu0 %757
        %v759 = vsel %vm432, %v715, 0.0
        %760 = vadd.xlane.f32.xlu0 %v759
        %v761 = vpop.xlane.xlu0 %760
        %v762 = vsel %vm432, %v716, 0.0
        %763 = vadd.xlane.f32.xlu0 %v762
        %v764 = vpop.xlane.xlu0 %763
        %v765 = vsel %vm432, %v717, 0.0
        %766 = vadd.xlane.f32.xlu0 %v765
        %v767 = vpop.xlane.xlu0 %766
        %v768 = vsel %vm432, %v718, 0.0
        %769 = vadd.xlane.f32.xlu0 %v768
        %v770 = vpop.xlane.xlu0 %769
        %v771 = vsel %vm432, %v719, 0.0
        %772 = vadd.xlane.f32.xlu0 %v771
        %v773 = vpop.xlane.xlu0 %772
        %v774 = vsel %vm432, %v720, 0.0
        %775 = vadd.xlane.f32.xlu0 %v774
        %v776 = vpop.xlane.xlu0 %775
        %v777 = vsel %vm432, %v721, 0.0
        %778 = vadd.xlane.f32.xlu0 %v777
        %v779 = vpop.xlane.xlu0 %778
        %v780 = vsel %vm432, %v722, 0.0
        %781 = vadd.xlane.f32.xlu0 %v780
        %v782 = vpop.xlane.xlu0 %781
        %v783 = vsel %vm432, %v723, 0.0
        %784 = vadd.xlane.f32.xlu0 %v783
        %v785 = vpop.xlane.xlu0 %784
        %v786 = vsel %vm432, %v724, 0.0
        %787 = vadd.xlane.f32.xlu0 %v786
        %v788 = vpop.xlane.xlu0 %787
        %v789 = vsel %vm432, %v725, 0.0
        %790 = vadd.xlane.f32.xlu0 %v789
        %v791 = vpop.xlane.xlu0 %790
        %v792 = vsel %vm432, %v726, 0.0
        %793 = vadd.xlane.f32.xlu0 %v792
        %v794 = vpop.xlane.xlu0 %793
        %v795 = vsel %vm432, %v727, 0.0
        %796 = vadd.xlane.f32.xlu0 %v795
        %v797 = vpop.xlane.xlu0 %796
        %v798 = vsel %vm432, %v728, 0.0
        %799 = vadd.xlane.f32.xlu0 %v798
        %v800 = vpop.xlane.xlu0 %799
        %v801 = vsel %vm432, %v729, 0.0
        %802 = vadd.xlane.f32.xlu0 %v801
        %v803 = vpop.xlane.xlu0 %802
        %v804 = vsel %vm432, %v730, 0.0
        %805 = vadd.xlane.f32.xlu0 %v804
        %v806 = vpop.xlane.xlu0 %805
        %v807 = vsel %vm432, %v731, 0.0
        %808 = vadd.xlane.f32.xlu0 %v807
        %v809 = vpop.xlane.xlu0 %808
        %v810 = vld [vmem:[%s3] sm:$0x1]
        %v812 = vlaneseq
        %v813 = vshrl.u32 %v812, 7
        %v814 = vsub.s32 0, %v813
        %v815 = vrot.slane %v810, %v814
        %v817 = vadd.f32 %v734, %v815
        %v818 = vadd.f32 %v737, %v815
        %v819 = vadd.f32 %v740, %v815
        %v820 = vadd.f32 %v743, %v815
        %v821 = vadd.f32 %v746, %v815
        %v822 = vadd.f32 %v749, %v815
        %v823 = vadd.f32 %v752, %v815
        %v824 = vadd.f32 %v755, %v815
        %v825 = vadd.f32 %v758, %v815
        %v826 = vadd.f32 %v761, %v815
        %v827 = vadd.f32 %v764, %v815
        %v828 = vadd.f32 %v767, %v815
        %v829 = vadd.f32 %v770, %v815
        %v830 = vadd.f32 %v773, %v815
        %v831 = vadd.f32 %v776, %v815
        %v832 = vadd.f32 %v779, %v815
        %v833 = vadd.f32 %v782, %v815
        %v834 = vadd.f32 %v785, %v815
        %v835 = vadd.f32 %v788, %v815
        %v836 = vadd.f32 %v791, %v815
        %v837 = vadd.f32 %v794, %v815
        %v838 = vadd.f32 %v797, %v815
        %v839 = vadd.f32 %v800, %v815
        %v840 = vadd.f32 %v803, %v815
        %v841 = vadd.f32 %v806, %v815
        %v842 = vadd.f32 %v809, %v815
        %v843 = vmul.f32 %v578, 2.0
        %v844 = vmul.f32 %v583, 2.0
        %v845 = vmul.f32 %v588, 2.0
        %v846 = vmul.f32 %v593, 2.0
        %v847 = vmul.f32 %v598, 2.0
        %v848 = vmul.f32 %v603, 2.0
        %v849 = vmul.f32 %v608, 2.0
        %v850 = vmul.f32 %v613, 2.0
        %v851 = vmul.f32 %v618, 2.0
        %v852 = vmul.f32 %v623, 2.0
        %v853 = vmul.f32 %v628, 2.0
        %v854 = vmul.f32 %v633, 2.0
        %v855 = vmul.f32 %v638, 2.0
        %v856 = vmul.f32 %v643, 2.0
        %v857 = vmul.f32 %v648, 2.0
        %v858 = vmul.f32 %v653, 2.0
        %v859 = vmul.f32 %v658, 2.0
        %v860 = vmul.f32 %v663, 2.0
        %v861 = vmul.f32 %v668, 2.0
        %v862 = vmul.f32 %v673, 2.0
        %v863 = vmul.f32 %v678, 2.0
        %v864 = vmul.f32 %v683, 2.0
        %v865 = vmul.f32 %v688, 2.0
        %v866 = vmul.f32 %v693, 2.0
        %v867 = vmul.f32 %v698, 2.0
        %v868 = vmul.f32 %v703, 2.0
        %v869 = vsub.f32 %v817, %v843
        %v870 = vsub.f32 %v818, %v844
        %v871 = vsub.f32 %v819, %v845
        %v872 = vsub.f32 %v820, %v846
        %v873 = vsub.f32 %v821, %v847
        %v874 = vsub.f32 %v822, %v848
        %v875 = vsub.f32 %v823, %v849
        %v876 = vsub.f32 %v824, %v850
        %v877 = vsub.f32 %v825, %v851
        %v878 = vsub.f32 %v826, %v852
        %v879 = vsub.f32 %v827, %v853
        %v880 = vsub.f32 %v828, %v854
        %v881 = vsub.f32 %v829, %v855
        %v882 = vsub.f32 %v830, %v856
        %v883 = vsub.f32 %v831, %v857
        %v884 = vsub.f32 %v832, %v858
        %v885 = vsub.f32 %v833, %v859
        %v886 = vsub.f32 %v834, %v860
        %v887 = vsub.f32 %v835, %v861
        %v888 = vsub.f32 %v836, %v862
        %v889 = vsub.f32 %v837, %v863
        %v890 = vsub.f32 %v838, %v864
        %v891 = vsub.f32 %v839, %v865
        %v892 = vsub.f32 %v840, %v866
        %v893 = vsub.f32 %v841, %v867
        %v894 = vsub.f32 %v842, %v868
        %v895 = vmax.f32 %v869, 0.0
        %v896 = vmax.f32 %v870, 0.0
        %v897 = vmax.f32 %v871, 0.0
        %v898 = vmax.f32 %v872, 0.0
        %v899 = vmax.f32 %v873, 0.0
        %v900 = vmax.f32 %v874, 0.0
        %v901 = vmax.f32 %v875, 0.0
        %v902 = vmax.f32 %v876, 0.0
        %v903 = vmax.f32 %v877, 0.0
        %v904 = vmax.f32 %v878, 0.0
        %v905 = vmax.f32 %v879, 0.0
        %v906 = vmax.f32 %v880, 0.0
        %v907 = vmax.f32 %v881, 0.0
        %v908 = vmax.f32 %v882, 0.0
        %v909 = vmax.f32 %v883, 0.0
        %v910 = vmax.f32 %v884, 0.0
        %v911 = vmax.f32 %v885, 0.0
        %v912 = vmax.f32 %v886, 0.0
        %v913 = vmax.f32 %v887, 0.0
        %v914 = vmax.f32 %v888, 0.0
        %v915 = vmax.f32 %v889, 0.0
        %v916 = vmax.f32 %v890, 0.0
        %v917 = vmax.f32 %v891, 0.0
        %v918 = vmax.f32 %v892, 0.0
        %v919 = vmax.f32 %v893, 0.0
        %v920 = vmax.f32 %v894, 0.0
        %v921 = vld [vmem:[%s4] sm:$0x1]
        %922 = vset.pattern.permute.xlu0 0
        %923 = vperm.xlu0 %922, %v405
        %v924 = vpop.permute.xlu0 %923
        %925 = vset.pattern.permute.xlu0 0
        %926 = vperm.xlu0 %925, %v406
        %v927 = vpop.permute.xlu0 %926
        %928 = vset.pattern.permute.xlu0 0
        %929 = vperm.xlu0 %928, %v407
        %v930 = vpop.permute.xlu0 %929
        %931 = vset.pattern.permute.xlu0 0
        %932 = vperm.xlu0 %931, %v408
        %v933 = vpop.permute.xlu0 %932
        %934 = vset.pattern.permute.xlu0 0
        %935 = vperm.xlu0 %934, %v409
        %v936 = vpop.permute.xlu0 %935
        %937 = vset.pattern.permute.xlu0 0
        %938 = vperm.xlu0 %937, %v410
        %v939 = vpop.permute.xlu0 %938
        %940 = vset.pattern.permute.xlu0 0
        %941 = vperm.xlu0 %940, %v411
        %v942 = vpop.permute.xlu0 %941
        %943 = vset.pattern.permute.xlu0 0
        %944 = vperm.xlu0 %943, %v412
        %v945 = vpop.permute.xlu0 %944
        %946 = vset.pattern.permute.xlu0 0
        %947 = vperm.xlu0 %946, %v413
        %v948 = vpop.permute.xlu0 %947
        %949 = vset.pattern.permute.xlu0 0
        %950 = vperm.xlu0 %949, %v414
        %v951 = vpop.permute.xlu0 %950
        %952 = vset.pattern.permute.xlu0 0
        %953 = vperm.xlu0 %952, %v415
        %v954 = vpop.permute.xlu0 %953
        %955 = vset.pattern.permute.xlu0 0
        %956 = vperm.xlu0 %955, %v416
        %v957 = vpop.permute.xlu0 %956
        %958 = vset.pattern.permute.xlu0 0
        %959 = vperm.xlu0 %958, %v417
        %v960 = vpop.permute.xlu0 %959
        %961 = vset.pattern.permute.xlu0 0
        %962 = vperm.xlu0 %961, %v418
        %v963 = vpop.permute.xlu0 %962
        %964 = vset.pattern.permute.xlu0 0
        %965 = vperm.xlu0 %964, %v419
        %v966 = vpop.permute.xlu0 %965
        %967 = vset.pattern.permute.xlu0 0
        %968 = vperm.xlu0 %967, %v420
        %v969 = vpop.permute.xlu0 %968
        %970 = vset.pattern.permute.xlu0 0
        %971 = vperm.xlu0 %970, %v421
        %v972 = vpop.permute.xlu0 %971
        %973 = vset.pattern.permute.xlu0 0
        %974 = vperm.xlu0 %973, %v422
        %v975 = vpop.permute.xlu0 %974
        %976 = vset.pattern.permute.xlu0 0
        %977 = vperm.xlu0 %976, %v423
        %v978 = vpop.permute.xlu0 %977
        %979 = vset.pattern.permute.xlu0 0
        %980 = vperm.xlu0 %979, %v424
        %v981 = vpop.permute.xlu0 %980
        %982 = vset.pattern.permute.xlu0 0
        %983 = vperm.xlu0 %982, %v425
        %v984 = vpop.permute.xlu0 %983
        %985 = vset.pattern.permute.xlu0 0
        %986 = vperm.xlu0 %985, %v426
        %v987 = vpop.permute.xlu0 %986
        %988 = vset.pattern.permute.xlu0 0
        %989 = vperm.xlu0 %988, %v427
        %v990 = vpop.permute.xlu0 %989
        %991 = vset.pattern.permute.xlu0 0
        %992 = vperm.xlu0 %991, %v428
        %v993 = vpop.permute.xlu0 %992
        %994 = vset.pattern.permute.xlu0 0
        %995 = vperm.xlu0 %994, %v429
        %v996 = vpop.permute.xlu0 %995
        %997 = vset.pattern.permute.xlu0 0
        %998 = vperm.xlu0 %997, %v430
        %v999 = vpop.permute.xlu0 %998
        %v1000 = vlaneseq
        %v1001 = vshrl.u32 %v1000, 7
        %v1002 = vsub.s32 0, %v1001
        %v1003 = vrot.slane %v921, %v1002
        %vm1004 = vcmp.eq.s32.totalorder %v924, %v1003
        %vm1005 = vcmp.eq.s32.totalorder %v927, %v1003
        %vm1006 = vcmp.eq.s32.totalorder %v930, %v1003
        %vm1007 = vcmp.eq.s32.totalorder %v933, %v1003
        %vm1008 = vcmp.eq.s32.totalorder %v936, %v1003
        %vm1009 = vcmp.eq.s32.totalorder %v939, %v1003
        %vm1010 = vcmp.eq.s32.totalorder %v942, %v1003
        %vm1011 = vcmp.eq.s32.totalorder %v945, %v1003
        %vm1012 = vcmp.eq.s32.totalorder %v948, %v1003
        %vm1013 = vcmp.eq.s32.totalorder %v951, %v1003
        %vm1014 = vcmp.eq.s32.totalorder %v954, %v1003
        %vm1015 = vcmp.eq.s32.totalorder %v957, %v1003
        %vm1016 = vcmp.eq.s32.totalorder %v960, %v1003
        %vm1017 = vcmp.eq.s32.totalorder %v963, %v1003
        %vm1018 = vcmp.eq.s32.totalorder %v966, %v1003
        %vm1019 = vcmp.eq.s32.totalorder %v969, %v1003
        %vm1020 = vcmp.eq.s32.totalorder %v972, %v1003
        %vm1021 = vcmp.eq.s32.totalorder %v975, %v1003
        %vm1022 = vcmp.eq.s32.totalorder %v978, %v1003
        %vm1023 = vcmp.eq.s32.totalorder %v981, %v1003
        %vm1024 = vcmp.eq.s32.totalorder %v984, %v1003
        %vm1025 = vcmp.eq.s32.totalorder %v987, %v1003
        %vm1026 = vcmp.eq.s32.totalorder %v990, %v1003
        %vm1027 = vcmp.eq.s32.totalorder %v993, %v1003
        %vm1028 = vcmp.eq.s32.totalorder %v996, %v1003
        %vm1029 = vcmp.eq.s32.totalorder %v999, %v1003
        %v1030 = vsel %vm1004, %v895, 1e+30
        %v1031 = vsel %vm1005, %v896, 1e+30
        %v1032 = vsel %vm1006, %v897, 1e+30
        %v1033 = vsel %vm1007, %v898, 1e+30
        %v1034 = vsel %vm1008, %v899, 1e+30
        %v1035 = vsel %vm1009, %v900, 1e+30
        %v1036 = vsel %vm1010, %v901, 1e+30
        %v1037 = vsel %vm1011, %v902, 1e+30
        %v1038 = vsel %vm1012, %v903, 1e+30
        %v1039 = vsel %vm1013, %v904, 1e+30
        %v1040 = vsel %vm1014, %v905, 1e+30
        %v1041 = vsel %vm1015, %v906, 1e+30
        %v1042 = vsel %vm1016, %v907, 1e+30
        %v1043 = vsel %vm1017, %v908, 1e+30
        %v1044 = vsel %vm1018, %v909, 1e+30
        %v1045 = vsel %vm1019, %v910, 1e+30
        %v1046 = vsel %vm1020, %v911, 1e+30
        %v1047 = vsel %vm1021, %v912, 1e+30
        %v1048 = vsel %vm1022, %v913, 1e+30
        %v1049 = vsel %vm1023, %v914, 1e+30
        %v1050 = vsel %vm1024, %v915, 1e+30
        %v1051 = vsel %vm1025, %v916, 1e+30
        %v1052 = vsel %vm1026, %v917, 1e+30
        %v1053 = vsel %vm1027, %v918, 1e+30
        %v1054 = vsel %vm1028, %v919, 1e+30
        %v1055 = vsel %vm1029, %v920, 1e+30
        %1056 = vmin.xlane.f32.xlu0 %v1030
        %v1057 = vpop.xlane.xlu0 %1056
        %1058 = vmin.xlane.f32.xlu0 %v1031
        %v1059 = vpop.xlane.xlu0 %1058
        %1060 = vmin.xlane.f32.xlu0 %v1032
        %v1061 = vpop.xlane.xlu0 %1060
        %1062 = vmin.xlane.f32.xlu0 %v1033
        %v1063 = vpop.xlane.xlu0 %1062
        %1064 = vmin.xlane.f32.xlu0 %v1034
        %v1065 = vpop.xlane.xlu0 %1064
        %1066 = vmin.xlane.f32.xlu0 %v1035
        %v1067 = vpop.xlane.xlu0 %1066
        %1068 = vmin.xlane.f32.xlu0 %v1036
        %v1069 = vpop.xlane.xlu0 %1068
        %1070 = vmin.xlane.f32.xlu0 %v1037
        %v1071 = vpop.xlane.xlu0 %1070
        %1072 = vmin.xlane.f32.xlu0 %v1038
        %v1073 = vpop.xlane.xlu0 %1072
        %1074 = vmin.xlane.f32.xlu0 %v1039
        %v1075 = vpop.xlane.xlu0 %1074
        %1076 = vmin.xlane.f32.xlu0 %v1040
        %v1077 = vpop.xlane.xlu0 %1076
        %1078 = vmin.xlane.f32.xlu0 %v1041
        %v1079 = vpop.xlane.xlu0 %1078
        %1080 = vmin.xlane.f32.xlu0 %v1042
        %v1081 = vpop.xlane.xlu0 %1080
        %1082 = vmin.xlane.f32.xlu0 %v1043
        %v1083 = vpop.xlane.xlu0 %1082
        %1084 = vmin.xlane.f32.xlu0 %v1044
        %v1085 = vpop.xlane.xlu0 %1084
        %1086 = vmin.xlane.f32.xlu0 %v1045
        %v1087 = vpop.xlane.xlu0 %1086
        %1088 = vmin.xlane.f32.xlu0 %v1046
        %v1089 = vpop.xlane.xlu0 %1088
        %1090 = vmin.xlane.f32.xlu0 %v1047
        %v1091 = vpop.xlane.xlu0 %1090
        %1092 = vmin.xlane.f32.xlu0 %v1048
        %v1093 = vpop.xlane.xlu0 %1092
        %1094 = vmin.xlane.f32.xlu0 %v1049
        %v1095 = vpop.xlane.xlu0 %1094
        %1096 = vmin.xlane.f32.xlu0 %v1050
        %v1097 = vpop.xlane.xlu0 %1096
        %1098 = vmin.xlane.f32.xlu0 %v1051
        %v1099 = vpop.xlane.xlu0 %1098
        %1100 = vmin.xlane.f32.xlu0 %v1052
        %v1101 = vpop.xlane.xlu0 %1100
        %1102 = vmin.xlane.f32.xlu0 %v1053
        %v1103 = vpop.xlane.xlu0 %1102
        %1104 = vmin.xlane.f32.xlu0 %v1054
        %v1105 = vpop.xlane.xlu0 %1104
        %1106 = vmin.xlane.f32.xlu0 %v1055
        %v1107 = vpop.xlane.xlu0 %1106
        %vm1108 = vcmp.eq.f32.partialorder %v1030, %v1057
        %vm1109 = vcmp.eq.f32.partialorder %v1031, %v1059
        %vm1110 = vcmp.eq.f32.partialorder %v1032, %v1061
        %vm1111 = vcmp.eq.f32.partialorder %v1033, %v1063
        %vm1112 = vcmp.eq.f32.partialorder %v1034, %v1065
        %vm1113 = vcmp.eq.f32.partialorder %v1035, %v1067
        %vm1114 = vcmp.eq.f32.partialorder %v1036, %v1069
        %vm1115 = vcmp.eq.f32.partialorder %v1037, %v1071
        %vm1116 = vcmp.eq.f32.partialorder %v1038, %v1073
        %vm1117 = vcmp.eq.f32.partialorder %v1039, %v1075
        %vm1118 = vcmp.eq.f32.partialorder %v1040, %v1077
        %vm1119 = vcmp.eq.f32.partialorder %v1041, %v1079
        %vm1120 = vcmp.eq.f32.partialorder %v1042, %v1081
        %vm1121 = vcmp.eq.f32.partialorder %v1043, %v1083
        %vm1122 = vcmp.eq.f32.partialorder %v1044, %v1085
        %vm1123 = vcmp.eq.f32.partialorder %v1045, %v1087
        %vm1124 = vcmp.eq.f32.partialorder %v1046, %v1089
        %vm1125 = vcmp.eq.f32.partialorder %v1047, %v1091
        %vm1126 = vcmp.eq.f32.partialorder %v1048, %v1093
        %vm1127 = vcmp.eq.f32.partialorder %v1049, %v1095
        %vm1128 = vcmp.eq.f32.partialorder %v1050, %v1097
        %vm1129 = vcmp.eq.f32.partialorder %v1051, %v1099
        %vm1130 = vcmp.eq.f32.partialorder %v1052, %v1101
        %vm1131 = vcmp.eq.f32.partialorder %v1053, %v1103
        %vm1132 = vcmp.eq.f32.partialorder %v1054, %v1105
        %vm1133 = vcmp.eq.f32.partialorder %v1055, %v1107
        %vm1134 = vcmp.ge.f32.partialorder %v1057, 1e+30
        %vm1135 = vcmp.ge.f32.partialorder %v1059, 1e+30
        %vm1136 = vcmp.ge.f32.partialorder %v1061, 1e+30
        %vm1137 = vcmp.ge.f32.partialorder %v1063, 1e+30
        %vm1138 = vcmp.ge.f32.partialorder %v1065, 1e+30
        %vm1139 = vcmp.ge.f32.partialorder %v1067, 1e+30
        %vm1140 = vcmp.ge.f32.partialorder %v1069, 1e+30
        %vm1141 = vcmp.ge.f32.partialorder %v1071, 1e+30
        %vm1142 = vcmp.ge.f32.partialorder %v1073, 1e+30
        %vm1143 = vcmp.ge.f32.partialorder %v1075, 1e+30
        %vm1144 = vcmp.ge.f32.partialorder %v1077, 1e+30
        %vm1145 = vcmp.ge.f32.partialorder %v1079, 1e+30
        %vm1146 = vcmp.ge.f32.partialorder %v1081, 1e+30
        %vm1147 = vcmp.ge.f32.partialorder %v1083, 1e+30
        %vm1148 = vcmp.ge.f32.partialorder %v1085, 1e+30
        %vm1149 = vcmp.ge.f32.partialorder %v1087, 1e+30
        %vm1150 = vcmp.ge.f32.partialorder %v1089, 1e+30
        %vm1151 = vcmp.ge.f32.partialorder %v1091, 1e+30
        %vm1152 = vcmp.ge.f32.partialorder %v1093, 1e+30
        %vm1153 = vcmp.ge.f32.partialorder %v1095, 1e+30
        %vm1154 = vcmp.ge.f32.partialorder %v1097, 1e+30
        %vm1155 = vcmp.ge.f32.partialorder %v1099, 1e+30
        %vm1156 = vcmp.ge.f32.partialorder %v1101, 1e+30
        %vm1157 = vcmp.ge.f32.partialorder %v1103, 1e+30
        %vm1158 = vcmp.ge.f32.partialorder %v1105, 1e+30
        %vm1159 = vcmp.ge.f32.partialorder %v1107, 1e+30
        %v1160 = vmax.f32 %v1057, 1e-16
        %v1161 = vmax.f32 %v1059, 1e-16
        %v1162 = vmax.f32 %v1061, 1e-16
        %v1163 = vmax.f32 %v1063, 1e-16
        %v1164 = vmax.f32 %v1065, 1e-16
        %v1165 = vmax.f32 %v1067, 1e-16
        %v1166 = vmax.f32 %v1069, 1e-16
        %v1167 = vmax.f32 %v1071, 1e-16
        %v1168 = vmax.f32 %v1073, 1e-16
        %v1169 = vmax.f32 %v1075, 1e-16
        %v1170 = vmax.f32 %v1077, 1e-16
        %v1171 = vmax.f32 %v1079, 1e-16
        %v1172 = vmax.f32 %v1081, 1e-16
        %v1173 = vmax.f32 %v1083, 1e-16
        %v1174 = vmax.f32 %v1085, 1e-16
        %v1175 = vmax.f32 %v1087, 1e-16
        %v1176 = vmax.f32 %v1089, 1e-16
        %v1177 = vmax.f32 %v1091, 1e-16
        %v1178 = vmax.f32 %v1093, 1e-16
        %v1179 = vmax.f32 %v1095, 1e-16
        %v1180 = vmax.f32 %v1097, 1e-16
        %v1181 = vmax.f32 %v1099, 1e-16
        %v1182 = vmax.f32 %v1101, 1e-16
        %v1183 = vmax.f32 %v1103, 1e-16
        %v1184 = vmax.f32 %v1105, 1e-16
        %v1185 = vmax.f32 %v1107, 1e-16
        %v1186 = vrcp.pop %v1160
        %v1187 = vrcp.pop %v1161
        %v1188 = vrcp.pop %v1162
        %v1189 = vrcp.pop %v1163
        %v1190 = vrcp.pop %v1164
        %v1191 = vrcp.pop %v1165
        %v1192 = vrcp.pop %v1166
        %v1193 = vrcp.pop %v1167
        %v1194 = vrcp.pop %v1168
        %v1195 = vrcp.pop %v1169
        %v1196 = vrcp.pop %v1170
        %v1197 = vrcp.pop %v1171
        %v1198 = vrcp.pop %v1172
        %v1199 = vrcp.pop %v1173
        %v1200 = vrcp.pop %v1174
        %v1201 = vrcp.pop %v1175
        %v1202 = vrcp.pop %v1176
        %v1203 = vrcp.pop %v1177
        %v1204 = vrcp.pop %v1178
        %v1205 = vrcp.pop %v1179
        %v1206 = vrcp.pop %v1180
        %v1207 = vrcp.pop %v1181
        %v1208 = vrcp.pop %v1182
        %v1209 = vrcp.pop %v1183
        %v1210 = vrcp.pop %v1184
        %v1211 = vrcp.pop %v1185
        %v1212 = vsel %vm1134, 0.0, %v1186
        %v1213 = vsel %vm1135, 0.0, %v1187
        %v1214 = vsel %vm1136, 0.0, %v1188
        %v1215 = vsel %vm1137, 0.0, %v1189
        %v1216 = vsel %vm1138, 0.0, %v1190
        %v1217 = vsel %vm1139, 0.0, %v1191
        %v1218 = vsel %vm1140, 0.0, %v1192
        %v1219 = vsel %vm1141, 0.0, %v1193
        %v1220 = vsel %vm1142, 0.0, %v1194
        %v1221 = vsel %vm1143, 0.0, %v1195
        %v1222 = vsel %vm1144, 0.0, %v1196
        %v1223 = vsel %vm1145, 0.0, %v1197
        %v1224 = vsel %vm1146, 0.0, %v1198
        %v1225 = vsel %vm1147, 0.0, %v1199
        %v1226 = vsel %vm1148, 0.0, %v1200
        %v1227 = vsel %vm1149, 0.0, %v1201
        %v1228 = vsel %vm1150, 0.0, %v1202
        %v1229 = vsel %vm1151, 0.0, %v1203
        %v1230 = vsel %vm1152, 0.0, %v1204
        %v1231 = vsel %vm1153, 0.0, %v1205
        %v1232 = vsel %vm1154, 0.0, %v1206
        %v1233 = vsel %vm1155, 0.0, %v1207
        %v1234 = vsel %vm1156, 0.0, %v1208
        %v1235 = vsel %vm1157, 0.0, %v1209
        %v1236 = vsel %vm1158, 0.0, %v1210
        %v1237 = vsel %vm1159, 0.0, %v1211
        %v1238 = vadd.f32 %v1212, 0.0
        %v1239 = vadd.f32 %v1213, 0.0
        %v1240 = vadd.f32 %v1214, 0.0
        %v1241 = vadd.f32 %v1215, 0.0
        %v1242 = vadd.f32 %v1216, 0.0
        %v1243 = vadd.f32 %v1217, 0.0
        %v1244 = vadd.f32 %v1218, 0.0
        %v1245 = vadd.f32 %v1219, 0.0
        %v1246 = vadd.f32 %v1220, 0.0
        %v1247 = vadd.f32 %v1221, 0.0
        %v1248 = vadd.f32 %v1222, 0.0
        %v1249 = vadd.f32 %v1223, 0.0
        %v1250 = vadd.f32 %v1224, 0.0
        %v1251 = vadd.f32 %v1225, 0.0
        %v1252 = vadd.f32 %v1226, 0.0
        %v1253 = vadd.f32 %v1227, 0.0
        %v1254 = vadd.f32 %v1228, 0.0
        %v1255 = vadd.f32 %v1229, 0.0
        %v1256 = vadd.f32 %v1230, 0.0
        %v1257 = vadd.f32 %v1231, 0.0
        %v1258 = vadd.f32 %v1232, 0.0
        %v1259 = vadd.f32 %v1233, 0.0
        %v1260 = vadd.f32 %v1234, 0.0
        %v1261 = vadd.f32 %v1235, 0.0
        %v1262 = vadd.f32 %v1236, 0.0
        %v1263 = vadd.f32 %v1237, 0.0
        %v1264 = vsel %vm1108, %v1238, 0.0
        %v1265 = vsel %vm1109, %v1239, 0.0
        %v1266 = vsel %vm1110, %v1240, 0.0
        %v1267 = vsel %vm1111, %v1241, 0.0
        %v1268 = vsel %vm1112, %v1242, 0.0
        %v1269 = vsel %vm1113, %v1243, 0.0
        %v1270 = vsel %vm1114, %v1244, 0.0
        %v1271 = vsel %vm1115, %v1245, 0.0
        %v1272 = vsel %vm1116, %v1246, 0.0
        %v1273 = vsel %vm1117, %v1247, 0.0
        %v1274 = vsel %vm1118, %v1248, 0.0
        %v1275 = vsel %vm1119, %v1249, 0.0
        %v1276 = vsel %vm1120, %v1250, 0.0
        %v1277 = vsel %vm1121, %v1251, 0.0
        %v1278 = vsel %vm1122, %v1252, 0.0
        %v1279 = vsel %vm1123, %v1253, 0.0
        %v1280 = vsel %vm1124, %v1254, 0.0
        %v1281 = vsel %vm1125, %v1255, 0.0
        %v1282 = vsel %vm1126, %v1256, 0.0
        %v1283 = vsel %vm1127, %v1257, 0.0
        %v1284 = vsel %vm1128, %v1258, 0.0
        %v1285 = vsel %vm1129, %v1259, 0.0
        %v1286 = vsel %vm1130, %v1260, 0.0
        %v1287 = vsel %vm1131, %v1261, 0.0
        %v1288 = vsel %vm1132, %v1262, 0.0
        %v1289 = vsel %vm1133, %v1263, 0.0
        %v1290 = vsel %vm1108, 1e+30, %v1030
        %v1291 = vsel %vm1109, 1e+30, %v1031
        %v1292 = vsel %vm1110, 1e+30, %v1032
        %v1293 = vsel %vm1111, 1e+30, %v1033
        %v1294 = vsel %vm1112, 1e+30, %v1034
        %v1295 = vsel %vm1113, 1e+30, %v1035
        %v1296 = vsel %vm1114, 1e+30, %v1036
        %v1297 = vsel %vm1115, 1e+30, %v1037
        %v1298 = vsel %vm1116, 1e+30, %v1038
        %v1299 = vsel %vm1117, 1e+30, %v1039
        %v1300 = vsel %vm1118, 1e+30, %v1040
        %v1301 = vsel %vm1119, 1e+30, %v1041
        %v1302 = vsel %vm1120, 1e+30, %v1042
        %v1303 = vsel %vm1121, 1e+30, %v1043
        %v1304 = vsel %vm1122, 1e+30, %v1044
        %v1305 = vsel %vm1123, 1e+30, %v1045
        %v1306 = vsel %vm1124, 1e+30, %v1046
        %v1307 = vsel %vm1125, 1e+30, %v1047
        %v1308 = vsel %vm1126, 1e+30, %v1048
        %v1309 = vsel %vm1127, 1e+30, %v1049
        %v1310 = vsel %vm1128, 1e+30, %v1050
        %v1311 = vsel %vm1129, 1e+30, %v1051
        %v1312 = vsel %vm1130, 1e+30, %v1052
        %v1313 = vsel %vm1131, 1e+30, %v1053
        %v1314 = vsel %vm1132, 1e+30, %v1054
        %v1315 = vsel %vm1133, 1e+30, %v1055
        %1316 = vmin.xlane.f32.xlu0 %v1290
        %v1317 = vpop.xlane.xlu0 %1316
        %1318 = vmin.xlane.f32.xlu0 %v1291
        %v1319 = vpop.xlane.xlu0 %1318
        %1320 = vmin.xlane.f32.xlu0 %v1292
        %v1321 = vpop.xlane.xlu0 %1320
        %1322 = vmin.xlane.f32.xlu0 %v1293
        %v1323 = vpop.xlane.xlu0 %1322
        %1324 = vmin.xlane.f32.xlu0 %v1294
        %v1325 = vpop.xlane.xlu0 %1324
        %1326 = vmin.xlane.f32.xlu0 %v1295
        %v1327 = vpop.xlane.xlu0 %1326
        %1328 = vmin.xlane.f32.xlu0 %v1296
        %v1329 = vpop.xlane.xlu0 %1328
        %1330 = vmin.xlane.f32.xlu0 %v1297
        %v1331 = vpop.xlane.xlu0 %1330
        %1332 = vmin.xlane.f32.xlu0 %v1298
        %v1333 = vpop.xlane.xlu0 %1332
        %1334 = vmin.xlane.f32.xlu0 %v1299
        %v1335 = vpop.xlane.xlu0 %1334
        %1336 = vmin.xlane.f32.xlu0 %v1300
        %v1337 = vpop.xlane.xlu0 %1336
        %1338 = vmin.xlane.f32.xlu0 %v1301
        %v1339 = vpop.xlane.xlu0 %1338
        %1340 = vmin.xlane.f32.xlu0 %v1302
        %v1341 = vpop.xlane.xlu0 %1340
        %1342 = vmin.xlane.f32.xlu0 %v1303
        %v1343 = vpop.xlane.xlu0 %1342
        %1344 = vmin.xlane.f32.xlu0 %v1304
        %v1345 = vpop.xlane.xlu0 %1344
        %1346 = vmin.xlane.f32.xlu0 %v1305
        %v1347 = vpop.xlane.xlu0 %1346
        %1348 = vmin.xlane.f32.xlu0 %v1306
        %v1349 = vpop.xlane.xlu0 %1348
        %1350 = vmin.xlane.f32.xlu0 %v1307
        %v1351 = vpop.xlane.xlu0 %1350
        %1352 = vmin.xlane.f32.xlu0 %v1308
        %v1353 = vpop.xlane.xlu0 %1352
        %1354 = vmin.xlane.f32.xlu0 %v1309
        %v1355 = vpop.xlane.xlu0 %1354
        %1356 = vmin.xlane.f32.xlu0 %v1310
        %v1357 = vpop.xlane.xlu0 %1356
        %1358 = vmin.xlane.f32.xlu0 %v1311
        %v1359 = vpop.xlane.xlu0 %1358
        %1360 = vmin.xlane.f32.xlu0 %v1312
        %v1361 = vpop.xlane.xlu0 %1360
        %1362 = vmin.xlane.f32.xlu0 %v1313
        %v1363 = vpop.xlane.xlu0 %1362
        %1364 = vmin.xlane.f32.xlu0 %v1314
        %v1365 = vpop.xlane.xlu0 %1364
        %1366 = vmin.xlane.f32.xlu0 %v1315
        %v1367 = vpop.xlane.xlu0 %1366
        %vm1368 = vcmp.eq.f32.partialorder %v1290, %v1317
        %vm1369 = vcmp.eq.f32.partialorder %v1291, %v1319
        %vm1370 = vcmp.eq.f32.partialorder %v1292, %v1321
        %vm1371 = vcmp.eq.f32.partialorder %v1293, %v1323
        %vm1372 = vcmp.eq.f32.partialorder %v1294, %v1325
        %vm1373 = vcmp.eq.f32.partialorder %v1295, %v1327
        %vm1374 = vcmp.eq.f32.partialorder %v1296, %v1329
        %vm1375 = vcmp.eq.f32.partialorder %v1297, %v1331
        %vm1376 = vcmp.eq.f32.partialorder %v1298, %v1333
        %vm1377 = vcmp.eq.f32.partialorder %v1299, %v1335
        %vm1378 = vcmp.eq.f32.partialorder %v1300, %v1337
        %vm1379 = vcmp.eq.f32.partialorder %v1301, %v1339
        %vm1380 = vcmp.eq.f32.partialorder %v1302, %v1341
        %vm1381 = vcmp.eq.f32.partialorder %v1303, %v1343
        %vm1382 = vcmp.eq.f32.partialorder %v1304, %v1345
        %vm1383 = vcmp.eq.f32.partialorder %v1305, %v1347
        %vm1384 = vcmp.eq.f32.partialorder %v1306, %v1349
        %vm1385 = vcmp.eq.f32.partialorder %v1307, %v1351
        %vm1386 = vcmp.eq.f32.partialorder %v1308, %v1353
        %vm1387 = vcmp.eq.f32.partialorder %v1309, %v1355
        %vm1388 = vcmp.eq.f32.partialorder %v1310, %v1357
        %vm1389 = vcmp.eq.f32.partialorder %v1311, %v1359
        %vm1390 = vcmp.eq.f32.partialorder %v1312, %v1361
        %vm1391 = vcmp.eq.f32.partialorder %v1313, %v1363
        %vm1392 = vcmp.eq.f32.partialorder %v1314, %v1365
        %vm1393 = vcmp.eq.f32.partialorder %v1315, %v1367
        %vm1394 = vcmp.ge.f32.partialorder %v1317, 1e+30
        %vm1395 = vcmp.ge.f32.partialorder %v1319, 1e+30
        %vm1396 = vcmp.ge.f32.partialorder %v1321, 1e+30
        %vm1397 = vcmp.ge.f32.partialorder %v1323, 1e+30
        %vm1398 = vcmp.ge.f32.partialorder %v1325, 1e+30
        %vm1399 = vcmp.ge.f32.partialorder %v1327, 1e+30
        %vm1400 = vcmp.ge.f32.partialorder %v1329, 1e+30
        %vm1401 = vcmp.ge.f32.partialorder %v1331, 1e+30
        %vm1402 = vcmp.ge.f32.partialorder %v1333, 1e+30
        %vm1403 = vcmp.ge.f32.partialorder %v1335, 1e+30
        %vm1404 = vcmp.ge.f32.partialorder %v1337, 1e+30
        %vm1405 = vcmp.ge.f32.partialorder %v1339, 1e+30
        %vm1406 = vcmp.ge.f32.partialorder %v1341, 1e+30
        %vm1407 = vcmp.ge.f32.partialorder %v1343, 1e+30
        %vm1408 = vcmp.ge.f32.partialorder %v1345, 1e+30
        %vm1409 = vcmp.ge.f32.partialorder %v1347, 1e+30
        %vm1410 = vcmp.ge.f32.partialorder %v1349, 1e+30
        %vm1411 = vcmp.ge.f32.partialorder %v1351, 1e+30
        %vm1412 = vcmp.ge.f32.partialorder %v1353, 1e+30
        %vm1413 = vcmp.ge.f32.partialorder %v1355, 1e+30
        %vm1414 = vcmp.ge.f32.partialorder %v1357, 1e+30
        %vm1415 = vcmp.ge.f32.partialorder %v1359, 1e+30
        %vm1416 = vcmp.ge.f32.partialorder %v1361, 1e+30
        %vm1417 = vcmp.ge.f32.partialorder %v1363, 1e+30
        %vm1418 = vcmp.ge.f32.partialorder %v1365, 1e+30
        %vm1419 = vcmp.ge.f32.partialorder %v1367, 1e+30
        %v1420 = vmax.f32 %v1317, 1e-16
        %v1421 = vmax.f32 %v1319, 1e-16
        %v1422 = vmax.f32 %v1321, 1e-16
        %v1423 = vmax.f32 %v1323, 1e-16
        %v1424 = vmax.f32 %v1325, 1e-16
        %v1425 = vmax.f32 %v1327, 1e-16
        %v1426 = vmax.f32 %v1329, 1e-16
        %v1427 = vmax.f32 %v1331, 1e-16
        %v1428 = vmax.f32 %v1333, 1e-16
        %v1429 = vmax.f32 %v1335, 1e-16
        %v1430 = vmax.f32 %v1337, 1e-16
        %v1431 = vmax.f32 %v1339, 1e-16
        %v1432 = vmax.f32 %v1341, 1e-16
        %v1433 = vmax.f32 %v1343, 1e-16
        %v1434 = vmax.f32 %v1345, 1e-16
        %v1435 = vmax.f32 %v1347, 1e-16
        %v1436 = vmax.f32 %v1349, 1e-16
        %v1437 = vmax.f32 %v1351, 1e-16
        %v1438 = vmax.f32 %v1353, 1e-16
        %v1439 = vmax.f32 %v1355, 1e-16
        %v1440 = vmax.f32 %v1357, 1e-16
        %v1441 = vmax.f32 %v1359, 1e-16
        %v1442 = vmax.f32 %v1361, 1e-16
        %v1443 = vmax.f32 %v1363, 1e-16
        %v1444 = vmax.f32 %v1365, 1e-16
        %v1445 = vmax.f32 %v1367, 1e-16
        %v1446 = vrcp.pop %v1420
        %v1447 = vrcp.pop %v1421
        %v1448 = vrcp.pop %v1422
        %v1449 = vrcp.pop %v1423
        %v1450 = vrcp.pop %v1424
        %v1451 = vrcp.pop %v1425
        %v1452 = vrcp.pop %v1426
        %v1453 = vrcp.pop %v1427
        %v1454 = vrcp.pop %v1428
        %v1455 = vrcp.pop %v1429
        %v1456 = vrcp.pop %v1430
        %v1457 = vrcp.pop %v1431
        %v1458 = vrcp.pop %v1432
        %v1459 = vrcp.pop %v1433
        %v1460 = vrcp.pop %v1434
        %v1461 = vrcp.pop %v1435
        %v1462 = vrcp.pop %v1436
        %v1463 = vrcp.pop %v1437
        %v1464 = vrcp.pop %v1438
        %v1465 = vrcp.pop %v1439
        %v1466 = vrcp.pop %v1440
        %v1467 = vrcp.pop %v1441
        %v1468 = vrcp.pop %v1442
        %v1469 = vrcp.pop %v1443
        %v1470 = vrcp.pop %v1444
        %v1471 = vrcp.pop %v1445
        %v1472 = vsel %vm1394, 0.0, %v1446
        %v1473 = vsel %vm1395, 0.0, %v1447
        %v1474 = vsel %vm1396, 0.0, %v1448
        %v1475 = vsel %vm1397, 0.0, %v1449
        %v1476 = vsel %vm1398, 0.0, %v1450
        %v1477 = vsel %vm1399, 0.0, %v1451
        %v1478 = vsel %vm1400, 0.0, %v1452
        %v1479 = vsel %vm1401, 0.0, %v1453
        %v1480 = vsel %vm1402, 0.0, %v1454
        %v1481 = vsel %vm1403, 0.0, %v1455
        %v1482 = vsel %vm1404, 0.0, %v1456
        %v1483 = vsel %vm1405, 0.0, %v1457
        %v1484 = vsel %vm1406, 0.0, %v1458
        %v1485 = vsel %vm1407, 0.0, %v1459
        %v1486 = vsel %vm1408, 0.0, %v1460
        %v1487 = vsel %vm1409, 0.0, %v1461
        %v1488 = vsel %vm1410, 0.0, %v1462
        %v1489 = vsel %vm1411, 0.0, %v1463
        %v1490 = vsel %vm1412, 0.0, %v1464
        %v1491 = vsel %vm1413, 0.0, %v1465
        %v1492 = vsel %vm1414, 0.0, %v1466
        %v1493 = vsel %vm1415, 0.0, %v1467
        %v1494 = vsel %vm1416, 0.0, %v1468
        %v1495 = vsel %vm1417, 0.0, %v1469
        %v1496 = vsel %vm1418, 0.0, %v1470
        %v1497 = vsel %vm1419, 0.0, %v1471
        %v1498 = vadd.f32 %v1264, %v1472
        %v1499 = vadd.f32 %v1265, %v1473
        %v1500 = vadd.f32 %v1266, %v1474
        %v1501 = vadd.f32 %v1267, %v1475
        %v1502 = vadd.f32 %v1268, %v1476
        %v1503 = vadd.f32 %v1269, %v1477
        %v1504 = vadd.f32 %v1270, %v1478
        %v1505 = vadd.f32 %v1271, %v1479
        %v1506 = vadd.f32 %v1272, %v1480
        %v1507 = vadd.f32 %v1273, %v1481
        %v1508 = vadd.f32 %v1274, %v1482
        %v1509 = vadd.f32 %v1275, %v1483
        %v1510 = vadd.f32 %v1276, %v1484
        %v1511 = vadd.f32 %v1277, %v1485
        %v1512 = vadd.f32 %v1278, %v1486
        %v1513 = vadd.f32 %v1279, %v1487
        %v1514 = vadd.f32 %v1280, %v1488
        %v1515 = vadd.f32 %v1281, %v1489
        %v1516 = vadd.f32 %v1282, %v1490
        %v1517 = vadd.f32 %v1283, %v1491
        %v1518 = vadd.f32 %v1284, %v1492
        %v1519 = vadd.f32 %v1285, %v1493
        %v1520 = vadd.f32 %v1286, %v1494
        %v1521 = vadd.f32 %v1287, %v1495
        %v1522 = vadd.f32 %v1288, %v1496
        %v1523 = vadd.f32 %v1289, %v1497
        %v1524 = vsel %vm1368, %v1498, %v1264
        %v1525 = vsel %vm1369, %v1499, %v1265
        %v1526 = vsel %vm1370, %v1500, %v1266
        %v1527 = vsel %vm1371, %v1501, %v1267
        %v1528 = vsel %vm1372, %v1502, %v1268
        %v1529 = vsel %vm1373, %v1503, %v1269
        %v1530 = vsel %vm1374, %v1504, %v1270
        %v1531 = vsel %vm1375, %v1505, %v1271
        %v1532 = vsel %vm1376, %v1506, %v1272
        %v1533 = vsel %vm1377, %v1507, %v1273
        %v1534 = vsel %vm1378, %v1508, %v1274
        %v1535 = vsel %vm1379, %v1509, %v1275
        %v1536 = vsel %vm1380, %v1510, %v1276
        %v1537 = vsel %vm1381, %v1511, %v1277
        %v1538 = vsel %vm1382, %v1512, %v1278
        %v1539 = vsel %vm1383, %v1513, %v1279
        %v1540 = vsel %vm1384, %v1514, %v1280
        %v1541 = vsel %vm1385, %v1515, %v1281
        %v1542 = vsel %vm1386, %v1516, %v1282
        %v1543 = vsel %vm1387, %v1517, %v1283
        %v1544 = vsel %vm1388, %v1518, %v1284
        %v1545 = vsel %vm1389, %v1519, %v1285
        %v1546 = vsel %vm1390, %v1520, %v1286
        %v1547 = vsel %vm1391, %v1521, %v1287
        %v1548 = vsel %vm1392, %v1522, %v1288
        %v1549 = vsel %vm1393, %v1523, %v1289
        %v1550 = vsel %vm1368, 1e+30, %v1290
        %v1551 = vsel %vm1369, 1e+30, %v1291
        %v1552 = vsel %vm1370, 1e+30, %v1292
        %v1553 = vsel %vm1371, 1e+30, %v1293
        %v1554 = vsel %vm1372, 1e+30, %v1294
        %v1555 = vsel %vm1373, 1e+30, %v1295
        %v1556 = vsel %vm1374, 1e+30, %v1296
        %v1557 = vsel %vm1375, 1e+30, %v1297
        %v1558 = vsel %vm1376, 1e+30, %v1298
        %v1559 = vsel %vm1377, 1e+30, %v1299
        %v1560 = vsel %vm1378, 1e+30, %v1300
        %v1561 = vsel %vm1379, 1e+30, %v1301
        %v1562 = vsel %vm1380, 1e+30, %v1302
        %v1563 = vsel %vm1381, 1e+30, %v1303
        %v1564 = vsel %vm1382, 1e+30, %v1304
        %v1565 = vsel %vm1383, 1e+30, %v1305
        %v1566 = vsel %vm1384, 1e+30, %v1306
        %v1567 = vsel %vm1385, 1e+30, %v1307
        %v1568 = vsel %vm1386, 1e+30, %v1308
        %v1569 = vsel %vm1387, 1e+30, %v1309
        %v1570 = vsel %vm1388, 1e+30, %v1310
        %v1571 = vsel %vm1389, 1e+30, %v1311
        %v1572 = vsel %vm1390, 1e+30, %v1312
        %v1573 = vsel %vm1391, 1e+30, %v1313
        %v1574 = vsel %vm1392, 1e+30, %v1314
        %v1575 = vsel %vm1393, 1e+30, %v1315
        %1576 = vmin.xlane.f32.xlu0 %v1550
        %v1577 = vpop.xlane.xlu0 %1576
        %1578 = vmin.xlane.f32.xlu0 %v1551
        %v1579 = vpop.xlane.xlu0 %1578
        %1580 = vmin.xlane.f32.xlu0 %v1552
        %v1581 = vpop.xlane.xlu0 %1580
        %1582 = vmin.xlane.f32.xlu0 %v1553
        %v1583 = vpop.xlane.xlu0 %1582
        %1584 = vmin.xlane.f32.xlu0 %v1554
        %v1585 = vpop.xlane.xlu0 %1584
        %1586 = vmin.xlane.f32.xlu0 %v1555
        %v1587 = vpop.xlane.xlu0 %1586
        %1588 = vmin.xlane.f32.xlu0 %v1556
        %v1589 = vpop.xlane.xlu0 %1588
        %1590 = vmin.xlane.f32.xlu0 %v1557
        %v1591 = vpop.xlane.xlu0 %1590
        %1592 = vmin.xlane.f32.xlu0 %v1558
        %v1593 = vpop.xlane.xlu0 %1592
        %1594 = vmin.xlane.f32.xlu0 %v1559
        %v1595 = vpop.xlane.xlu0 %1594
        %1596 = vmin.xlane.f32.xlu0 %v1560
        %v1597 = vpop.xlane.xlu0 %1596
        %1598 = vmin.xlane.f32.xlu0 %v1561
        %v1599 = vpop.xlane.xlu0 %1598
        %1600 = vmin.xlane.f32.xlu0 %v1562
        %v1601 = vpop.xlane.xlu0 %1600
        %1602 = vmin.xlane.f32.xlu0 %v1563
        %v1603 = vpop.xlane.xlu0 %1602
        %1604 = vmin.xlane.f32.xlu0 %v1564
        %v1605 = vpop.xlane.xlu0 %1604
        %1606 = vmin.xlane.f32.xlu0 %v1565
        %v1607 = vpop.xlane.xlu0 %1606
        %1608 = vmin.xlane.f32.xlu0 %v1566
        %v1609 = vpop.xlane.xlu0 %1608
        %1610 = vmin.xlane.f32.xlu0 %v1567
        %v1611 = vpop.xlane.xlu0 %1610
        %1612 = vmin.xlane.f32.xlu0 %v1568
        %v1613 = vpop.xlane.xlu0 %1612
        %1614 = vmin.xlane.f32.xlu0 %v1569
        %v1615 = vpop.xlane.xlu0 %1614
        %1616 = vmin.xlane.f32.xlu0 %v1570
        %v1617 = vpop.xlane.xlu0 %1616
        %1618 = vmin.xlane.f32.xlu0 %v1571
        %v1619 = vpop.xlane.xlu0 %1618
        %1620 = vmin.xlane.f32.xlu0 %v1572
        %v1621 = vpop.xlane.xlu0 %1620
        %1622 = vmin.xlane.f32.xlu0 %v1573
        %v1623 = vpop.xlane.xlu0 %1622
        %1624 = vmin.xlane.f32.xlu0 %v1574
        %v1625 = vpop.xlane.xlu0 %1624
        %1626 = vmin.xlane.f32.xlu0 %v1575
        %v1627 = vpop.xlane.xlu0 %1626
        %vm1628 = vcmp.eq.f32.partialorder %v1550, %v1577
        %vm1629 = vcmp.eq.f32.partialorder %v1551, %v1579
        %vm1630 = vcmp.eq.f32.partialorder %v1552, %v1581
        %vm1631 = vcmp.eq.f32.partialorder %v1553, %v1583
        %vm1632 = vcmp.eq.f32.partialorder %v1554, %v1585
        %vm1633 = vcmp.eq.f32.partialorder %v1555, %v1587
        %vm1634 = vcmp.eq.f32.partialorder %v1556, %v1589
        %vm1635 = vcmp.eq.f32.partialorder %v1557, %v1591
        %vm1636 = vcmp.eq.f32.partialorder %v1558, %v1593
        %vm1637 = vcmp.eq.f32.partialorder %v1559, %v1595
        %vm1638 = vcmp.eq.f32.partialorder %v1560, %v1597
        %vm1639 = vcmp.eq.f32.partialorder %v1561, %v1599
        %vm1640 = vcmp.eq.f32.partialorder %v1562, %v1601
        %vm1641 = vcmp.eq.f32.partialorder %v1563, %v1603
        %vm1642 = vcmp.eq.f32.partialorder %v1564, %v1605
        %vm1643 = vcmp.eq.f32.partialorder %v1565, %v1607
        %vm1644 = vcmp.eq.f32.partialorder %v1566, %v1609
        %vm1645 = vcmp.eq.f32.partialorder %v1567, %v1611
        %vm1646 = vcmp.eq.f32.partialorder %v1568, %v1613
        %vm1647 = vcmp.eq.f32.partialorder %v1569, %v1615
        %vm1648 = vcmp.eq.f32.partialorder %v1570, %v1617
        %vm1649 = vcmp.eq.f32.partialorder %v1571, %v1619
        %vm1650 = vcmp.eq.f32.partialorder %v1572, %v1621
        %vm1651 = vcmp.eq.f32.partialorder %v1573, %v1623
        %vm1652 = vcmp.eq.f32.partialorder %v1574, %v1625
        %vm1653 = vcmp.eq.f32.partialorder %v1575, %v1627
        %vm1654 = vcmp.ge.f32.partialorder %v1577, 1e+30
        %vm1655 = vcmp.ge.f32.partialorder %v1579, 1e+30
        %vm1656 = vcmp.ge.f32.partialorder %v1581, 1e+30
        %vm1657 = vcmp.ge.f32.partialorder %v1583, 1e+30
        %vm1658 = vcmp.ge.f32.partialorder %v1585, 1e+30
        %vm1659 = vcmp.ge.f32.partialorder %v1587, 1e+30
        %vm1660 = vcmp.ge.f32.partialorder %v1589, 1e+30
        %vm1661 = vcmp.ge.f32.partialorder %v1591, 1e+30
        %vm1662 = vcmp.ge.f32.partialorder %v1593, 1e+30
        %vm1663 = vcmp.ge.f32.partialorder %v1595, 1e+30
        %vm1664 = vcmp.ge.f32.partialorder %v1597, 1e+30
        %vm1665 = vcmp.ge.f32.partialorder %v1599, 1e+30
        %vm1666 = vcmp.ge.f32.partialorder %v1601, 1e+30
        %vm1667 = vcmp.ge.f32.partialorder %v1603, 1e+30
        %vm1668 = vcmp.ge.f32.partialorder %v1605, 1e+30
        %vm1669 = vcmp.ge.f32.partialorder %v1607, 1e+30
        %vm1670 = vcmp.ge.f32.partialorder %v1609, 1e+30
        %vm1671 = vcmp.ge.f32.partialorder %v1611, 1e+30
        %vm1672 = vcmp.ge.f32.partialorder %v1613, 1e+30
        %vm1673 = vcmp.ge.f32.partialorder %v1615, 1e+30
        %vm1674 = vcmp.ge.f32.partialorder %v1617, 1e+30
        %vm1675 = vcmp.ge.f32.partialorder %v1619, 1e+30
        %vm1676 = vcmp.ge.f32.partialorder %v1621, 1e+30
        %vm1677 = vcmp.ge.f32.partialorder %v1623, 1e+30
        %vm1678 = vcmp.ge.f32.partialorder %v1625, 1e+30
        %vm1679 = vcmp.ge.f32.partialorder %v1627, 1e+30
        %v1680 = vmax.f32 %v1577, 1e-16
        %v1681 = vmax.f32 %v1579, 1e-16
        %v1682 = vmax.f32 %v1581, 1e-16
        %v1683 = vmax.f32 %v1583, 1e-16
        %v1684 = vmax.f32 %v1585, 1e-16
        %v1685 = vmax.f32 %v1587, 1e-16
        %v1686 = vmax.f32 %v1589, 1e-16
        %v1687 = vmax.f32 %v1591, 1e-16
        %v1688 = vmax.f32 %v1593, 1e-16
        %v1689 = vmax.f32 %v1595, 1e-16
        %v1690 = vmax.f32 %v1597, 1e-16
        %v1691 = vmax.f32 %v1599, 1e-16
        %v1692 = vmax.f32 %v1601, 1e-16
        %v1693 = vmax.f32 %v1603, 1e-16
        %v1694 = vmax.f32 %v1605, 1e-16
        %v1695 = vmax.f32 %v1607, 1e-16
        %v1696 = vmax.f32 %v1609, 1e-16
        %v1697 = vmax.f32 %v1611, 1e-16
        %v1698 = vmax.f32 %v1613, 1e-16
        %v1699 = vmax.f32 %v1615, 1e-16
        %v1700 = vmax.f32 %v1617, 1e-16
        %v1701 = vmax.f32 %v1619, 1e-16
        %v1702 = vmax.f32 %v1621, 1e-16
        %v1703 = vmax.f32 %v1623, 1e-16
        %v1704 = vmax.f32 %v1625, 1e-16
        %v1705 = vmax.f32 %v1627, 1e-16
        %v1706 = vrcp.pop %v1680
        %v1707 = vrcp.pop %v1681
        %v1708 = vrcp.pop %v1682
        %v1709 = vrcp.pop %v1683
        %v1710 = vrcp.pop %v1684
        %v1711 = vrcp.pop %v1685
        %v1712 = vrcp.pop %v1686
        %v1713 = vrcp.pop %v1687
        %v1714 = vrcp.pop %v1688
        %v1715 = vrcp.pop %v1689
        %v1716 = vrcp.pop %v1690
        %v1717 = vrcp.pop %v1691
        %v1718 = vrcp.pop %v1692
        %v1719 = vrcp.pop %v1693
        %v1720 = vrcp.pop %v1694
        %v1721 = vrcp.pop %v1695
        %v1722 = vrcp.pop %v1696
        %v1723 = vrcp.pop %v1697
        %v1724 = vrcp.pop %v1698
        %v1725 = vrcp.pop %v1699
        %v1726 = vrcp.pop %v1700
        %v1727 = vrcp.pop %v1701
        %v1728 = vrcp.pop %v1702
        %v1729 = vrcp.pop %v1703
        %v1730 = vrcp.pop %v1704
        %v1731 = vrcp.pop %v1705
        %v1732 = vsel %vm1654, 0.0, %v1706
        %v1733 = vsel %vm1655, 0.0, %v1707
        %v1734 = vsel %vm1656, 0.0, %v1708
        %v1735 = vsel %vm1657, 0.0, %v1709
        %v1736 = vsel %vm1658, 0.0, %v1710
        %v1737 = vsel %vm1659, 0.0, %v1711
        %v1738 = vsel %vm1660, 0.0, %v1712
        %v1739 = vsel %vm1661, 0.0, %v1713
        %v1740 = vsel %vm1662, 0.0, %v1714
        %v1741 = vsel %vm1663, 0.0, %v1715
        %v1742 = vsel %vm1664, 0.0, %v1716
        %v1743 = vsel %vm1665, 0.0, %v1717
        %v1744 = vsel %vm1666, 0.0, %v1718
        %v1745 = vsel %vm1667, 0.0, %v1719
        %v1746 = vsel %vm1668, 0.0, %v1720
        %v1747 = vsel %vm1669, 0.0, %v1721
        %v1748 = vsel %vm1670, 0.0, %v1722
        %v1749 = vsel %vm1671, 0.0, %v1723
        %v1750 = vsel %vm1672, 0.0, %v1724
        %v1751 = vsel %vm1673, 0.0, %v1725
        %v1752 = vsel %vm1674, 0.0, %v1726
        %v1753 = vsel %vm1675, 0.0, %v1727
        %v1754 = vsel %vm1676, 0.0, %v1728
        %v1755 = vsel %vm1677, 0.0, %v1729
        %v1756 = vsel %vm1678, 0.0, %v1730
        %v1757 = vsel %vm1679, 0.0, %v1731
        %v1758 = vadd.f32 %v1524, %v1732
        %v1759 = vadd.f32 %v1525, %v1733
        %v1760 = vadd.f32 %v1526, %v1734
        %v1761 = vadd.f32 %v1527, %v1735
        %v1762 = vadd.f32 %v1528, %v1736
        %v1763 = vadd.f32 %v1529, %v1737
        %v1764 = vadd.f32 %v1530, %v1738
        %v1765 = vadd.f32 %v1531, %v1739
        %v1766 = vadd.f32 %v1532, %v1740
        %v1767 = vadd.f32 %v1533, %v1741
        %v1768 = vadd.f32 %v1534, %v1742
        %v1769 = vadd.f32 %v1535, %v1743
        %v1770 = vadd.f32 %v1536, %v1744
        %v1771 = vadd.f32 %v1537, %v1745
        %v1772 = vadd.f32 %v1538, %v1746
        %v1773 = vadd.f32 %v1539, %v1747
        %v1774 = vadd.f32 %v1540, %v1748
        %v1775 = vadd.f32 %v1541, %v1749
        %v1776 = vadd.f32 %v1542, %v1750
        %v1777 = vadd.f32 %v1543, %v1751
        %v1778 = vadd.f32 %v1544, %v1752
        %v1779 = vadd.f32 %v1545, %v1753
        %v1780 = vadd.f32 %v1546, %v1754
        %v1781 = vadd.f32 %v1547, %v1755
        %v1782 = vadd.f32 %v1548, %v1756
        %v1783 = vadd.f32 %v1549, %v1757
        %v1784 = vsel %vm1628, %v1758, %v1524
        %v1785 = vsel %vm1629, %v1759, %v1525
        %v1786 = vsel %vm1630, %v1760, %v1526
        %v1787 = vsel %vm1631, %v1761, %v1527
        %v1788 = vsel %vm1632, %v1762, %v1528
        %v1789 = vsel %vm1633, %v1763, %v1529
        %v1790 = vsel %vm1634, %v1764, %v1530
        %v1791 = vsel %vm1635, %v1765, %v1531
        %v1792 = vsel %vm1636, %v1766, %v1532
        %v1793 = vsel %vm1637, %v1767, %v1533
        %v1794 = vsel %vm1638, %v1768, %v1534
        %v1795 = vsel %vm1639, %v1769, %v1535
        %v1796 = vsel %vm1640, %v1770, %v1536
        %v1797 = vsel %vm1641, %v1771, %v1537
        %v1798 = vsel %vm1642, %v1772, %v1538
        %v1799 = vsel %vm1643, %v1773, %v1539
        %v1800 = vsel %vm1644, %v1774, %v1540
        %v1801 = vsel %vm1645, %v1775, %v1541
        %v1802 = vsel %vm1646, %v1776, %v1542
        %v1803 = vsel %vm1647, %v1777, %v1543
        %v1804 = vsel %vm1648, %v1778, %v1544
        %v1805 = vsel %vm1649, %v1779, %v1545
        %v1806 = vsel %vm1650, %v1780, %v1546
        %v1807 = vsel %vm1651, %v1781, %v1547
        %v1808 = vsel %vm1652, %v1782, %v1548
        %v1809 = vsel %vm1653, %v1783, %v1549
        %1810 = vadd.xlane.f32.xlu0 %v1784
        %v1811 = vpop.xlane.xlu0 %1810
        %1812 = vadd.xlane.f32.xlu0 %v1785
        %v1813 = vpop.xlane.xlu0 %1812
        %1814 = vadd.xlane.f32.xlu0 %v1786
        %v1815 = vpop.xlane.xlu0 %1814
        %1816 = vadd.xlane.f32.xlu0 %v1787
        %v1817 = vpop.xlane.xlu0 %1816
        %1818 = vadd.xlane.f32.xlu0 %v1788
        %v1819 = vpop.xlane.xlu0 %1818
        %1820 = vadd.xlane.f32.xlu0 %v1789
        %v1821 = vpop.xlane.xlu0 %1820
        %1822 = vadd.xlane.f32.xlu0 %v1790
        %v1823 = vpop.xlane.xlu0 %1822
        %1824 = vadd.xlane.f32.xlu0 %v1791
        %v1825 = vpop.xlane.xlu0 %1824
        %1826 = vadd.xlane.f32.xlu0 %v1792
        %v1827 = vpop.xlane.xlu0 %1826
        %1828 = vadd.xlane.f32.xlu0 %v1793
        %v1829 = vpop.xlane.xlu0 %1828
        %1830 = vadd.xlane.f32.xlu0 %v1794
        %v1831 = vpop.xlane.xlu0 %1830
        %1832 = vadd.xlane.f32.xlu0 %v1795
        %v1833 = vpop.xlane.xlu0 %1832
        %1834 = vadd.xlane.f32.xlu0 %v1796
        %v1835 = vpop.xlane.xlu0 %1834
        %1836 = vadd.xlane.f32.xlu0 %v1797
        %v1837 = vpop.xlane.xlu0 %1836
        %1838 = vadd.xlane.f32.xlu0 %v1798
        %v1839 = vpop.xlane.xlu0 %1838
        %1840 = vadd.xlane.f32.xlu0 %v1799
        %v1841 = vpop.xlane.xlu0 %1840
        %1842 = vadd.xlane.f32.xlu0 %v1800
        %v1843 = vpop.xlane.xlu0 %1842
        %1844 = vadd.xlane.f32.xlu0 %v1801
        %v1845 = vpop.xlane.xlu0 %1844
        %1846 = vadd.xlane.f32.xlu0 %v1802
        %v1847 = vpop.xlane.xlu0 %1846
        %1848 = vadd.xlane.f32.xlu0 %v1803
        %v1849 = vpop.xlane.xlu0 %1848
        %1850 = vadd.xlane.f32.xlu0 %v1804
        %v1851 = vpop.xlane.xlu0 %1850
        %1852 = vadd.xlane.f32.xlu0 %v1805
        %v1853 = vpop.xlane.xlu0 %1852
        %1854 = vadd.xlane.f32.xlu0 %v1806
        %v1855 = vpop.xlane.xlu0 %1854
        %1856 = vadd.xlane.f32.xlu0 %v1807
        %v1857 = vpop.xlane.xlu0 %1856
        %1858 = vadd.xlane.f32.xlu0 %v1808
        %v1859 = vpop.xlane.xlu0 %1858
        %1860 = vadd.xlane.f32.xlu0 %v1809
        %v1861 = vpop.xlane.xlu0 %1860
        %v1862 = vpack.c.bf16 %v1785, %v1784
        %v1863 = vpack.c.bf16 %v1787, %v1786
        %v1864 = vpack.c.bf16 %v1789, %v1788
        %v1865 = vpack.c.bf16 %v1791, %v1790
        %v1866 = vpack.c.bf16 %v1793, %v1792
        %v1867 = vpack.c.bf16 %v1795, %v1794
        %v1868 = vpack.c.bf16 %v1797, %v1796
        %v1869 = vpack.c.bf16 %v1799, %v1798
        %v1870 = vpack.c.bf16 %v1801, %v1800
        %v1871 = vpack.c.bf16 %v1803, %v1802
        %v1872 = vpack.c.bf16 %v1805, %v1804
        %v1873 = vpack.c.bf16 %v1807, %v1806
        %v1874 = vpack.c.bf16 %v1809, %v1808
        %v1875 = vld [vmem:[%s5] sm:$0xf]
        %v1876 = vld [vmem:[%s5 + $0x4] sm:$0xf]
        %v1877 = vld [vmem:[%s5 + $0x8] sm:$0xf]
        %v1878 = vld [vmem:[%s5 + $0xc] sm:$0xf]
        %v1879 = vld [vmem:[%s5 + $0x10] sm:$0xf]
        %v1880 = vld [vmem:[%s5 + $0x14] sm:$0xf]
        %v1881 = vld [vmem:[%s5 + $0x18] sm:$0xf]
        %v1882 = vld [vmem:[%s5 + $0x1c] sm:$0xf]
        %v1883 = vld [vmem:[%s5 + $0x20] sm:$0xf]
        %v1884 = vld [vmem:[%s5 + $0x24] sm:$0xf]
        %v1885 = vld [vmem:[%s5 + $0x28] sm:$0xf]
        %v1886 = vld [vmem:[%s5 + $0x2c] sm:$0xf]
        %v1887 = vld [vmem:[%s5 + $0x30] sm:$0xf]
        %v1888 = vld [vmem:[%s5 + $0x34] sm:$0xf]
        %v1889 = vld [vmem:[%s5 + $0x38] sm:$0xf]
        %v1890 = vld [vmem:[%s5 + $0x3c] sm:$0xf]
        %v1907 = vunpack.c.l.b16 %v1875
        %v1908 = vunpack.c.l.b16 %v1876
        %v1909 = vunpack.c.l.b16 %v1877
        %v1910 = vunpack.c.l.b16 %v1878
        %v1911 = vunpack.c.l.b16 %v1879
        %v1912 = vunpack.c.l.b16 %v1880
        %v1913 = vunpack.c.l.b16 %v1881
        %v1914 = vunpack.c.l.b16 %v1882
        %v1915 = vunpack.c.l.b16 %v1883
        %v1916 = vunpack.c.l.b16 %v1884
        %v1917 = vunpack.c.l.b16 %v1885
        %v1918 = vunpack.c.l.b16 %v1886
        %v1919 = vunpack.c.l.b16 %v1887
        %v1920 = vunpack.c.l.b16 %v1888
        %v1921 = vunpack.c.l.b16 %v1889
        %v1922 = vunpack.c.l.b16 %v1890
        %v1923 = vpack.c.b16 %v1908, %v1907
        %v1924 = vpack.c.b16 %v1910, %v1909
        %v1925 = vpack.c.b16 %v1912, %v1911
        %v1926 = vpack.c.b16 %v1914, %v1913
        %v1927 = vpack.c.b16 %v1916, %v1915
        %v1928 = vpack.c.b16 %v1918, %v1917
        %v1929 = vpack.c.b16 %v1920, %v1919
        %v1930 = vpack.c.b16 %v1922, %v1921
        %1939 = vmatprep.subr.bf16.mxu0 0
        %1940 = vmatpush1.bf16.msra.mxu0 %v1923
        %1941 = vmatprep.subr.bf16.mxu0 0
        %1942 = vmatpush1.bf16.msra.mxu0 %v1924
        %1943 = vmatprep.subr.bf16.mxu0 0
        %1944 = vmatpush1.bf16.msra.mxu0 %v1925
        %1945 = vmatprep.subr.bf16.mxu0 0
        %1946 = vmatpush1.bf16.msra.mxu0 %v1926
        %1947 = vmatprep.subr.bf16.mxu0 0
        %1948 = vmatpush1.bf16.msra.mxu0 %v1927
        %1949 = vmatprep.subr.bf16.mxu0 0
        %1950 = vmatpush1.bf16.msra.mxu0 %v1928
        %1951 = vmatprep.subr.bf16.mxu0 0
        %1952 = vmatpush1.bf16.msra.mxu0 %v1929
        %1953 = vmatprep.subr.bf16.mxu0 0
        %1954 = vmatpush1.bf16.msra.mxu0 %v1930
        %1955 = vmatprep.subr.bf16.mxu0 0
        %1956 = vmatpush1.bf16.msra.mxu0 0
        %1957 = vmatprep.subr.bf16.mxu0 0
        %1958 = vmatpush1.bf16.msra.mxu0 0
        %1959 = vmatprep.subr.bf16.mxu0 0
        %1960 = vmatpush1.bf16.msra.mxu0 0
        %1961 = vmatprep.subr.bf16.mxu0 0
        %1962 = vmatpush1.bf16.msra.mxu0 0
        %1963 = vmatprep.subr.bf16.mxu0 0
        %1964 = vmatpush1.bf16.msra.mxu0 0
        %1965 = vmatprep.subr.bf16.mxu0 0
        %1966 = vmatpush1.bf16.msra.mxu0 0
        %1967 = vmatprep.subr.bf16.mxu0 0
        %1968 = vmatpush1.bf16.msra.mxu0 0
        %1969 = vmatprep.subr.bf16.mxu0 0
        %1970 = vmatpush1.bf16.msra.mxu0 0
        %1971 = vmatprep.mubr.bf16.mxu0 0
        %1972 = vmatmul.mubr.bf16.gmra.mrb[0].mxu0 %v1862
        %v1973 = vpop.f32.mrb[0].mxu0
        %v1974 = vadd.f32 0.0, %v1973
        %v1975 = vpop.f32.mrb[0].mxu0
        %v1976 = vpop.f32.mrb[0].mxu0
        %v1977 = vadd.f32 0.0, %v1976
        %v1978 = vpop.f32.mrb[0].mxu0
        %1979 = vmatprep.mubr.bf16.mxu0 0
        %1980 = vmatmul.mubr.bf16.gmra.mrb[0].mxu0 %v1863
        %v1981 = vpop.f32.mrb[0].mxu0
        %v1982 = vadd.f32 0.0, %v1981
        %v1983 = vpop.f32.mrb[0].mxu0
        %v1984 = vpop.f32.mrb[0].mxu0
        %v1985 = vadd.f32 0.0, %v1984
        %v1986 = vpop.f32.mrb[0].mxu0
        %1987 = vmatprep.mubr.bf16.mxu0 0
        %1988 = vmatmul.mubr.bf16.gmra.mrb[0].mxu0 %v1864
        %v1989 = vpop.f32.mrb[0].mxu0
        %v1990 = vadd.f32 0.0, %v1989
        %v1991 = vpop.f32.mrb[0].mxu0
        %v1992 = vpop.f32.mrb[0].mxu0
        %v1993 = vadd.f32 0.0, %v1992
        %v1994 = vpop.f32.mrb[0].mxu0
        %1995 = vmatprep.mubr.bf16.mxu0 0
        %1996 = vmatmul.mubr.bf16.gmra.mrb[0].mxu0 %v1865
        %v1997 = vpop.f32.mrb[0].mxu0
        %v1998 = vadd.f32 0.0, %v1997
        %v1999 = vpop.f32.mrb[0].mxu0
        %v2000 = vpop.f32.mrb[0].mxu0
        %v2001 = vadd.f32 0.0, %v2000
        %v2002 = vpop.f32.mrb[0].mxu0
        %2003 = vmatprep.mubr.bf16.mxu0 0
        %2004 = vmatmul.mubr.bf16.gmra.mrb[0].mxu0 %v1866
        %v2005 = vpop.f32.mrb[0].mxu0
        %v2006 = vadd.f32 0.0, %v2005
        %v2007 = vpop.f32.mrb[0].mxu0
        %v2008 = vpop.f32.mrb[0].mxu0
        %v2009 = vadd.f32 0.0, %v2008
        %v2010 = vpop.f32.mrb[0].mxu0
        %2011 = vmatprep.mubr.bf16.mxu0 0
        %2012 = vmatmul.mubr.bf16.gmra.mrb[0].mxu0 %v1867
        %v2013 = vpop.f32.mrb[0].mxu0
        %v2014 = vadd.f32 0.0, %v2013
        %v2015 = vpop.f32.mrb[0].mxu0
        %v2016 = vpop.f32.mrb[0].mxu0
        %v2017 = vadd.f32 0.0, %v2016
        %v2018 = vpop.f32.mrb[0].mxu0
        %2019 = vmatprep.mubr.bf16.mxu0 0
        %2020 = vmatmul.mubr.bf16.gmra.mrb[0].mxu0 %v1868
        %v2021 = vpop.f32.mrb[0].mxu0
        %v2022 = vadd.f32 0.0, %v2021
        %v2023 = vpop.f32.mrb[0].mxu0
        %v2024 = vpop.f32.mrb[0].mxu0
        %v2025 = vadd.f32 0.0, %v2024
        %v2026 = vpop.f32.mrb[0].mxu0
        %2027 = vmatprep.mubr.bf16.mxu0 0
        %2028 = vmatmul.mubr.bf16.gmra.mrb[0].mxu0 %v1869
        %v2029 = vpop.f32.mrb[0].mxu0
        %v2030 = vadd.f32 0.0, %v2029
        %v2031 = vpop.f32.mrb[0].mxu0
        %v2032 = vpop.f32.mrb[0].mxu0
        %v2033 = vadd.f32 0.0, %v2032
        %v2034 = vpop.f32.mrb[0].mxu0
        %2035 = vmatprep.mubr.bf16.mxu0 0
        %2036 = vmatmul.mubr.bf16.gmra.mrb[0].mxu0 %v1870
        %v2037 = vpop.f32.mrb[0].mxu0
        %v2038 = vadd.f32 0.0, %v2037
        %v2039 = vpop.f32.mrb[0].mxu0
        %v2040 = vpop.f32.mrb[0].mxu0
        %v2041 = vadd.f32 0.0, %v2040
        %v2042 = vpop.f32.mrb[0].mxu0
        %2043 = vmatprep.mubr.bf16.mxu0 0
        %2044 = vmatmul.mubr.bf16.gmra.mrb[0].mxu0 %v1871
        %v2045 = vpop.f32.mrb[0].mxu0
        %v2046 = vadd.f32 0.0, %v2045
        %v2047 = vpop.f32.mrb[0].mxu0
        %v2048 = vpop.f32.mrb[0].mxu0
        %v2049 = vadd.f32 0.0, %v2048
        %v2050 = vpop.f32.mrb[0].mxu0
        %2051 = vmatprep.mubr.bf16.mxu0 0
        %2052 = vmatmul.mubr.bf16.gmra.mrb[0].mxu0 %v1872
        %v2053 = vpop.f32.mrb[0].mxu0
        %v2054 = vadd.f32 0.0, %v2053
        %v2055 = vpop.f32.mrb[0].mxu0
        %v2056 = vpop.f32.mrb[0].mxu0
        %v2057 = vadd.f32 0.0, %v2056
        %v2058 = vpop.f32.mrb[0].mxu0
        %2059 = vmatprep.mubr.bf16.mxu0 0
        %2060 = vmatmul.mubr.bf16.gmra.mrb[0].mxu0 %v1873
        %v2061 = vpop.f32.mrb[0].mxu0
        %v2062 = vadd.f32 0.0, %v2061
        %v2063 = vpop.f32.mrb[0].mxu0
        %v2064 = vpop.f32.mrb[0].mxu0
        %v2065 = vadd.f32 0.0, %v2064
        %v2066 = vpop.f32.mrb[0].mxu0
        %2067 = vmatprep.mubr.bf16.mxu0 0
        %2068 = vmatmul.mubr.bf16.gmra.mrb[0].mxu0 %v1874
        %v2069 = vpop.f32.mrb[0].mxu0
        %v2070 = vadd.f32 0.0, %v2069
        %v2071 = vpop.f32.mrb[0].mxu0
        %v2072 = vpop.f32.mrb[0].mxu0
        %v2073 = vadd.f32 0.0, %v2072
        %v2074 = vpop.f32.mrb[0].mxu0
        %2075 = vdwg.mxu0
        %v2076 = vmax.f32 %v1811, 1e-16
        %v2077 = vmax.f32 %v1813, 1e-16
        %v2078 = vmax.f32 %v1815, 1e-16
        %v2079 = vmax.f32 %v1817, 1e-16
        %v2080 = vmax.f32 %v1819, 1e-16
        %v2081 = vmax.f32 %v1821, 1e-16
        %v2082 = vmax.f32 %v1823, 1e-16
        %v2083 = vmax.f32 %v1825, 1e-16
        %v2084 = vmax.f32 %v1827, 1e-16
        %v2085 = vmax.f32 %v1829, 1e-16
        %v2086 = vmax.f32 %v1831, 1e-16
        %v2087 = vmax.f32 %v1833, 1e-16
        %v2088 = vmax.f32 %v1835, 1e-16
        %v2089 = vmax.f32 %v1837, 1e-16
        %v2090 = vmax.f32 %v1839, 1e-16
        %v2091 = vmax.f32 %v1841, 1e-16
        %v2092 = vmax.f32 %v1843, 1e-16
        %v2093 = vmax.f32 %v1845, 1e-16
        %v2094 = vmax.f32 %v1847, 1e-16
        %v2095 = vmax.f32 %v1849, 1e-16
        %v2096 = vmax.f32 %v1851, 1e-16
        %v2097 = vmax.f32 %v1853, 1e-16
        %v2098 = vmax.f32 %v1855, 1e-16
        %v2099 = vmax.f32 %v1857, 1e-16
        %v2100 = vmax.f32 %v1859, 1e-16
        %v2101 = vmax.f32 %v1861, 1e-16
        %v2102 = vrcp.pop %v2076
        %v2103 = vrcp.pop %v2077
        %v2104 = vrcp.pop %v2078
        %v2105 = vrcp.pop %v2079
        %v2106 = vrcp.pop %v2080
        %v2107 = vrcp.pop %v2081
        %v2108 = vrcp.pop %v2082
        %v2109 = vrcp.pop %v2083
        %v2110 = vrcp.pop %v2084
        %v2111 = vrcp.pop %v2085
        %v2112 = vrcp.pop %v2086
        %v2113 = vrcp.pop %v2087
        %v2114 = vrcp.pop %v2088
        %v2115 = vrcp.pop %v2089
        %v2116 = vrcp.pop %v2090
        %v2117 = vrcp.pop %v2091
        %v2118 = vrcp.pop %v2092
        %v2119 = vrcp.pop %v2093
        %v2120 = vrcp.pop %v2094
        %v2121 = vrcp.pop %v2095
        %v2122 = vrcp.pop %v2096
        %v2123 = vrcp.pop %v2097
        %v2124 = vrcp.pop %v2098
        %v2125 = vrcp.pop %v2099
        %v2126 = vrcp.pop %v2100
        %v2127 = vrcp.pop %v2101
        %v2128 = vmul.f32 %v1974, %v2102
        %v2129 = vmul.f32 %v1977, %v2103
        %v2130 = vmul.f32 %v1982, %v2104
        %v2131 = vmul.f32 %v1985, %v2105
        %v2132 = vmul.f32 %v1990, %v2106
        %v2133 = vmul.f32 %v1993, %v2107
        %v2134 = vmul.f32 %v1998, %v2108
        %v2135 = vmul.f32 %v2001, %v2109
        %v2136 = vmul.f32 %v2006, %v2110
        %v2137 = vmul.f32 %v2009, %v2111
        %v2138 = vmul.f32 %v2014, %v2112
        %v2139 = vmul.f32 %v2017, %v2113
        %v2140 = vmul.f32 %v2022, %v2114
        %v2141 = vmul.f32 %v2025, %v2115
        %v2142 = vmul.f32 %v2030, %v2116
        %v2143 = vmul.f32 %v2033, %v2117
        %v2144 = vmul.f32 %v2038, %v2118
        %v2145 = vmul.f32 %v2041, %v2119
        %v2146 = vmul.f32 %v2046, %v2120
        %v2147 = vmul.f32 %v2049, %v2121
        %v2148 = vmul.f32 %v2054, %v2122
        %v2149 = vmul.f32 %v2057, %v2123
        %v2150 = vmul.f32 %v2062, %v2124
        %v2151 = vmul.f32 %v2065, %v2125
        %v2152 = vmul.f32 %v2070, %v2126
        %v2153 = vmul.f32 %v2073, %v2127
        %v2154 = vld [vmem:[%s375] sm:$0xf]
        %v2155 = vld [vmem:[%s375 + $0x4] sm:$0xf]
        %v2156 = vld [vmem:[%s375 + $0x8] sm:$0xf]
        %v2157 = vld [vmem:[%s375 + $0xc] sm:$0xf]
        %v2158 = vld [vmem:[%s375 + $0x10] sm:$0xf]
        %v2159 = vld [vmem:[%s375 + $0x14] sm:$0xf]
        %v2160 = vld [vmem:[%s375 + $0x18] sm:$0xf]
        %v2161 = vld [vmem:[%s375 + $0x1c] sm:$0xf]
        %v2162 = vld [vmem:[%s375 + $0x20] sm:$0xf]
        %v2163 = vld [vmem:[%s375 + $0x24] sm:$0xf]
        %v2164 = vld [vmem:[%s375 + $0x28] sm:$0xf]
        %v2165 = vld [vmem:[%s375 + $0x2c] sm:$0xf]
        %v2166 = vld [vmem:[%s375 + $0x30] sm:$0xf]
        %v2167 = vld [vmem:[%s375 + $0x34] sm:$0xf]
        %v2168 = vld [vmem:[%s375 + $0x38] sm:$0xf]
        %v2169 = vld [vmem:[%s375 + $0x3c] sm:$0xf]
        %v2170 = vld [vmem:[%s375 + $0x40] sm:$0xf]
        %v2171 = vld [vmem:[%s375 + $0x44] sm:$0xf]
        %v2172 = vld [vmem:[%s375 + $0x48] sm:$0xf]
        %v2173 = vld [vmem:[%s375 + $0x4c] sm:$0xf]
        %v2174 = vld [vmem:[%s375 + $0x50] sm:$0xf]
        %v2175 = vld [vmem:[%s375 + $0x54] sm:$0xf]
        %v2176 = vld [vmem:[%s375 + $0x58] sm:$0xf]
        %v2177 = vld [vmem:[%s375 + $0x5c] sm:$0xf]
        %v2178 = vld [vmem:[%s375 + $0x60] sm:$0xf]
        %v2179 = vld [vmem:[%s375 + $0x64] sm:$0xf]
        %v2180 = vunpack.c.l.bf16 %v2154
        %v2181 = vunpack.c.l.bf16 %v2155
        %v2182 = vunpack.c.l.bf16 %v2156
        %v2183 = vunpack.c.l.bf16 %v2157
        %v2184 = vunpack.c.l.bf16 %v2158
        %v2185 = vunpack.c.l.bf16 %v2159
        %v2186 = vunpack.c.l.bf16 %v2160
        %v2187 = vunpack.c.l.bf16 %v2161
        %v2188 = vunpack.c.l.bf16 %v2162
        %v2189 = vunpack.c.l.bf16 %v2163
        %v2190 = vunpack.c.l.bf16 %v2164
        %v2191 = vunpack.c.l.bf16 %v2165
        %v2192 = vunpack.c.l.bf16 %v2166
        %v2193 = vunpack.c.l.bf16 %v2167
        %v2194 = vunpack.c.l.bf16 %v2168
        %v2195 = vunpack.c.l.bf16 %v2169
        %v2196 = vunpack.c.l.bf16 %v2170
        %v2197 = vunpack.c.l.bf16 %v2171
        %v2198 = vunpack.c.l.bf16 %v2172
        %v2199 = vunpack.c.l.bf16 %v2173
        %v2200 = vunpack.c.l.bf16 %v2174
        %v2201 = vunpack.c.l.bf16 %v2175
        %v2202 = vunpack.c.l.bf16 %v2176
        %v2203 = vunpack.c.l.bf16 %v2177
        %v2204 = vunpack.c.l.bf16 %v2178
        %v2205 = vunpack.c.l.bf16 %v2179
        %v2206 = vadd.f32 %v2128, %v2180
        %v2207 = vadd.f32 %v2129, %v2181
        %v2208 = vadd.f32 %v2130, %v2182
        %v2209 = vadd.f32 %v2131, %v2183
        %v2210 = vadd.f32 %v2132, %v2184
        %v2211 = vadd.f32 %v2133, %v2185
        %v2212 = vadd.f32 %v2134, %v2186
        %v2213 = vadd.f32 %v2135, %v2187
        %v2214 = vadd.f32 %v2136, %v2188
        %v2215 = vadd.f32 %v2137, %v2189
        %v2216 = vadd.f32 %v2138, %v2190
        %v2217 = vadd.f32 %v2139, %v2191
        %v2218 = vadd.f32 %v2140, %v2192
        %v2219 = vadd.f32 %v2141, %v2193
        %v2220 = vadd.f32 %v2142, %v2194
        %v2221 = vadd.f32 %v2143, %v2195
        %v2222 = vadd.f32 %v2144, %v2196
        %v2223 = vadd.f32 %v2145, %v2197
        %v2224 = vadd.f32 %v2146, %v2198
        %v2225 = vadd.f32 %v2147, %v2199
        %v2226 = vadd.f32 %v2148, %v2200
        %v2227 = vadd.f32 %v2149, %v2201
        %v2228 = vadd.f32 %v2150, %v2202
        %v2229 = vadd.f32 %v2151, %v2203
        %v2230 = vadd.f32 %v2152, %v2204
        %v2231 = vadd.f32 %v2153, %v2205
        %v2232 = vpack.c.bf16 %v2207, %v2206
        %v2233 = vpack.c.bf16 %v2209, %v2208
        %v2234 = vpack.c.bf16 %v2211, %v2210
        %v2235 = vpack.c.bf16 %v2213, %v2212
        %v2236 = vpack.c.bf16 %v2215, %v2214
        %v2237 = vpack.c.bf16 %v2217, %v2216
        %v2238 = vpack.c.bf16 %v2219, %v2218
        %v2239 = vpack.c.bf16 %v2221, %v2220
        %v2240 = vpack.c.bf16 %v2223, %v2222
        %v2241 = vpack.c.bf16 %v2225, %v2224
        %v2242 = vpack.c.bf16 %v2227, %v2226
        %v2243 = vpack.c.bf16 %v2229, %v2228
        %v2244 = vpack.c.bf16 %v2231, %v2230
        %v2245 = vld [vmem:[%s7] sm:$0xf]
        %v2246 = vld [vmem:[%s7 + $0x4] sm:$0xf]
        %v2247 = vld [vmem:[%s7 + $0x8] sm:$0xf]
        %v2248 = vld [vmem:[%s7 + $0xc] sm:$0xf]
        %v2249 = vld [vmem:[%s7 + $0x10] sm:$0xf]
        %v2250 = vld [vmem:[%s7 + $0x14] sm:$0xf]
        %v2251 = vld [vmem:[%s7 + $0x18] sm:$0xf]
        %v2252 = vld [vmem:[%s7 + $0x1c] sm:$0xf]
        %v2253 = vld [vmem:[%s7 + $0x20] sm:$0xf]
        %v2254 = vld [vmem:[%s7 + $0x24] sm:$0xf]
        %v2255 = vld [vmem:[%s7 + $0x28] sm:$0xf]
        %v2256 = vld [vmem:[%s7 + $0x2c] sm:$0xf]
        %v2257 = vld [vmem:[%s7 + $0x30] sm:$0xf]
        %v2258 = vld [vmem:[%s7 + $0x34] sm:$0xf]
        %v2259 = vld [vmem:[%s7 + $0x38] sm:$0xf]
        %v2260 = vld [vmem:[%s7 + $0x3c] sm:$0xf]
        %v2261 = vld [vmem:[%s8] sm:$0x1]
        %v2263 = vlaneseq
        %v2264 = vshrl.u32 %v2263, 7
        %v2265 = vsub.s32 0, %v2264
        %v2266 = vrot.slane %v2261, %v2265
        %v2284 = vunpack.c.l.b16 %v2245
        %v2285 = vunpack.c.l.b16 %v2246
        %v2286 = vunpack.c.l.b16 %v2247
        %v2287 = vunpack.c.l.b16 %v2248
        %v2288 = vunpack.c.l.b16 %v2249
        %v2289 = vunpack.c.l.b16 %v2250
        %v2290 = vunpack.c.l.b16 %v2251
        %v2291 = vunpack.c.l.b16 %v2252
        %v2292 = vunpack.c.l.b16 %v2253
        %v2293 = vunpack.c.l.b16 %v2254
        %v2294 = vunpack.c.l.b16 %v2255
        %v2295 = vunpack.c.l.b16 %v2256
        %v2296 = vunpack.c.l.b16 %v2257
        %v2297 = vunpack.c.l.b16 %v2258
        %v2298 = vunpack.c.l.b16 %v2259
        %v2299 = vunpack.c.l.b16 %v2260
        %v2300 = vpack.c.b16 %v2285, %v2284
        %v2301 = vpack.c.b16 %v2287, %v2286
        %v2302 = vpack.c.b16 %v2289, %v2288
        %v2303 = vpack.c.b16 %v2291, %v2290
        %v2304 = vpack.c.b16 %v2293, %v2292
        %v2305 = vpack.c.b16 %v2295, %v2294
        %v2306 = vpack.c.b16 %v2297, %v2296
        %v2307 = vpack.c.b16 %v2299, %v2298
        %2316 = vmatprep.subr.bf16.mxu0 0
        %2317 = vmatpush1.bf16.msra.mxu0 %v2300
        %2318 = vmatprep.subr.bf16.mxu0 0
        %2319 = vmatpush1.bf16.msra.mxu0 %v2301
        %2320 = vmatprep.subr.bf16.mxu0 0
        %2321 = vmatpush1.bf16.msra.mxu0 %v2302
        %2322 = vmatprep.subr.bf16.mxu0 0
        %2323 = vmatpush1.bf16.msra.mxu0 %v2303
        %2324 = vmatprep.subr.bf16.mxu0 0
        %2325 = vmatpush1.bf16.msra.mxu0 %v2304
        %2326 = vmatprep.subr.bf16.mxu0 0
        %2327 = vmatpush1.bf16.msra.mxu0 %v2305
        %2328 = vmatprep.subr.bf16.mxu0 0
        %2329 = vmatpush1.bf16.msra.mxu0 %v2306
        %2330 = vmatprep.subr.bf16.mxu0 0
        %2331 = vmatpush1.bf16.msra.mxu0 %v2307
        %2332 = vmatprep.subr.bf16.mxu0 0
        %2333 = vmatpush1.bf16.msra.mxu0 0
        %2334 = vmatprep.subr.bf16.mxu0 0
        %2335 = vmatpush1.bf16.msra.mxu0 0
        %2336 = vmatprep.subr.bf16.mxu0 0
        %2337 = vmatpush1.bf16.msra.mxu0 0
        %2338 = vmatprep.subr.bf16.mxu0 0
        %2339 = vmatpush1.bf16.msra.mxu0 0
        %2340 = vmatprep.subr.bf16.mxu0 0
        %2341 = vmatpush1.bf16.msra.mxu0 0
        %2342 = vmatprep.subr.bf16.mxu0 0
        %2343 = vmatpush1.bf16.msra.mxu0 0
        %2344 = vmatprep.subr.bf16.mxu0 0
        %2345 = vmatpush1.bf16.msra.mxu0 0
        %2346 = vmatprep.subr.bf16.mxu0 0
        %2347 = vmatpush1.bf16.msra.mxu0 0
        %2348 = vmatprep.mubr.bf16.mxu0 0
        %2349 = vmatmul.mubr.bf16.gmra.mrb[0].mxu0 %v2232
        %v2350 = vpop.f32.mrb[0].mxu0
        %v2351 = vadd.f32 %v2266, %v2350
        %v2352 = vpop.f32.mrb[0].mxu0
        %v2353 = vpop.f32.mrb[0].mxu0
        %v2354 = vadd.f32 %v2266, %v2353
        %v2355 = vpop.f32.mrb[0].mxu0
        %2356 = vmatprep.mubr.bf16.mxu0 0
        %2357 = vmatmul.mubr.bf16.gmra.mrb[0].mxu0 %v2233
        %v2358 = vpop.f32.mrb[0].mxu0
        %v2359 = vadd.f32 %v2266, %v2358
        %v2360 = vpop.f32.mrb[0].mxu0
        %v2361 = vpop.f32.mrb[0].mxu0
        %v2362 = vadd.f32 %v2266, %v2361
        %v2363 = vpop.f32.mrb[0].mxu0
        %2364 = vmatprep.mubr.bf16.mxu0 0
        %2365 = vmatmul.mubr.bf16.gmra.mrb[0].mxu0 %v2234
        %v2366 = vpop.f32.mrb[0].mxu0
        %v2367 = vadd.f32 %v2266, %v2366
        %v2368 = vpop.f32.mrb[0].mxu0
        %v2369 = vpop.f32.mrb[0].mxu0
        %v2370 = vadd.f32 %v2266, %v2369
        %v2371 = vpop.f32.mrb[0].mxu0
        %2372 = vmatprep.mubr.bf16.mxu0 0
        %2373 = vmatmul.mubr.bf16.gmra.mrb[0].mxu0 %v2235
        %v2374 = vpop.f32.mrb[0].mxu0
        %v2375 = vadd.f32 %v2266, %v2374
        %v2376 = vpop.f32.mrb[0].mxu0
        %v2377 = vpop.f32.mrb[0].mxu0
        %v2378 = vadd.f32 %v2266, %v2377
        %v2379 = vpop.f32.mrb[0].mxu0
        %2380 = vmatprep.mubr.bf16.mxu0 0
        %2381 = vmatmul.mubr.bf16.gmra.mrb[0].mxu0 %v2236
        %v2382 = vpop.f32.mrb[0].mxu0
        %v2383 = vadd.f32 %v2266, %v2382
        %v2384 = vpop.f32.mrb[0].mxu0
        %v2385 = vpop.f32.mrb[0].mxu0
        %v2386 = vadd.f32 %v2266, %v2385
        %v2387 = vpop.f32.mrb[0].mxu0
        %2388 = vmatprep.mubr.bf16.mxu0 0
        %2389 = vmatmul.mubr.bf16.gmra.mrb[0].mxu0 %v2237
        %v2390 = vpop.f32.mrb[0].mxu0
        %v2391 = vadd.f32 %v2266, %v2390
        %v2392 = vpop.f32.mrb[0].mxu0
        %v2393 = vpop.f32.mrb[0].mxu0
        %v2394 = vadd.f32 %v2266, %v2393
        %v2395 = vpop.f32.mrb[0].mxu0
        %2396 = vmatprep.mubr.bf16.mxu0 0
        %2397 = vmatmul.mubr.bf16.gmra.mrb[0].mxu0 %v2238
        %v2398 = vpop.f32.mrb[0].mxu0
        %v2399 = vadd.f32 %v2266, %v2398
        %v2400 = vpop.f32.mrb[0].mxu0
        %v2401 = vpop.f32.mrb[0].mxu0
        %v2402 = vadd.f32 %v2266, %v2401
        %v2403 = vpop.f32.mrb[0].mxu0
        %2404 = vmatprep.mubr.bf16.mxu0 0
        %2405 = vmatmul.mubr.bf16.gmra.mrb[0].mxu0 %v2239
        %v2406 = vpop.f32.mrb[0].mxu0
        %v2407 = vadd.f32 %v2266, %v2406
        %v2408 = vpop.f32.mrb[0].mxu0
        %v2409 = vpop.f32.mrb[0].mxu0
        %v2410 = vadd.f32 %v2266, %v2409
        %v2411 = vpop.f32.mrb[0].mxu0
        %2412 = vmatprep.mubr.bf16.mxu0 0
        %2413 = vmatmul.mubr.bf16.gmra.mrb[0].mxu0 %v2240
        %v2414 = vpop.f32.mrb[0].mxu0
        %v2415 = vadd.f32 %v2266, %v2414
        %v2416 = vpop.f32.mrb[0].mxu0
        %v2417 = vpop.f32.mrb[0].mxu0
        %v2418 = vadd.f32 %v2266, %v2417
        %v2419 = vpop.f32.mrb[0].mxu0
        %2420 = vmatprep.mubr.bf16.mxu0 0
        %2421 = vmatmul.mubr.bf16.gmra.mrb[0].mxu0 %v2241
        %v2422 = vpop.f32.mrb[0].mxu0
        %v2423 = vadd.f32 %v2266, %v2422
        %v2424 = vpop.f32.mrb[0].mxu0
        %v2425 = vpop.f32.mrb[0].mxu0
        %v2426 = vadd.f32 %v2266, %v2425
        %v2427 = vpop.f32.mrb[0].mxu0
        %2428 = vmatprep.mubr.bf16.mxu0 0
        %2429 = vmatmul.mubr.bf16.gmra.mrb[0].mxu0 %v2242
        %v2430 = vpop.f32.mrb[0].mxu0
        %v2431 = vadd.f32 %v2266, %v2430
        %v2432 = vpop.f32.mrb[0].mxu0
        %v2433 = vpop.f32.mrb[0].mxu0
        %v2434 = vadd.f32 %v2266, %v2433
        %v2435 = vpop.f32.mrb[0].mxu0
        %2436 = vmatprep.mubr.bf16.mxu0 0
        %2437 = vmatmul.mubr.bf16.gmra.mrb[0].mxu0 %v2243
        %v2438 = vpop.f32.mrb[0].mxu0
        %v2439 = vadd.f32 %v2266, %v2438
        %v2440 = vpop.f32.mrb[0].mxu0
        %v2441 = vpop.f32.mrb[0].mxu0
        %v2442 = vadd.f32 %v2266, %v2441
        %v2443 = vpop.f32.mrb[0].mxu0
        %2444 = vmatprep.mubr.bf16.mxu0 0
        %2445 = vmatmul.mubr.bf16.gmra.mrb[0].mxu0 %v2244
        %v2446 = vpop.f32.mrb[0].mxu0
        %v2447 = vadd.f32 %v2266, %v2446
        %v2448 = vpop.f32.mrb[0].mxu0
        %v2449 = vpop.f32.mrb[0].mxu0
        %v2450 = vadd.f32 %v2266, %v2449
        %v2451 = vpop.f32.mrb[0].mxu0
        %2452 = vdwg.mxu0
        %v2453 = vmul.f32 %v2351, 0.2
        %v2454 = vmul.f32 %v2354, 0.2
        %v2455 = vmul.f32 %v2359, 0.2
        %v2456 = vmul.f32 %v2362, 0.2
        %v2457 = vmul.f32 %v2367, 0.2
        %v2458 = vmul.f32 %v2370, 0.2
        %v2459 = vmul.f32 %v2375, 0.2
        %v2460 = vmul.f32 %v2378, 0.2
        %v2461 = vmul.f32 %v2383, 0.2
        %v2462 = vmul.f32 %v2386, 0.2
        %v2463 = vmul.f32 %v2391, 0.2
        %v2464 = vmul.f32 %v2394, 0.2
        %v2465 = vmul.f32 %v2399, 0.2
        %v2466 = vmul.f32 %v2402, 0.2
        %v2467 = vmul.f32 %v2407, 0.2
        %v2468 = vmul.f32 %v2410, 0.2
        %v2469 = vmul.f32 %v2415, 0.2
        %v2470 = vmul.f32 %v2418, 0.2
        %v2471 = vmul.f32 %v2423, 0.2
        %v2472 = vmul.f32 %v2426, 0.2
        %v2473 = vmul.f32 %v2431, 0.2
        %v2474 = vmul.f32 %v2434, 0.2
        %v2475 = vmul.f32 %v2439, 0.2
        %v2476 = vmul.f32 %v2442, 0.2
        %v2477 = vmul.f32 %v2447, 0.2
        %v2478 = vmul.f32 %v2450, 0.2
        %v2479 = vmax.f32 %v2351, %v2453
        %v2480 = vmax.f32 %v2354, %v2454
        %v2481 = vmax.f32 %v2359, %v2455
        %v2482 = vmax.f32 %v2362, %v2456
        %v2483 = vmax.f32 %v2367, %v2457
        %v2484 = vmax.f32 %v2370, %v2458
        %v2485 = vmax.f32 %v2375, %v2459
        %v2486 = vmax.f32 %v2378, %v2460
        %v2487 = vmax.f32 %v2383, %v2461
        %v2488 = vmax.f32 %v2386, %v2462
        %v2489 = vmax.f32 %v2391, %v2463
        %v2490 = vmax.f32 %v2394, %v2464
        %v2491 = vmax.f32 %v2399, %v2465
        %v2492 = vmax.f32 %v2402, %v2466
        %v2493 = vmax.f32 %v2407, %v2467
        %v2494 = vmax.f32 %v2410, %v2468
        %v2495 = vmax.f32 %v2415, %v2469
        %v2496 = vmax.f32 %v2418, %v2470
        %v2497 = vmax.f32 %v2423, %v2471
        %v2498 = vmax.f32 %v2426, %v2472
        %v2499 = vmax.f32 %v2431, %v2473
        %v2500 = vmax.f32 %v2434, %v2474
        %v2501 = vmax.f32 %v2439, %v2475
        %v2502 = vmax.f32 %v2442, %v2476
        %v2503 = vmax.f32 %v2447, %v2477
        %v2504 = vmax.f32 %v2450, %v2478
        %2505 = vst [vmem:[%s358] sm:$0xff] %v2479
        %2506 = vst [vmem:[%s358 + $0x8] sm:$0xff] %v2480
        %2507 = vst [vmem:[%s358 + $0x10] sm:$0xff] %v2481
        %2508 = vst [vmem:[%s358 + $0x18] sm:$0xff] %v2482
        %2509 = vst [vmem:[%s358 + $0x20] sm:$0xff] %v2483
        %2510 = vst [vmem:[%s358 + $0x28] sm:$0xff] %v2484
        %2511 = vst [vmem:[%s358 + $0x30] sm:$0xff] %v2485
        %2512 = vst [vmem:[%s358 + $0x38] sm:$0xff] %v2486
        %2513 = vst [vmem:[%s358 + $0x40] sm:$0xff] %v2487
        %2514 = vst [vmem:[%s358 + $0x48] sm:$0xff] %v2488
        %2515 = vst [vmem:[%s358 + $0x50] sm:$0xff] %v2489
        %2516 = vst [vmem:[%s358 + $0x58] sm:$0xff] %v2490
        %2517 = vst [vmem:[%s358 + $0x60] sm:$0xff] %v2491
        %2518 = vst [vmem:[%s358 + $0x68] sm:$0xff] %v2492
        %2519 = vst [vmem:[%s358 + $0x70] sm:$0xff] %v2493
        %2520 = vst [vmem:[%s358 + $0x78] sm:$0xff] %v2494
        %2521 = vst [vmem:[%s358 + $0x80] sm:$0xff] %v2495
        %2522 = vst [vmem:[%s358 + $0x88] sm:$0xff] %v2496
        %2523 = vst [vmem:[%s358 + $0x90] sm:$0xff] %v2497
        %2524 = vst [vmem:[%s358 + $0x98] sm:$0xff] %v2498
        %2525 = vst [vmem:[%s358 + $0xa0] sm:$0xff] %v2499
        %2526 = vst [vmem:[%s358 + $0xa8] sm:$0xff] %v2500
        %2527 = vst [vmem:[%s358 + $0xb0] sm:$0xff] %v2501
        %2528 = vst [vmem:[%s358 + $0xb8] sm:$0xff] %v2502
        %2529 = vst [vmem:[%s358 + $0xc0] sm:$0xff] %v2503
        %2530 = vst [vmem:[%s358 + $0xc8] sm:$0xff] %v2504
        %s2531 = sand.u32 %s235, 1
        %s2532 = scalar_lea.sflag [#allocation3], %s2531
        %s2533 = sand.u32 %s235, 1
        %s2534 = smul.addr %s2533, 208
        %s2535 = scalar_lea.vmem [#allocation2], %s2534
        // Predicated region
        $region57: #{tpu_custom_call.1} parent=55 // pred_check
          %p2536 = pneg %p245
        $region58: #{tpu_custom_call.1} parent=55 // pred_check_branch
          %2538 = sbr.rel (%p2536) target = $region60
        $region59: #{tpu_custom_call.1} parent=55 // pred_region
          %s2539 = smul.u32 26, %s23
          %s2541 = ssub.s32 3328, 3328
          %2542 = vsyncadd %s2532, %s2541
          %s2543 = smul.addr %s2539, 128
          %s2544 = scalar_lea.hbm %s9, %s2543
          %s2545 = sshll.u32 %s2535, 4
          %s2546 = int_to_ptr.vmem [resolvable:$true] %s2545
          %2551 = dma.vmem_to_hbm [thread:$0]  %s2546, 3328, %s2544, %s2532, 128, 128, 8
        $region60: #{tpu_custom_call.1} parent=55 // pred_fallthru
          _
      $region56: #{tpu_custom_call.1} parent=5 // pred_fallthru
        _
      %p2552 = scmp.le.s32.totalorder 2, %s18
      // Predicated region
      $region61: #{tpu_custom_call.1} parent=5 // pred_check
        %p2553 = pneg %p2552
      $region62: #{tpu_custom_call.1} parent=5 // pred_check_branch
        %2555 = sbr.rel (%p2553) target = $region64
      $region63: #{tpu_custom_call.1} parent=5 // pred_region
        %s2556 = ssub.s32 %s18, 2
        // Predicated region
        $region65: #{tpu_custom_call.1} parent=63 // pred_check
          %p2557 = pneg %p251
        $region66: #{tpu_custom_call.1} parent=63 // pred_check_branch
          %2559 = sbr.rel (%p2557) target = $region68
        $region67: #{tpu_custom_call.1} parent=63 // pred_region
          %s2560 = sand.u32 %s236, 1
          %s2561 = scalar_lea.sflag [#allocation3], %s2560
          %s2562 = sand.u32 %s236, 1
          %s2563 = smul.addr %s2562, 208
          %s2564 = scalar_lea.vmem [#allocation2], %s2563
          %2565 = dma.done %s2561, 3328
        $region68: #{tpu_custom_call.1} parent=63 // pred_fallthru
          _
      $region64: #{tpu_custom_call.1} parent=5 // pred_fallthru
        _
    $region6: #{tpu_custom_call.1} parent=1 // loop_footer
      %s22 = sadd.s32 1, %s18
    $region7: #{tpu_custom_call.1} parent=1 // loop_footer_branch
      %17 = sbr.rel target = $region3
    $region8: #{tpu_custom_call.1} parent=1 // loop_exit
      _
    %2566 = vsyncpa [#allocation3], 1
    %s2567 = scalar_lea.sflag [#allocation3], 1
    %2568 = vsyncpa %s2567, 1

// kernel: tpu_custom_call.1
$region0: #{tpu_custom_call.1}
  #allocation0 [shape = 'u32[]', space=smem, size = 0x4, offset = 0x4, fixed_abs, tag = 'smem constant byte address 0x4 - core index']
  #allocation1 [shape = 'u32[144,128]{1,0:T(1,128)}', space=vmem, size = 0x12000, scoped, tag = 'internal scratch']
  %s0 = inlined_call_operand.vmem [shape: f32[624,8], index: 0, kind: input, shape index: {}]
  %s1 = inlined_call_operand.vmem [shape: s32[624,1], index: 1, kind: input, shape index: {}]
  %s2 = inlined_call_operand.vmem [shape: f32[8,128], index: 2, kind: input, shape index: {}]
  %s3 = inlined_call_operand.vmem [shape: f32[1,128], index: 3, kind: input, shape index: {}]
  %s4 = inlined_call_operand.vmem [shape: s32[1,128], index: 4, kind: input, shape index: {}]
  %s5 = inlined_call_operand.vmem [shape: bf16[128,128], index: 5, kind: input, shape index: {}]
  %s6 = inlined_call_operand.vmem [shape: bf16[624,128], index: 6, kind: input, shape index: {}]
  %s7 = inlined_call_operand.vmem [shape: bf16[128,128], index: 7, kind: input, shape index: {}]
  %s8 = inlined_call_operand.vmem [shape: f32[1,128], index: 8, kind: input, shape index: {}]
  %s9 = inlined_call_operand.hbm [shape: f32[624,128], index: 9, kind: output, shape index: {}]
  %s10 = sld [smem:[#allocation0]]
  $region69: #{tpu_custom_call.1} parent=0
    _
  %s12 = ssub.s32 1, %s10
  %s13 = scalar_select 0, %s12, %s10
  $region1: #{tpu_custom_call.1} parent=0
    #allocation2 [shape = 'u8[212992]{0}', space=vmem, size = 0x34000, scoped, tag = 'output window, operand 0']
    #allocation3 [shape = 's32[2]{0}', space=sflag, size = 0x8, scoped, tag = 'scoped memory for tpu_custom_call.1']
    %14 = vsyncpa [#allocation3], 0
    %s15 = scalar_lea.sflag [#allocation3], 1
    %16 = vsyncpa %s15, 0
    loop: start=0, step=1, limit=5
    $region2: #{tpu_custom_call.1} parent=1 // loop_pre_header
      _
    $region3: #{tpu_custom_call.1} parent=1 // loop_header
      %s18 = sphi 0, %s22
      %p19 = scmp.ge.s32.totalorder %s18, 5
      %s28 = sphi 0, %s30
      %s31 = sphi 0, %s28
      %s32 = sphi 0, %s31
      %s48 = sphi 0, %s32
      %s54 = sphi 0, %s56
      %s57 = sphi 0, %s54
      %s58 = sphi 0, %s57
      %s74 = sphi 0, %s58
      %s78 = sphi 0, %s78
      %s80 = sphi 0, %s78
      %s81 = sphi 0, %s80
      %s95 = sphi 0, %s81
      %s99 = sphi 0, %s99
      %s101 = sphi 0, %s99
      %s102 = sphi 0, %s101
      %s116 = sphi 0, %s102
      %s120 = sphi 0, %s120
      %s122 = sphi 0, %s120
      %s123 = sphi 0, %s122
      %s137 = sphi 0, %s123
      %s141 = sphi 0, %s141
      %s143 = sphi 0, %s141
      %s144 = sphi 0, %s143
      %s158 = sphi 0, %s144
      %s164 = sphi 0, %s166
      %s167 = sphi 0, %s164
      %s168 = sphi 0, %s167
      %s184 = sphi 0, %s168
      %s188 = sphi 0, %s188
      %s190 = sphi 0, %s188
      %s191 = sphi 0, %s190
      %s205 = sphi 0, %s191
      %s209 = sphi 0, %s209
      %s211 = sphi 0, %s209
      %s212 = sphi 0, %s211
      %s226 = sphi 0, %s212
      %s232 = sphi 0, %s234
      %s235 = sphi 0, %s232
      %s236 = sphi 0, %s235
      %s252 = sphi 0, %s236
    $region4: #{tpu_custom_call.1} parent=1 // loop_header_branch
      %21 = sbr.rel (%p19) target = $region8
    $region5: #{tpu_custom_call.1} parent=1 // loop_body
      %s23 = ssub.s32 %s18, 1
      %s24 = ssub.s32 %s18, 2
      %s25 = sadd.s32 %s18, 1
      %s26 = ssub.s32 %s18, %s25
      %p27 = scmp.eq.s32.totalorder %s26, 0
      %s29 = sadd.s32 %s28, 1
      %s30 = scalar_select %p27, %s28, %s29
      %p33 = pneg %p27
      %p34 = scmp.eq.s32.totalorder %s18, 2
      %p35 = por %p33, %p34
      %p36 = scmp.ne.s32.totalorder %s28, %s31
      %p37 = scmp.eq.s32.totalorder %s18, 0
      %p38 = por %p36, %p37
      %p39 = scmp.ne.s32.totalorder %s28, %s31
      %p40 = scmp.eq.s32.totalorder %s23, 2
      %p41 = por %p39, %p40
      %p42 = scmp.ne.s32.totalorder %s31, %s32
      %p43 = scmp.eq.s32.totalorder %s23, 0
      %p44 = por %p42, %p43
      %p45 = scmp.ne.s32.totalorder %s31, %s32
      %p46 = scmp.eq.s32.totalorder %s24, 2
      %p47 = por %p45, %p46
      %p49 = scmp.ne.s32.totalorder %s32, %s48
      %p50 = scmp.eq.s32.totalorder %s24, 0
      %p51 = por %p49, %p50
      %s52 = ssub.s32 %s18, %s25
      %p53 = scmp.eq.s32.totalorder %s52, 0
      %s55 = sadd.s32 %s54, 1
      %s56 = scalar_select %p53, %s54, %s55
      %p59 = pneg %p53
      %p60 = scmp.eq.s32.totalorder %s18, 2
      %p61 = por %p59, %p60
      %p62 = scmp.ne.s32.totalorder %s54, %s57
      %p63 = scmp.eq.s32.totalorder %s18, 0
      %p64 = por %p62, %p63
      %p65 = scmp.ne.s32.totalorder %s54, %s57
      %p66 = scmp.eq.s32.totalorder %s23, 2
      %p67 = por %p65, %p66
      %p68 = scmp.ne.s32.totalorder %s57, %s58
      %p69 = scmp.eq.s32.totalorder %s23, 0
      %p70 = por %p68, %p69
      %p71 = scmp.ne.s32.totalorder %s57, %s58
      %p72 = scmp.eq.s32.totalorder %s24, 2
      %p73 = por %p71, %p72
      %p75 = scmp.ne.s32.totalorder %s58, %s74
      %p76 = scmp.eq.s32.totalorder %s24, 0
      %p77 = por %p75, %p76
      %s79 = sadd.s32 %s78, 1
      %p82 = scmp.eq.s32.totalorder %s18, 2
      %p83 = scmp.ne.s32.totalorder %s78, %s80
      %p84 = scmp.eq.s32.totalorder %s18, 0
      %p85 = por %p83, %p84
      %p86 = scmp.ne.s32.totalorder %s78, %s80
      %p87 = scmp.eq.s32.totalorder %s23, 2
      %p88 = por %p86, %p87
      %p89 = scmp.ne.s32.totalorder %s80, %s81
      %p90 = scmp.eq.s32.totalorder %s23, 0
      %p91 = por %p89, %p90
      %p92 = scmp.ne.s32.totalorder %s80, %s81
      %p93 = scmp.eq.s32.totalorder %s24, 2
      %p94 = por %p92, %p93
      %p96 = scmp.ne.s32.totalorder %s81, %s95
      %p97 = scmp.eq.s32.totalorder %s24, 0
      %p98 = por %p96, %p97
      %s100 = sadd.s32 %s99, 1
      %p103 = scmp.eq.s32.totalorder %s18, 2
      %p104 = scmp.ne.s32.totalorder %s99, %s101
      %p105 = scmp.eq.s32.totalorder %s18, 0
      %p106 = por %p104, %p105
      %p107 = scmp.ne.s32.totalorder %s99, %s101
      %p108 = scmp.eq.s32.totalorder %s23, 2
      %p109 = por %p107, %p108
      %p110 = scmp.ne.s32.totalorder %s101, %s102
      %p111 = scmp.eq.s32.totalorder %s23, 0
      %p112 = por %p110, %p111
      %p113 = scmp.ne.s32.totalorder %s101, %s102
      %p114 = scmp.eq.s32.totalorder %s24, 2
      %p115 = por %p113, %p114
      %p117 = scmp.ne.s32.totalorder %s102, %s116
      %p118 = scmp.eq.s32.totalorder %s24, 0
      %p119 = por %p117, %p118
      %s121 = sadd.s32 %s120, 1
      %p124 = scmp.eq.s32.totalorder %s18, 2
      %p125 = scmp.ne.s32.totalorder %s120, %s122
      %p126 = scmp.eq.s32.totalorder %s18, 0
      %p127 = por %p125, %p126
      %p128 = scmp.ne.s32.totalorder %s120, %s122
      %p129 = scmp.eq.s32.totalorder %s23, 2
      %p130 = por %p128, %p129
      %p131 = scmp.ne.s32.totalorder %s122, %s123
      %p132 = scmp.eq.s32.totalorder %s23, 0
      %p133 = por %p131, %p132
      %p134 = scmp.ne.s32.totalorder %s122, %s123
      %p135 = scmp.eq.s32.totalorder %s24, 2
      %p136 = por %p134, %p135
      %p138 = scmp.ne.s32.totalorder %s123, %s137
      %p139 = scmp.eq.s32.totalorder %s24, 0
      %p140 = por %p138, %p139
      %s142 = sadd.s32 %s141, 1
      %p145 = scmp.eq.s32.totalorder %s18, 2
      %p146 = scmp.ne.s32.totalorder %s141, %s143
      %p147 = scmp.eq.s32.totalorder %s18, 0
      %p148 = por %p146, %p147
      %p149 = scmp.ne.s32.totalorder %s141, %s143
      %p150 = scmp.eq.s32.totalorder %s23, 2
      %p151 = por %p149, %p150
      %p152 = scmp.ne.s32.totalorder %s143, %s144
      %p153 = scmp.eq.s32.totalorder %s23, 0
      %p154 = por %p152, %p153
      %p155 = scmp.ne.s32.totalorder %s143, %s144
      %p156 = scmp.eq.s32.totalorder %s24, 2
      %p157 = por %p155, %p156
      %p159 = scmp.ne.s32.totalorder %s144, %s158
      %p160 = scmp.eq.s32.totalorder %s24, 0
      %p161 = por %p159, %p160
      %s162 = ssub.s32 %s18, %s25
      %p163 = scmp.eq.s32.totalorder %s162, 0
      %s165 = sadd.s32 %s164, 1
      %s166 = scalar_select %p163, %s164, %s165
      %p169 = pneg %p163
      %p170 = scmp.eq.s32.totalorder %s18, 2
      %p171 = por %p169, %p170
      %p172 = scmp.ne.s32.totalorder %s164, %s167
      %p173 = scmp.eq.s32.totalorder %s18, 0
      %p174 = por %p172, %p173
      %p175 = scmp.ne.s32.totalorder %s164, %s167
      %p176 = scmp.eq.s32.totalorder %s23, 2
      %p177 = por %p175, %p176
      %p178 = scmp.ne.s32.totalorder %s167, %s168
      %p179 = scmp.eq.s32.totalorder %s23, 0
      %p180 = por %p178, %p179
      %p181 = scmp.ne.s32.totalorder %s167, %s168
      %p182 = scmp.eq.s32.totalorder %s24, 2
      %p183 = por %p181, %p182
      %p185 = scmp.ne.s32.totalorder %s168, %s184
      %p186 = scmp.eq.s32.totalorder %s24, 0
      %p187 = por %p185, %p186
      %s189 = sadd.s32 %s188, 1
      %p192 = scmp.eq.s32.totalorder %s18, 2
      %p193 = scmp.ne.s32.totalorder %s188, %s190
      %p194 = scmp.eq.s32.totalorder %s18, 0
      %p195 = por %p193, %p194
      %p196 = scmp.ne.s32.totalorder %s188, %s190
      %p197 = scmp.eq.s32.totalorder %s23, 2
      %p198 = por %p196, %p197
      %p199 = scmp.ne.s32.totalorder %s190, %s191
      %p200 = scmp.eq.s32.totalorder %s23, 0
      %p201 = por %p199, %p200
      %p202 = scmp.ne.s32.totalorder %s190, %s191
      %p203 = scmp.eq.s32.totalorder %s24, 2
      %p204 = por %p202, %p203
      %p206 = scmp.ne.s32.totalorder %s191, %s205
      %p207 = scmp.eq.s32.totalorder %s24, 0
      %p208 = por %p206, %p207
      %s210 = sadd.s32 %s209, 1
      %p213 = scmp.eq.s32.totalorder %s18, 2
      %p214 = scmp.ne.s32.totalorder %s209, %s211
      %p215 = scmp.eq.s32.totalorder %s18, 0
      %p216 = por %p214, %p215
      %p217 = scmp.ne.s32.totalorder %s209, %s211
      %p218 = scmp.eq.s32.totalorder %s23, 2
      %p219 = por %p217, %p218
      %p220 = scmp.ne.s32.totalorder %s211, %s212
      %p221 = scmp.eq.s32.totalorder %s23, 0
      %p222 = por %p220, %p221
      %p223 = scmp.ne.s32.totalorder %s211, %s212
      %p224 = scmp.eq.s32.totalorder %s24, 2
      %p225 = por %p223, %p224
      %p227 = scmp.ne.s32.totalorder %s212, %s226
      %p228 = scmp.eq.s32.totalorder %s24, 0
      %p229 = por %p227, %p228
      %s230 = ssub.s32 %s18, %s25
      %p231 = scmp.eq.s32.totalorder %s230, 0
      %s233 = sadd.s32 %s232, 1
      %s234 = scalar_select %p231, %s232, %s233
      %p237 = pneg %p231
      %p238 = scmp.eq.s32.totalorder %s18, 2
      %p239 = por %p237, %p238
      %p240 = scmp.ne.s32.totalorder %s232, %s235
      %p241 = scmp.eq.s32.totalorder %s18, 0
      %p242 = por %p240, %p241
      %p243 = scmp.ne.s32.totalorder %s232, %s235
      %p244 = scmp.eq.s32.totalorder %s23, 2
      %p245 = por %p243, %p244
      %p246 = scmp.ne.s32.totalorder %s235, %s236
      %p247 = scmp.eq.s32.totalorder %s23, 0
      %p248 = por %p246, %p247
      %p249 = scmp.ne.s32.totalorder %s235, %s236
      %p250 = scmp.eq.s32.totalorder %s24, 2
      %p251 = por %p249, %p250
      %p253 = scmp.ne.s32.totalorder %s236, %s252
      %p254 = scmp.eq.s32.totalorder %s24, 0
      %p255 = por %p253, %p254
      %p256 = scmp.le.s32.totalorder 1, %s18
      %p257 = scmp.lt.s32.totalorder %s18, 4
      %p258 = pnand %p256, %p257
      %p259 = pneg %p258
      // Predicated region
      $region9: #{tpu_custom_call.1} parent=5 // pred_check
        _
      $region10: #{tpu_custom_call.1} parent=5 // pred_check_branch
        %261 = sbr.rel (%p258) target = $region12
      $region11: #{tpu_custom_call.1} parent=5 // pred_region
        %s262 = ssub.s32 %s18, 1
        // Predicated region
        $region13: #{tpu_custom_call.1} parent=11 // pred_check
          %p263 = pneg %p91
        $region14: #{tpu_custom_call.1} parent=11 // pred_check_branch
          %265 = sbr.rel (%p263) target = $region16
        $region15: #{tpu_custom_call.1} parent=11 // pred_region
          _
        $region16: #{tpu_custom_call.1} parent=11 // pred_fallthru
          _
        // Predicated region
        $region17: #{tpu_custom_call.1} parent=11 // pred_check
          %p266 = pneg %p112
        $region18: #{tpu_custom_call.1} parent=11 // pred_check_branch
          %268 = sbr.rel (%p266) target = $region20
        $region19: #{tpu_custom_call.1} parent=11 // pred_region
          _
        $region20: #{tpu_custom_call.1} parent=11 // pred_fallthru
          _
        // Predicated region
        $region21: #{tpu_custom_call.1} parent=11 // pred_check
          %p269 = pneg %p133
        $region22: #{tpu_custom_call.1} parent=11 // pred_check_branch
          %271 = sbr.rel (%p269) target = $region24
        $region23: #{tpu_custom_call.1} parent=11 // pred_region
          _
        $region24: #{tpu_custom_call.1} parent=11 // pred_fallthru
          _
        // Predicated region
        $region25: #{tpu_custom_call.1} parent=11 // pred_check
          %p272 = pneg %p154
        $region26: #{tpu_custom_call.1} parent=11 // pred_check_branch
          %274 = sbr.rel (%p272) target = $region28
        $region27: #{tpu_custom_call.1} parent=11 // pred_region
          _
        $region28: #{tpu_custom_call.1} parent=11 // pred_fallthru
          _
        // Predicated region
        $region29: #{tpu_custom_call.1} parent=11 // pred_check
          %p275 = pneg %p201
        $region30: #{tpu_custom_call.1} parent=11 // pred_check_branch
          %277 = sbr.rel (%p275) target = $region32
        $region31: #{tpu_custom_call.1} parent=11 // pred_region
          _
        $region32: #{tpu_custom_call.1} parent=11 // pred_fallthru
          _
        // Predicated region
        $region33: #{tpu_custom_call.1} parent=11 // pred_check
          %p278 = pneg %p222
        $region34: #{tpu_custom_call.1} parent=11 // pred_check_branch
          %280 = sbr.rel (%p278) target = $region36
        $region35: #{tpu_custom_call.1} parent=11 // pred_region
          _
        $region36: #{tpu_custom_call.1} parent=11 // pred_fallthru
          _
      $region12: #{tpu_custom_call.1} parent=5 // pred_fallthru
        _
      %p281 = scmp.lt.s32.totalorder %s18, 3
      // Predicated region
      $region37: #{tpu_custom_call.1} parent=5 // pred_check
        %p282 = pneg %p281
      $region38: #{tpu_custom_call.1} parent=5 // pred_check_branch
        %284 = sbr.rel (%p282) target = $region40
      $region39: #{tpu_custom_call.1} parent=5 // pred_region
        // Predicated region
        $region41: #{tpu_custom_call.1} parent=39 // pred_check
          %p285 = pneg %p38
        $region42: #{tpu_custom_call.1} parent=39 // pred_check_branch
          %287 = sbr.rel (%p285) target = $region44
        $region43: #{tpu_custom_call.1} parent=39 // pred_region
          %s288 = smul.u32 26, %s18
          %p289 = scmp.lt.s32.totalorder %s288, 77
          %s290 = scalar_select %p289, %s288, 77
          %s291 = smul.addr %s290, 8
          %s292 = scalar_lea.vmem %s0, %s291
          %s293 = smul.u32 26, %s18
        $region44: #{tpu_custom_call.1} parent=39 // pred_fallthru
          _
        // Predicated region
        $region45: #{tpu_custom_call.1} parent=39 // pred_check
          %p294 = pneg %p64
        $region46: #{tpu_custom_call.1} parent=39 // pred_check_branch
          %296 = sbr.rel (%p294) target = $region48
        $region47: #{tpu_custom_call.1} parent=39 // pred_region
          %s297 = smul.u32 26, %s18
          %p298 = scmp.lt.s32.totalorder %s297, 77
          %s299 = scalar_select %p298, %s297, 77
          %s300 = smul.addr %s299, 8
          %s301 = scalar_lea.vmem %s1, %s300
          %s302 = smul.u32 26, %s18
        $region48: #{tpu_custom_call.1} parent=39 // pred_fallthru
          _
        // Predicated region
        $region49: #{tpu_custom_call.1} parent=39 // pred_check
          %p303 = pneg %p174
        $region50: #{tpu_custom_call.1} parent=39 // pred_check_branch
          %305 = sbr.rel (%p303) target = $region52
        $region51: #{tpu_custom_call.1} parent=39 // pred_region
          %s306 = smul.u32 26, %s18
          %p307 = scmp.lt.s32.totalorder %s306, 77
          %s308 = scalar_select %p307, %s306, 77
          %s309 = smul.addr %s308, 4
          %s310 = scalar_lea.vmem %s6, %s309
          %s311 = smul.u32 26, %s18
        $region52: #{tpu_custom_call.1} parent=39 // pred_fallthru
          _
      $region40: #{tpu_custom_call.1} parent=5 // pred_fallthru
        _
      %p312 = scmp.le.s32.totalorder 1, %s18
      %p313 = scmp.lt.s32.totalorder %s18, 4
      %p314 = pnand %p312, %p313
      %p315 = pneg %p314
      // Predicated region
      $region53: #{tpu_custom_call.1} parent=5 // pred_check
        _
      $region54: #{tpu_custom_call.1} parent=5 // pred_check_branch
        %317 = sbr.rel (%p314) target = $region56
      $region55: #{tpu_custom_call.1} parent=5 // pred_region
        %s318 = ssub.s32 %s18, 1
        %s319 = smul.u32 26, %s23
        %p320 = scmp.lt.s32.totalorder %s319, 77
        %s321 = scalar_select %p320, %s319, 77
        %s322 = smul.addr %s321, 8
        %s323 = scalar_lea.vmem %s0, %s322
        %p324 = pneg %p44
        %p325 = pneg %p41
        %s326 = smul.u32 26, %s23
        %p327 = scmp.lt.s32.totalorder %s326, 77
        %s328 = scalar_select %p327, %s326, 77
        %s329 = smul.addr %s328, 8
        %s330 = scalar_lea.vmem %s1, %s329
        %p331 = pneg %p70
        %p332 = pneg %p67
        %p333 = pneg %p91
        %p334 = pneg %p88
        %p335 = pneg %p112
        %p336 = pneg %p109
        %p337 = pneg %p133
        %p338 = pneg %p130
        %p339 = pneg %p154
        %p340 = pneg %p151
        %s341 = smul.u32 26, %s23
        %p342 = scmp.lt.s32.totalorder %s341, 77
        %s343 = scalar_select %p342, %s341, 77
        %s344 = smul.addr %s343, 4
        %s345 = scalar_lea.vmem %s6, %s344
        %p346 = pneg %p180
        %p347 = pneg %p177
        %p348 = pneg %p201
        %p349 = pneg %p198
        %p350 = pneg %p222
        %p351 = pneg %p219
        %p352 = pneg %p248
        %p353 = pneg %p245
        %s354 = sand.u32 %s235, 1
        %s355 = scalar_lea.sflag [#allocation3], %s354
        %s356 = sand.u32 %s235, 1
        %s357 = smul.addr %s356, 208
        %s358 = scalar_lea.vmem [#allocation2], %s357
        %s359 = smul.u32 26, %s23
        %p360 = scmp.lt.s32.totalorder %s359, 77
        %s361 = scalar_select %p360, %s359, 77
        %s362 = smul.addr %s361, 8
        %s363 = scalar_lea.vmem %s0, %s362
        %s364 = smul.u32 26, %s23
        %s365 = smul.u32 26, %s23
        %p366 = scmp.lt.s32.totalorder %s365, 77
        %s367 = scalar_select %p366, %s365, 77
        %s368 = smul.addr %s367, 8
        %s369 = scalar_lea.vmem %s1, %s368
        %s370 = smul.u32 26, %s23
        %s371 = smul.u32 26, %s23
        %p372 = scmp.lt.s32.totalorder %s371, 77
        %s373 = scalar_select %p372, %s371, 77
        %s374 = smul.addr %s373, 4
        %s375 = scalar_lea.vmem %s6, %s374
        %s376 = smul.u32 26, %s23
        %s377 = smul.u32 26, %s23
        %v379 = vld [vmem:[%s363] sm:$0xff]
        %v380 = vld [vmem:[%s363 + $0x8] sm:$0xff]
        %v381 = vld [vmem:[%s363 + $0x10] sm:$0xff]
        %v382 = vld [vmem:[%s363 + $0x18] sm:$0xff]
        %v383 = vld [vmem:[%s363 + $0x20] sm:$0xff]
        %v384 = vld [vmem:[%s363 + $0x28] sm:$0xff]
        %v385 = vld [vmem:[%s363 + $0x30] sm:$0xff]
        %v386 = vld [vmem:[%s363 + $0x38] sm:$0xff]
        %v387 = vld [vmem:[%s363 + $0x40] sm:$0xff]
        %v388 = vld [vmem:[%s363 + $0x48] sm:$0xff]
        %v389 = vld [vmem:[%s363 + $0x50] sm:$0xff]
        %v390 = vld [vmem:[%s363 + $0x58] sm:$0xff]
        %v391 = vld [vmem:[%s363 + $0x60] sm:$0xff]
        %v392 = vld [vmem:[%s363 + $0x68] sm:$0xff]
        %v393 = vld [vmem:[%s363 + $0x70] sm:$0xff]
        %v394 = vld [vmem:[%s363 + $0x78] sm:$0xff]
        %v395 = vld [vmem:[%s363 + $0x80] sm:$0xff]
        %v396 = vld [vmem:[%s363 + $0x88] sm:$0xff]
        %v397 = vld [vmem:[%s363 + $0x90] sm:$0xff]
        %v398 = vld [vmem:[%s363 + $0x98] sm:$0xff]
        %v399 = vld [vmem:[%s363 + $0xa0] sm:$0xff]
        %v400 = vld [vmem:[%s363 + $0xa8] sm:$0xff]
        %v401 = vld [vmem:[%s363 + $0xb0] sm:$0xff]
        %v402 = vld [vmem:[%s363 + $0xb8] sm:$0xff]
        %v403 = vld [vmem:[%s363 + $0xc0] sm:$0xff]
        %v404 = vld [vmem:[%s363 + $0xc8] sm:$0xff]
        %v405 = vld [vmem:[%s369] sm:$0xff]
        %v406 = vld [vmem:[%s369 + $0x8] sm:$0xff]
        %v407 = vld [vmem:[%s369 + $0x10] sm:$0xff]
        %v408 = vld [vmem:[%s369 + $0x18] sm:$0xff]
        %v409 = vld [vmem:[%s369 + $0x20] sm:$0xff]
        %v410 = vld [vmem:[%s369 + $0x28] sm:$0xff]
        %v411 = vld [vmem:[%s369 + $0x30] sm:$0xff]
        %v412 = vld [vmem:[%s369 + $0x38] sm:$0xff]
        %v413 = vld [vmem:[%s369 + $0x40] sm:$0xff]
        %v414 = vld [vmem:[%s369 + $0x48] sm:$0xff]
        %v415 = vld [vmem:[%s369 + $0x50] sm:$0xff]
        %v416 = vld [vmem:[%s369 + $0x58] sm:$0xff]
        %v417 = vld [vmem:[%s369 + $0x60] sm:$0xff]
        %v418 = vld [vmem:[%s369 + $0x68] sm:$0xff]
        %v419 = vld [vmem:[%s369 + $0x70] sm:$0xff]
        %v420 = vld [vmem:[%s369 + $0x78] sm:$0xff]
        %v421 = vld [vmem:[%s369 + $0x80] sm:$0xff]
        %v422 = vld [vmem:[%s369 + $0x88] sm:$0xff]
        %v423 = vld [vmem:[%s369 + $0x90] sm:$0xff]
        %v424 = vld [vmem:[%s369 + $0x98] sm:$0xff]
        %v425 = vld [vmem:[%s369 + $0xa0] sm:$0xff]
        %v426 = vld [vmem:[%s369 + $0xa8] sm:$0xff]
        %v427 = vld [vmem:[%s369 + $0xb0] sm:$0xff]
        %v428 = vld [vmem:[%s369 + $0xb8] sm:$0xff]
        %v429 = vld [vmem:[%s369 + $0xc0] sm:$0xff]
        %v430 = vld [vmem:[%s369 + $0xc8] sm:$0xff]
        %v431 = vld [vmem:[%s2] sm:$0xff]
        %vm432 = vcmask 64512
        %v434 = vsel %vm432, %v379, 0
        %v437 = vsel %vm432, %v380, 0
        %v440 = vsel %vm432, %v381, 0
        %v443 = vsel %vm432, %v382, 0
        %v446 = vsel %vm432, %v383, 0
        %v449 = vsel %vm432, %v384, 0
        %v452 = vsel %vm432, %v385, 0
        %v455 = vsel %vm432, %v386, 0
        %v458 = vsel %vm432, %v387, 0
        %v461 = vsel %vm432, %v388, 0
        %v464 = vsel %vm432, %v389, 0
        %v467 = vsel %vm432, %v390, 0
        %v470 = vsel %vm432, %v391, 0
        %v473 = vsel %vm432, %v392, 0
        %v476 = vsel %vm432, %v393, 0
        %v479 = vsel %vm432, %v394, 0
        %v482 = vsel %vm432, %v395, 0
        %v485 = vsel %vm432, %v396, 0
        %v488 = vsel %vm432, %v397, 0
        %v491 = vsel %vm432, %v398, 0
        %v494 = vsel %vm432, %v399, 0
        %v497 = vsel %vm432, %v400, 0
        %v500 = vsel %vm432, %v401, 0
        %v503 = vsel %vm432, %v402, 0
        %v506 = vsel %vm432, %v403, 0
        %v509 = vsel %vm432, %v404, 0
        %511 = vmatprep.subr.mxu0 0.0
        %512 = vmatpush1.msra.mxu0 %v431
        %513 = vmatprep.subr.mxu0 0.0
        %514 = vmatpush1.msra.mxu0 0.0
        %515 = vmatprep.subr.mxu0 0.0
        %516 = vmatpush1.msra.mxu0 0.0
        %517 = vmatprep.subr.mxu0 0.0
        %518 = vmatpush1.msra.mxu0 0.0
        %519 = vmatprep.subr.mxu0 0.0
        %520 = vmatpush1.msra.mxu0 0.0
        %521 = vmatprep.subr.mxu0 0.0
        %522 = vmatpush1.msra.mxu0 0.0
        %523 = vmatprep.subr.mxu0 0.0
        %524 = vmatpush1.msra.mxu0 0.0
        %525 = vmatprep.subr.mxu0 0.0
        %526 = vmatpush1.msra.mxu0 0.0
        %527 = vmatprep.subr.mxu0 0.0
        %528 = vmatpush1.msra.mxu0 0.0
        %529 = vmatprep.subr.mxu0 0.0
        %530 = vmatpush1.msra.mxu0 0.0
        %531 = vmatprep.subr.mxu0 0.0
        %532 = vmatpush1.msra.mxu0 0.0
        %533 = vmatprep.subr.mxu0 0.0
        %534 = vmatpush1.msra.mxu0 0.0
        %535 = vmatprep.subr.mxu0 0.0
        %536 = vmatpush1.msra.mxu0 0.0
        %537 = vmatprep.subr.mxu0 0.0
        %538 = vmatpush1.msra.mxu0 0.0
        %539 = vmatprep.subr.mxu0 0.0
        %540 = vmatpush1.msra.mxu0 0.0
        %541 = vmatprep.subr.mxu0 0.0
        %542 = vmatpush1.msra.mxu0 0.0
        %543 = vmatprep.subr.mxu0 0.0
        %544 = vmatpush1.msra.mxu0 0.0
        %545 = vmatprep.subr.mxu0 0.0
        %546 = vmatpush1.msra.mxu0 0.0
        %547 = vmatprep.subr.mxu0 0.0
        %548 = vmatpush1.msra.mxu0 0.0
        %549 = vmatprep.subr.mxu0 0.0
        %550 = vmatpush1.msra.mxu0 0.0
        %551 = vmatprep.subr.mxu0 0.0
        %552 = vmatpush1.msra.mxu0 0.0
        %553 = vmatprep.subr.mxu0 0.0
        %554 = vmatpush1.msra.mxu0 0.0
        %555 = vmatprep.subr.mxu0 0.0
        %556 = vmatpush1.msra.mxu0 0.0
        %557 = vmatprep.subr.mxu0 0.0
        %558 = vmatpush1.msra.mxu0 0.0
        %559 = vmatprep.subr.mxu0 0.0
        %560 = vmatpush1.msra.mxu0 0.0
        %561 = vmatprep.subr.mxu0 0.0
        %562 = vmatpush1.msra.mxu0 0.0
        %563 = vmatprep.subr.mxu0 0.0
        %564 = vmatpush1.msra.mxu0 0.0
        %565 = vmatprep.subr.mxu0 0.0
        %566 = vmatpush1.msra.mxu0 0.0
        %567 = vmatprep.subr.mxu0 0.0
        %568 = vmatpush1.msra.mxu0 0.0
        %569 = vmatprep.subr.mxu0 0.0
        %570 = vmatpush1.msra.mxu0 0.0
        %571 = vmatprep.subr.mxu0 0.0
        %572 = vmatpush1.msra.mxu0 0.0
        %573 = vmatprep.subr.mxu0 0.0
        %574 = vmatpush1.msra.mxu0 0.0
        %575 = vmatprep.mubr.f32.mxu0 0.0
        %576 = vmatmul.mubr.f32.gmra.mrb[0].mxu0 %v434
        %v577 = vpop.f32.mrb[0].mxu0
        %v578 = vadd.f32 0.0, %v577
        %v579 = vpop.f32.mrb[0].mxu0
        %580 = vmatprep.mubr.f32.mxu0 0.0
        %581 = vmatmul.mubr.f32.gmra.mrb[0].mxu0 %v437
        %v582 = vpop.f32.mrb[0].mxu0
        %v583 = vadd.f32 0.0, %v582
        %v584 = vpop.f32.mrb[0].mxu0
        %585 = vmatprep.mubr.f32.mxu0 0.0
        %586 = vmatmul.mubr.f32.gmra.mrb[0].mxu0 %v440
        %v587 = vpop.f32.mrb[0].mxu0
        %v588 = vadd.f32 0.0, %v587
        %v589 = vpop.f32.mrb[0].mxu0
        %590 = vmatprep.mubr.f32.mxu0 0.0
        %591 = vmatmul.mubr.f32.gmra.mrb[0].mxu0 %v443
        %v592 = vpop.f32.mrb[0].mxu0
        %v593 = vadd.f32 0.0, %v592
        %v594 = vpop.f32.mrb[0].mxu0
        %595 = vmatprep.mubr.f32.mxu0 0.0
        %596 = vmatmul.mubr.f32.gmra.mrb[0].mxu0 %v446
        %v597 = vpop.f32.mrb[0].mxu0
        %v598 = vadd.f32 0.0, %v597
        %v599 = vpop.f32.mrb[0].mxu0
        %600 = vmatprep.mubr.f32.mxu0 0.0
        %601 = vmatmul.mubr.f32.gmra.mrb[0].mxu0 %v449
        %v602 = vpop.f32.mrb[0].mxu0
        %v603 = vadd.f32 0.0, %v602
        %v604 = vpop.f32.mrb[0].mxu0
        %605 = vmatprep.mubr.f32.mxu0 0.0
        %606 = vmatmul.mubr.f32.gmra.mrb[0].mxu0 %v452
        %v607 = vpop.f32.mrb[0].mxu0
        %v608 = vadd.f32 0.0, %v607
        %v609 = vpop.f32.mrb[0].mxu0
        %610 = vmatprep.mubr.f32.mxu0 0.0
        %611 = vmatmul.mubr.f32.gmra.mrb[0].mxu0 %v455
        %v612 = vpop.f32.mrb[0].mxu0
        %v613 = vadd.f32 0.0, %v612
        %v614 = vpop.f32.mrb[0].mxu0
        %615 = vmatprep.mubr.f32.mxu0 0.0
        %616 = vmatmul.mubr.f32.gmra.mrb[0].mxu0 %v458
        %v617 = vpop.f32.mrb[0].mxu0
        %v618 = vadd.f32 0.0, %v617
        %v619 = vpop.f32.mrb[0].mxu0
        %620 = vmatprep.mubr.f32.mxu0 0.0
        %621 = vmatmul.mubr.f32.gmra.mrb[0].mxu0 %v461
        %v622 = vpop.f32.mrb[0].mxu0
        %v623 = vadd.f32 0.0, %v622
        %v624 = vpop.f32.mrb[0].mxu0
        %625 = vmatprep.mubr.f32.mxu0 0.0
        %626 = vmatmul.mubr.f32.gmra.mrb[0].mxu0 %v464
        %v627 = vpop.f32.mrb[0].mxu0
        %v628 = vadd.f32 0.0, %v627
        %v629 = vpop.f32.mrb[0].mxu0
        %630 = vmatprep.mubr.f32.mxu0 0.0
        %631 = vmatmul.mubr.f32.gmra.mrb[0].mxu0 %v467
        %v632 = vpop.f32.mrb[0].mxu0
        %v633 = vadd.f32 0.0, %v632
        %v634 = vpop.f32.mrb[0].mxu0
        %635 = vmatprep.mubr.f32.mxu0 0.0
        %636 = vmatmul.mubr.f32.gmra.mrb[0].mxu0 %v470
        %v637 = vpop.f32.mrb[0].mxu0
        %v638 = vadd.f32 0.0, %v637
        %v639 = vpop.f32.mrb[0].mxu0
        %640 = vmatprep.mubr.f32.mxu0 0.0
        %641 = vmatmul.mubr.f32.gmra.mrb[0].mxu0 %v473
        %v642 = vpop.f32.mrb[0].mxu0
        %v643 = vadd.f32 0.0, %v642
        %v644 = vpop.f32.mrb[0].mxu0
        %645 = vmatprep.mubr.f32.mxu0 0.0
        %646 = vmatmul.mubr.f32.gmra.mrb[0].mxu0 %v476
        %v647 = vpop.f32.mrb[0].mxu0
        %v648 = vadd.f32 0.0, %v647
        %v649 = vpop.f32.mrb[0].mxu0
        %650 = vmatprep.mubr.f32.mxu0 0.0
        %651 = vmatmul.mubr.f32.gmra.mrb[0].mxu0 %v479
        %v652 = vpop.f32.mrb[0].mxu0
        %v653 = vadd.f32 0.0, %v652
        %v654 = vpop.f32.mrb[0].mxu0
        %655 = vmatprep.mubr.f32.mxu0 0.0
        %656 = vmatmul.mubr.f32.gmra.mrb[0].mxu0 %v482
        %v657 = vpop.f32.mrb[0].mxu0
        %v658 = vadd.f32 0.0, %v657
        %v659 = vpop.f32.mrb[0].mxu0
        %660 = vmatprep.mubr.f32.mxu0 0.0
        %661 = vmatmul.mubr.f32.gmra.mrb[0].mxu0 %v485
        %v662 = vpop.f32.mrb[0].mxu0
        %v663 = vadd.f32 0.0, %v662
        %v664 = vpop.f32.mrb[0].mxu0
        %665 = vmatprep.mubr.f32.mxu0 0.0
        %666 = vmatmul.mubr.f32.gmra.mrb[0].mxu0 %v488
        %v667 = vpop.f32.mrb[0].mxu0
        %v668 = vadd.f32 0.0, %v667
        %v669 = vpop.f32.mrb[0].mxu0
        %670 = vmatprep.mubr.f32.mxu0 0.0
        %671 = vmatmul.mubr.f32.gmra.mrb[0].mxu0 %v491
        %v672 = vpop.f32.mrb[0].mxu0
        %v673 = vadd.f32 0.0, %v672
        %v674 = vpop.f32.mrb[0].mxu0
        %675 = vmatprep.mubr.f32.mxu0 0.0
        %676 = vmatmul.mubr.f32.gmra.mrb[0].mxu0 %v494
        %v677 = vpop.f32.mrb[0].mxu0
        %v678 = vadd.f32 0.0, %v677
        %v679 = vpop.f32.mrb[0].mxu0
        %680 = vmatprep.mubr.f32.mxu0 0.0
        %681 = vmatmul.mubr.f32.gmra.mrb[0].mxu0 %v497
        %v682 = vpop.f32.mrb[0].mxu0
        %v683 = vadd.f32 0.0, %v682
        %v684 = vpop.f32.mrb[0].mxu0
        %685 = vmatprep.mubr.f32.mxu0 0.0
        %686 = vmatmul.mubr.f32.gmra.mrb[0].mxu0 %v500
        %v687 = vpop.f32.mrb[0].mxu0
        %v688 = vadd.f32 0.0, %v687
        %v689 = vpop.f32.mrb[0].mxu0
        %690 = vmatprep.mubr.f32.mxu0 0.0
        %691 = vmatmul.mubr.f32.gmra.mrb[0].mxu0 %v503
        %v692 = vpop.f32.mrb[0].mxu0
        %v693 = vadd.f32 0.0, %v692
        %v694 = vpop.f32.mrb[0].mxu0
        %695 = vmatprep.mubr.f32.mxu0 0.0
        %696 = vmatmul.mubr.f32.gmra.mrb[0].mxu0 %v506
        %v697 = vpop.f32.mrb[0].mxu0
        %v698 = vadd.f32 0.0, %v697
        %v699 = vpop.f32.mrb[0].mxu0
        %700 = vmatprep.mubr.f32.mxu0 0.0
        %701 = vmatmul.mubr.f32.gmra.mrb[0].mxu0 %v509
        %v702 = vpop.f32.mrb[0].mxu0
        %v703 = vadd.f32 0.0, %v702
        %v704 = vpop.f32.mrb[0].mxu0
        %705 = vdwg.mxu0
        %v706 = vmul.f32 %v379, %v379
        %v707 = vmul.f32 %v380, %v380
        %v708 = vmul.f32 %v381, %v381
        %v709 = vmul.f32 %v382, %v382
        %v710 = vmul.f32 %v383, %v383
        %v711 = vmul.f32 %v384, %v384
        %v712 = vmul.f32 %v385, %v385
        %v713 = vmul.f32 %v386, %v386
        %v714 = vmul.f32 %v387, %v387
        %v715 = vmul.f32 %v388, %v388
        %v716 = vmul.f32 %v389, %v389
        %v717 = vmul.f32 %v390, %v390
        %v718 = vmul.f32 %v391, %v391
        %v719 = vmul.f32 %v392, %v392
        %v720 = vmul.f32 %v393, %v393
        %v721 = vmul.f32 %v394, %v394
        %v722 = vmul.f32 %v395, %v395
        %v723 = vmul.f32 %v396, %v396
        %v724 = vmul.f32 %v397, %v397
        %v725 = vmul.f32 %v398, %v398
        %v726 = vmul.f32 %v399, %v399
        %v727 = vmul.f32 %v400, %v400
        %v728 = vmul.f32 %v401, %v401
        %v729 = vmul.f32 %v402, %v402
        %v730 = vmul.f32 %v403, %v403
        %v731 = vmul.f32 %v404, %v404
        %v732 = vsel %vm432, %v706, 0.0
        %733 = vadd.xlane.f32.xlu0 %v732
        %v734 = vpop.xlane.xlu0 %733
        %v735 = vsel %vm432, %v707, 0.0
        %736 = vadd.xlane.f32.xlu0 %v735
        %v737 = vpop.xlane.xlu0 %736
        %v738 = vsel %vm432, %v708, 0.0
        %739 = vadd.xlane.f32.xlu0 %v738
        %v740 = vpop.xlane.xlu0 %739
        %v741 = vsel %vm432, %v709, 0.0
        %742 = vadd.xlane.f32.xlu0 %v741
        %v743 = vpop.xlane.xlu0 %742
        %v744 = vsel %vm432, %v710, 0.0
        %745 = vadd.xlane.f32.xlu0 %v744
        %v746 = vpop.xlane.xlu0 %745
        %v747 = vsel %vm432, %v711, 0.0
        %748 = vadd.xlane.f32.xlu0 %v747
        %v749 = vpop.xlane.xlu0 %748
        %v750 = vsel %vm432, %v712, 0.0
        %751 = vadd.xlane.f32.xlu0 %v750
        %v752 = vpop.xlane.xlu0 %751
        %v753 = vsel %vm432, %v713, 0.0
        %754 = vadd.xlane.f32.xlu0 %v753
        %v755 = vpop.xlane.xlu0 %754
        %v756 = vsel %vm432, %v714, 0.0
        %757 = vadd.xlane.f32.xlu0 %v756
        %v758 = vpop.xlane.xlu0 %757
        %v759 = vsel %vm432, %v715, 0.0
        %760 = vadd.xlane.f32.xlu0 %v759
        %v761 = vpop.xlane.xlu0 %760
        %v762 = vsel %vm432, %v716, 0.0
        %763 = vadd.xlane.f32.xlu0 %v762
        %v764 = vpop.xlane.xlu0 %763
        %v765 = vsel %vm432, %v717, 0.0
        %766 = vadd.xlane.f32.xlu0 %v765
        %v767 = vpop.xlane.xlu0 %766
        %v768 = vsel %vm432, %v718, 0.0
        %769 = vadd.xlane.f32.xlu0 %v768
        %v770 = vpop.xlane.xlu0 %769
        %v771 = vsel %vm432, %v719, 0.0
        %772 = vadd.xlane.f32.xlu0 %v771
        %v773 = vpop.xlane.xlu0 %772
        %v774 = vsel %vm432, %v720, 0.0
        %775 = vadd.xlane.f32.xlu0 %v774
        %v776 = vpop.xlane.xlu0 %775
        %v777 = vsel %vm432, %v721, 0.0
        %778 = vadd.xlane.f32.xlu0 %v777
        %v779 = vpop.xlane.xlu0 %778
        %v780 = vsel %vm432, %v722, 0.0
        %781 = vadd.xlane.f32.xlu0 %v780
        %v782 = vpop.xlane.xlu0 %781
        %v783 = vsel %vm432, %v723, 0.0
        %784 = vadd.xlane.f32.xlu0 %v783
        %v785 = vpop.xlane.xlu0 %784
        %v786 = vsel %vm432, %v724, 0.0
        %787 = vadd.xlane.f32.xlu0 %v786
        %v788 = vpop.xlane.xlu0 %787
        %v789 = vsel %vm432, %v725, 0.0
        %790 = vadd.xlane.f32.xlu0 %v789
        %v791 = vpop.xlane.xlu0 %790
        %v792 = vsel %vm432, %v726, 0.0
        %793 = vadd.xlane.f32.xlu0 %v792
        %v794 = vpop.xlane.xlu0 %793
        %v795 = vsel %vm432, %v727, 0.0
        %796 = vadd.xlane.f32.xlu0 %v795
        %v797 = vpop.xlane.xlu0 %796
        %v798 = vsel %vm432, %v728, 0.0
        %799 = vadd.xlane.f32.xlu0 %v798
        %v800 = vpop.xlane.xlu0 %799
        %v801 = vsel %vm432, %v729, 0.0
        %802 = vadd.xlane.f32.xlu0 %v801
        %v803 = vpop.xlane.xlu0 %802
        %v804 = vsel %vm432, %v730, 0.0
        %805 = vadd.xlane.f32.xlu0 %v804
        %v806 = vpop.xlane.xlu0 %805
        %v807 = vsel %vm432, %v731, 0.0
        %808 = vadd.xlane.f32.xlu0 %v807
        %v809 = vpop.xlane.xlu0 %808
        %v810 = vld [vmem:[%s3] sm:$0x1]
        %v812 = vlaneseq
        %v813 = vshrl.u32 %v812, 7
        %v814 = vsub.s32 0, %v813
        %v815 = vrot.slane %v810, %v814
        %v817 = vadd.f32 %v734, %v815
        %v818 = vadd.f32 %v737, %v815
        %v819 = vadd.f32 %v740, %v815
        %v820 = vadd.f32 %v743, %v815
        %v821 = vadd.f32 %v746, %v815
        %v822 = vadd.f32 %v749, %v815
        %v823 = vadd.f32 %v752, %v815
        %v824 = vadd.f32 %v755, %v815
        %v825 = vadd.f32 %v758, %v815
        %v826 = vadd.f32 %v761, %v815
        %v827 = vadd.f32 %v764, %v815
        %v828 = vadd.f32 %v767, %v815
        %v829 = vadd.f32 %v770, %v815
        %v830 = vadd.f32 %v773, %v815
        %v831 = vadd.f32 %v776, %v815
        %v832 = vadd.f32 %v779, %v815
        %v833 = vadd.f32 %v782, %v815
        %v834 = vadd.f32 %v785, %v815
        %v835 = vadd.f32 %v788, %v815
        %v836 = vadd.f32 %v791, %v815
        %v837 = vadd.f32 %v794, %v815
        %v838 = vadd.f32 %v797, %v815
        %v839 = vadd.f32 %v800, %v815
        %v840 = vadd.f32 %v803, %v815
        %v841 = vadd.f32 %v806, %v815
        %v842 = vadd.f32 %v809, %v815
        %v843 = vmul.f32 %v578, 2.0
        %v844 = vmul.f32 %v583, 2.0
        %v845 = vmul.f32 %v588, 2.0
        %v846 = vmul.f32 %v593, 2.0
        %v847 = vmul.f32 %v598, 2.0
        %v848 = vmul.f32 %v603, 2.0
        %v849 = vmul.f32 %v608, 2.0
        %v850 = vmul.f32 %v613, 2.0
        %v851 = vmul.f32 %v618, 2.0
        %v852 = vmul.f32 %v623, 2.0
        %v853 = vmul.f32 %v628, 2.0
        %v854 = vmul.f32 %v633, 2.0
        %v855 = vmul.f32 %v638, 2.0
        %v856 = vmul.f32 %v643, 2.0
        %v857 = vmul.f32 %v648, 2.0
        %v858 = vmul.f32 %v653, 2.0
        %v859 = vmul.f32 %v658, 2.0
        %v860 = vmul.f32 %v663, 2.0
        %v861 = vmul.f32 %v668, 2.0
        %v862 = vmul.f32 %v673, 2.0
        %v863 = vmul.f32 %v678, 2.0
        %v864 = vmul.f32 %v683, 2.0
        %v865 = vmul.f32 %v688, 2.0
        %v866 = vmul.f32 %v693, 2.0
        %v867 = vmul.f32 %v698, 2.0
        %v868 = vmul.f32 %v703, 2.0
        %v869 = vsub.f32 %v817, %v843
        %v870 = vsub.f32 %v818, %v844
        %v871 = vsub.f32 %v819, %v845
        %v872 = vsub.f32 %v820, %v846
        %v873 = vsub.f32 %v821, %v847
        %v874 = vsub.f32 %v822, %v848
        %v875 = vsub.f32 %v823, %v849
        %v876 = vsub.f32 %v824, %v850
        %v877 = vsub.f32 %v825, %v851
        %v878 = vsub.f32 %v826, %v852
        %v879 = vsub.f32 %v827, %v853
        %v880 = vsub.f32 %v828, %v854
        %v881 = vsub.f32 %v829, %v855
        %v882 = vsub.f32 %v830, %v856
        %v883 = vsub.f32 %v831, %v857
        %v884 = vsub.f32 %v832, %v858
        %v885 = vsub.f32 %v833, %v859
        %v886 = vsub.f32 %v834, %v860
        %v887 = vsub.f32 %v835, %v861
        %v888 = vsub.f32 %v836, %v862
        %v889 = vsub.f32 %v837, %v863
        %v890 = vsub.f32 %v838, %v864
        %v891 = vsub.f32 %v839, %v865
        %v892 = vsub.f32 %v840, %v866
        %v893 = vsub.f32 %v841, %v867
        %v894 = vsub.f32 %v842, %v868
        %v895 = vmax.f32 %v869, 0.0
        %v896 = vmax.f32 %v870, 0.0
        %v897 = vmax.f32 %v871, 0.0
        %v898 = vmax.f32 %v872, 0.0
        %v899 = vmax.f32 %v873, 0.0
        %v900 = vmax.f32 %v874, 0.0
        %v901 = vmax.f32 %v875, 0.0
        %v902 = vmax.f32 %v876, 0.0
        %v903 = vmax.f32 %v877, 0.0
        %v904 = vmax.f32 %v878, 0.0
        %v905 = vmax.f32 %v879, 0.0
        %v906 = vmax.f32 %v880, 0.0
        %v907 = vmax.f32 %v881, 0.0
        %v908 = vmax.f32 %v882, 0.0
        %v909 = vmax.f32 %v883, 0.0
        %v910 = vmax.f32 %v884, 0.0
        %v911 = vmax.f32 %v885, 0.0
        %v912 = vmax.f32 %v886, 0.0
        %v913 = vmax.f32 %v887, 0.0
        %v914 = vmax.f32 %v888, 0.0
        %v915 = vmax.f32 %v889, 0.0
        %v916 = vmax.f32 %v890, 0.0
        %v917 = vmax.f32 %v891, 0.0
        %v918 = vmax.f32 %v892, 0.0
        %v919 = vmax.f32 %v893, 0.0
        %v920 = vmax.f32 %v894, 0.0
        %v921 = vld [vmem:[%s4] sm:$0x1]
        %922 = vset.pattern.permute.xlu0 0
        %923 = vperm.xlu0 %922, %v405
        %v924 = vpop.permute.xlu0 %923
        %925 = vset.pattern.permute.xlu0 0
        %926 = vperm.xlu0 %925, %v406
        %v927 = vpop.permute.xlu0 %926
        %928 = vset.pattern.permute.xlu0 0
        %929 = vperm.xlu0 %928, %v407
        %v930 = vpop.permute.xlu0 %929
        %931 = vset.pattern.permute.xlu0 0
        %932 = vperm.xlu0 %931, %v408
        %v933 = vpop.permute.xlu0 %932
        %934 = vset.pattern.permute.xlu0 0
        %935 = vperm.xlu0 %934, %v409
        %v936 = vpop.permute.xlu0 %935
        %937 = vset.pattern.permute.xlu0 0
        %938 = vperm.xlu0 %937, %v410
        %v939 = vpop.permute.xlu0 %938
        %940 = vset.pattern.permute.xlu0 0
        %941 = vperm.xlu0 %940, %v411
        %v942 = vpop.permute.xlu0 %941
        %943 = vset.pattern.permute.xlu0 0
        %944 = vperm.xlu0 %943, %v412
        %v945 = vpop.permute.xlu0 %944
        %946 = vset.pattern.permute.xlu0 0
        %947 = vperm.xlu0 %946, %v413
        %v948 = vpop.permute.xlu0 %947
        %949 = vset.pattern.permute.xlu0 0
        %950 = vperm.xlu0 %949, %v414
        %v951 = vpop.permute.xlu0 %950
        %952 = vset.pattern.permute.xlu0 0
        %953 = vperm.xlu0 %952, %v415
        %v954 = vpop.permute.xlu0 %953
        %955 = vset.pattern.permute.xlu0 0
        %956 = vperm.xlu0 %955, %v416
        %v957 = vpop.permute.xlu0 %956
        %958 = vset.pattern.permute.xlu0 0
        %959 = vperm.xlu0 %958, %v417
        %v960 = vpop.permute.xlu0 %959
        %961 = vset.pattern.permute.xlu0 0
        %962 = vperm.xlu0 %961, %v418
        %v963 = vpop.permute.xlu0 %962
        %964 = vset.pattern.permute.xlu0 0
        %965 = vperm.xlu0 %964, %v419
        %v966 = vpop.permute.xlu0 %965
        %967 = vset.pattern.permute.xlu0 0
        %968 = vperm.xlu0 %967, %v420
        %v969 = vpop.permute.xlu0 %968
        %970 = vset.pattern.permute.xlu0 0
        %971 = vperm.xlu0 %970, %v421
        %v972 = vpop.permute.xlu0 %971
        %973 = vset.pattern.permute.xlu0 0
        %974 = vperm.xlu0 %973, %v422
        %v975 = vpop.permute.xlu0 %974
        %976 = vset.pattern.permute.xlu0 0
        %977 = vperm.xlu0 %976, %v423
        %v978 = vpop.permute.xlu0 %977
        %979 = vset.pattern.permute.xlu0 0
        %980 = vperm.xlu0 %979, %v424
        %v981 = vpop.permute.xlu0 %980
        %982 = vset.pattern.permute.xlu0 0
        %983 = vperm.xlu0 %982, %v425
        %v984 = vpop.permute.xlu0 %983
        %985 = vset.pattern.permute.xlu0 0
        %986 = vperm.xlu0 %985, %v426
        %v987 = vpop.permute.xlu0 %986
        %988 = vset.pattern.permute.xlu0 0
        %989 = vperm.xlu0 %988, %v427
        %v990 = vpop.permute.xlu0 %989
        %991 = vset.pattern.permute.xlu0 0
        %992 = vperm.xlu0 %991, %v428
        %v993 = vpop.permute.xlu0 %992
        %994 = vset.pattern.permute.xlu0 0
        %995 = vperm.xlu0 %994, %v429
        %v996 = vpop.permute.xlu0 %995
        %997 = vset.pattern.permute.xlu0 0
        %998 = vperm.xlu0 %997, %v430
        %v999 = vpop.permute.xlu0 %998
        %v1000 = vlaneseq
        %v1001 = vshrl.u32 %v1000, 7
        %v1002 = vsub.s32 0, %v1001
        %v1003 = vrot.slane %v921, %v1002
        %vm1004 = vcmp.eq.s32.totalorder %v924, %v1003
        %vm1005 = vcmp.eq.s32.totalorder %v927, %v1003
        %vm1006 = vcmp.eq.s32.totalorder %v930, %v1003
        %vm1007 = vcmp.eq.s32.totalorder %v933, %v1003
        %vm1008 = vcmp.eq.s32.totalorder %v936, %v1003
        %vm1009 = vcmp.eq.s32.totalorder %v939, %v1003
        %vm1010 = vcmp.eq.s32.totalorder %v942, %v1003
        %vm1011 = vcmp.eq.s32.totalorder %v945, %v1003
        %vm1012 = vcmp.eq.s32.totalorder %v948, %v1003
        %vm1013 = vcmp.eq.s32.totalorder %v951, %v1003
        %vm1014 = vcmp.eq.s32.totalorder %v954, %v1003
        %vm1015 = vcmp.eq.s32.totalorder %v957, %v1003
        %vm1016 = vcmp.eq.s32.totalorder %v960, %v1003
        %vm1017 = vcmp.eq.s32.totalorder %v963, %v1003
        %vm1018 = vcmp.eq.s32.totalorder %v966, %v1003
        %vm1019 = vcmp.eq.s32.totalorder %v969, %v1003
        %vm1020 = vcmp.eq.s32.totalorder %v972, %v1003
        %vm1021 = vcmp.eq.s32.totalorder %v975, %v1003
        %vm1022 = vcmp.eq.s32.totalorder %v978, %v1003
        %vm1023 = vcmp.eq.s32.totalorder %v981, %v1003
        %vm1024 = vcmp.eq.s32.totalorder %v984, %v1003
        %vm1025 = vcmp.eq.s32.totalorder %v987, %v1003
        %vm1026 = vcmp.eq.s32.totalorder %v990, %v1003
        %vm1027 = vcmp.eq.s32.totalorder %v993, %v1003
        %vm1028 = vcmp.eq.s32.totalorder %v996, %v1003
        %vm1029 = vcmp.eq.s32.totalorder %v999, %v1003
        %v1030 = vsel %vm1004, %v895, 1e+30
        %v1031 = vsel %vm1005, %v896, 1e+30
        %v1032 = vsel %vm1006, %v897, 1e+30
        %v1033 = vsel %vm1007, %v898, 1e+30
        %v1034 = vsel %vm1008, %v899, 1e+30
        %v1035 = vsel %vm1009, %v900, 1e+30
        %v1036 = vsel %vm1010, %v901, 1e+30
        %v1037 = vsel %vm1011, %v902, 1e+30
        %v1038 = vsel %vm1012, %v903, 1e+30
        %v1039 = vsel %vm1013, %v904, 1e+30
        %v1040 = vsel %vm1014, %v905, 1e+30
        %v1041 = vsel %vm1015, %v906, 1e+30
        %v1042 = vsel %vm1016, %v907, 1e+30
        %v1043 = vsel %vm1017, %v908, 1e+30
        %v1044 = vsel %vm1018, %v909, 1e+30
        %v1045 = vsel %vm1019, %v910, 1e+30
        %v1046 = vsel %vm1020, %v911, 1e+30
        %v1047 = vsel %vm1021, %v912, 1e+30
        %v1048 = vsel %vm1022, %v913, 1e+30
        %v1049 = vsel %vm1023, %v914, 1e+30
        %v1050 = vsel %vm1024, %v915, 1e+30
        %v1051 = vsel %vm1025, %v916, 1e+30
        %v1052 = vsel %vm1026, %v917, 1e+30
        %v1053 = vsel %vm1027, %v918, 1e+30
        %v1054 = vsel %vm1028, %v919, 1e+30
        %v1055 = vsel %vm1029, %v920, 1e+30
        %1056 = vmin.xlane.f32.xlu0 %v1030
        %v1057 = vpop.xlane.xlu0 %1056
        %1058 = vmin.xlane.f32.xlu0 %v1031
        %v1059 = vpop.xlane.xlu0 %1058
        %1060 = vmin.xlane.f32.xlu0 %v1032
        %v1061 = vpop.xlane.xlu0 %1060
        %1062 = vmin.xlane.f32.xlu0 %v1033
        %v1063 = vpop.xlane.xlu0 %1062
        %1064 = vmin.xlane.f32.xlu0 %v1034
        %v1065 = vpop.xlane.xlu0 %1064
        %1066 = vmin.xlane.f32.xlu0 %v1035
        %v1067 = vpop.xlane.xlu0 %1066
        %1068 = vmin.xlane.f32.xlu0 %v1036
        %v1069 = vpop.xlane.xlu0 %1068
        %1070 = vmin.xlane.f32.xlu0 %v1037
        %v1071 = vpop.xlane.xlu0 %1070
        %1072 = vmin.xlane.f32.xlu0 %v1038
        %v1073 = vpop.xlane.xlu0 %1072
        %1074 = vmin.xlane.f32.xlu0 %v1039
        %v1075 = vpop.xlane.xlu0 %1074
        %1076 = vmin.xlane.f32.xlu0 %v1040
        %v1077 = vpop.xlane.xlu0 %1076
        %1078 = vmin.xlane.f32.xlu0 %v1041
        %v1079 = vpop.xlane.xlu0 %1078
        %1080 = vmin.xlane.f32.xlu0 %v1042
        %v1081 = vpop.xlane.xlu0 %1080
        %1082 = vmin.xlane.f32.xlu0 %v1043
        %v1083 = vpop.xlane.xlu0 %1082
        %1084 = vmin.xlane.f32.xlu0 %v1044
        %v1085 = vpop.xlane.xlu0 %1084
        %1086 = vmin.xlane.f32.xlu0 %v1045
        %v1087 = vpop.xlane.xlu0 %1086
        %1088 = vmin.xlane.f32.xlu0 %v1046
        %v1089 = vpop.xlane.xlu0 %1088
        %1090 = vmin.xlane.f32.xlu0 %v1047
        %v1091 = vpop.xlane.xlu0 %1090
        %1092 = vmin.xlane.f32.xlu0 %v1048
        %v1093 = vpop.xlane.xlu0 %1092
        %1094 = vmin.xlane.f32.xlu0 %v1049
        %v1095 = vpop.xlane.xlu0 %1094
        %1096 = vmin.xlane.f32.xlu0 %v1050
        %v1097 = vpop.xlane.xlu0 %1096
        %1098 = vmin.xlane.f32.xlu0 %v1051
        %v1099 = vpop.xlane.xlu0 %1098
        %1100 = vmin.xlane.f32.xlu0 %v1052
        %v1101 = vpop.xlane.xlu0 %1100
        %1102 = vmin.xlane.f32.xlu0 %v1053
        %v1103 = vpop.xlane.xlu0 %1102
        %1104 = vmin.xlane.f32.xlu0 %v1054
        %v1105 = vpop.xlane.xlu0 %1104
        %1106 = vmin.xlane.f32.xlu0 %v1055
        %v1107 = vpop.xlane.xlu0 %1106
        %vm1108 = vcmp.eq.f32.partialorder %v1030, %v1057
        %vm1109 = vcmp.eq.f32.partialorder %v1031, %v1059
        %vm1110 = vcmp.eq.f32.partialorder %v1032, %v1061
        %vm1111 = vcmp.eq.f32.partialorder %v1033, %v1063
        %vm1112 = vcmp.eq.f32.partialorder %v1034, %v1065
        %vm1113 = vcmp.eq.f32.partialorder %v1035, %v1067
        %vm1114 = vcmp.eq.f32.partialorder %v1036, %v1069
        %vm1115 = vcmp.eq.f32.partialorder %v1037, %v1071
        %vm1116 = vcmp.eq.f32.partialorder %v1038, %v1073
        %vm1117 = vcmp.eq.f32.partialorder %v1039, %v1075
        %vm1118 = vcmp.eq.f32.partialorder %v1040, %v1077
        %vm1119 = vcmp.eq.f32.partialorder %v1041, %v1079
        %vm1120 = vcmp.eq.f32.partialorder %v1042, %v1081
        %vm1121 = vcmp.eq.f32.partialorder %v1043, %v1083
        %vm1122 = vcmp.eq.f32.partialorder %v1044, %v1085
        %vm1123 = vcmp.eq.f32.partialorder %v1045, %v1087
        %vm1124 = vcmp.eq.f32.partialorder %v1046, %v1089
        %vm1125 = vcmp.eq.f32.partialorder %v1047, %v1091
        %vm1126 = vcmp.eq.f32.partialorder %v1048, %v1093
        %vm1127 = vcmp.eq.f32.partialorder %v1049, %v1095
        %vm1128 = vcmp.eq.f32.partialorder %v1050, %v1097
        %vm1129 = vcmp.eq.f32.partialorder %v1051, %v1099
        %vm1130 = vcmp.eq.f32.partialorder %v1052, %v1101
        %vm1131 = vcmp.eq.f32.partialorder %v1053, %v1103
        %vm1132 = vcmp.eq.f32.partialorder %v1054, %v1105
        %vm1133 = vcmp.eq.f32.partialorder %v1055, %v1107
        %vm1134 = vcmp.ge.f32.partialorder %v1057, 1e+30
        %vm1135 = vcmp.ge.f32.partialorder %v1059, 1e+30
        %vm1136 = vcmp.ge.f32.partialorder %v1061, 1e+30
        %vm1137 = vcmp.ge.f32.partialorder %v1063, 1e+30
        %vm1138 = vcmp.ge.f32.partialorder %v1065, 1e+30
        %vm1139 = vcmp.ge.f32.partialorder %v1067, 1e+30
        %vm1140 = vcmp.ge.f32.partialorder %v1069, 1e+30
        %vm1141 = vcmp.ge.f32.partialorder %v1071, 1e+30
        %vm1142 = vcmp.ge.f32.partialorder %v1073, 1e+30
        %vm1143 = vcmp.ge.f32.partialorder %v1075, 1e+30
        %vm1144 = vcmp.ge.f32.partialorder %v1077, 1e+30
        %vm1145 = vcmp.ge.f32.partialorder %v1079, 1e+30
        %vm1146 = vcmp.ge.f32.partialorder %v1081, 1e+30
        %vm1147 = vcmp.ge.f32.partialorder %v1083, 1e+30
        %vm1148 = vcmp.ge.f32.partialorder %v1085, 1e+30
        %vm1149 = vcmp.ge.f32.partialorder %v1087, 1e+30
        %vm1150 = vcmp.ge.f32.partialorder %v1089, 1e+30
        %vm1151 = vcmp.ge.f32.partialorder %v1091, 1e+30
        %vm1152 = vcmp.ge.f32.partialorder %v1093, 1e+30
        %vm1153 = vcmp.ge.f32.partialorder %v1095, 1e+30
        %vm1154 = vcmp.ge.f32.partialorder %v1097, 1e+30
        %vm1155 = vcmp.ge.f32.partialorder %v1099, 1e+30
        %vm1156 = vcmp.ge.f32.partialorder %v1101, 1e+30
        %vm1157 = vcmp.ge.f32.partialorder %v1103, 1e+30
        %vm1158 = vcmp.ge.f32.partialorder %v1105, 1e+30
        %vm1159 = vcmp.ge.f32.partialorder %v1107, 1e+30
        %v1160 = vmax.f32 %v1057, 1e-16
        %v1161 = vmax.f32 %v1059, 1e-16
        %v1162 = vmax.f32 %v1061, 1e-16
        %v1163 = vmax.f32 %v1063, 1e-16
        %v1164 = vmax.f32 %v1065, 1e-16
        %v1165 = vmax.f32 %v1067, 1e-16
        %v1166 = vmax.f32 %v1069, 1e-16
        %v1167 = vmax.f32 %v1071, 1e-16
        %v1168 = vmax.f32 %v1073, 1e-16
        %v1169 = vmax.f32 %v1075, 1e-16
        %v1170 = vmax.f32 %v1077, 1e-16
        %v1171 = vmax.f32 %v1079, 1e-16
        %v1172 = vmax.f32 %v1081, 1e-16
        %v1173 = vmax.f32 %v1083, 1e-16
        %v1174 = vmax.f32 %v1085, 1e-16
        %v1175 = vmax.f32 %v1087, 1e-16
        %v1176 = vmax.f32 %v1089, 1e-16
        %v1177 = vmax.f32 %v1091, 1e-16
        %v1178 = vmax.f32 %v1093, 1e-16
        %v1179 = vmax.f32 %v1095, 1e-16
        %v1180 = vmax.f32 %v1097, 1e-16
        %v1181 = vmax.f32 %v1099, 1e-16
        %v1182 = vmax.f32 %v1101, 1e-16
        %v1183 = vmax.f32 %v1103, 1e-16
        %v1184 = vmax.f32 %v1105, 1e-16
        %v1185 = vmax.f32 %v1107, 1e-16
        %v1186 = vrcp.pop %v1160
        %v1187 = vrcp.pop %v1161
        %v1188 = vrcp.pop %v1162
        %v1189 = vrcp.pop %v1163
        %v1190 = vrcp.pop %v1164
        %v1191 = vrcp.pop %v1165
        %v1192 = vrcp.pop %v1166
        %v1193 = vrcp.pop %v1167
        %v1194 = vrcp.pop %v1168
        %v1195 = vrcp.pop %v1169
        %v1196 = vrcp.pop %v1170
        %v1197 = vrcp.pop %v1171
        %v1198 = vrcp.pop %v1172
        %v1199 = vrcp.pop %v1173
        %v1200 = vrcp.pop %v1174
        %v1201 = vrcp.pop %v1175
        %v1202 = vrcp.pop %v1176
        %v1203 = vrcp.pop %v1177
        %v1204 = vrcp.pop %v1178
        %v1205 = vrcp.pop %v1179
        %v1206 = vrcp.pop %v1180
        %v1207 = vrcp.pop %v1181
        %v1208 = vrcp.pop %v1182
        %v1209 = vrcp.pop %v1183
        %v1210 = vrcp.pop %v1184
        %v1211 = vrcp.pop %v1185
        %v1212 = vsel %vm1134, 0.0, %v1186
        %v1213 = vsel %vm1135, 0.0, %v1187
        %v1214 = vsel %vm1136, 0.0, %v1188
        %v1215 = vsel %vm1137, 0.0, %v1189
        %v1216 = vsel %vm1138, 0.0, %v1190
        %v1217 = vsel %vm1139, 0.0, %v1191
        %v1218 = vsel %vm1140, 0.0, %v1192
        %v1219 = vsel %vm1141, 0.0, %v1193
        %v1220 = vsel %vm1142, 0.0, %v1194
        %v1221 = vsel %vm1143, 0.0, %v1195
        %v1222 = vsel %vm1144, 0.0, %v1196
        %v1223 = vsel %vm1145, 0.0, %v1197
        %v1224 = vsel %vm1146, 0.0, %v1198
        %v1225 = vsel %vm1147, 0.0, %v1199
        %v1226 = vsel %vm1148, 0.0, %v1200
        %v1227 = vsel %vm1149, 0.0, %v1201
        %v1228 = vsel %vm1150, 0.0, %v1202
        %v1229 = vsel %vm1151, 0.0, %v1203
        %v1230 = vsel %vm1152, 0.0, %v1204
        %v1231 = vsel %vm1153, 0.0, %v1205
        %v1232 = vsel %vm1154, 0.0, %v1206
        %v1233 = vsel %vm1155, 0.0, %v1207
        %v1234 = vsel %vm1156, 0.0, %v1208
        %v1235 = vsel %vm1157, 0.0, %v1209
        %v1236 = vsel %vm1158, 0.0, %v1210
        %v1237 = vsel %vm1159, 0.0, %v1211
        %v1238 = vadd.f32 %v1212, 0.0
        %v1239 = vadd.f32 %v1213, 0.0
        %v1240 = vadd.f32 %v1214, 0.0
        %v1241 = vadd.f32 %v1215, 0.0
        %v1242 = vadd.f32 %v1216, 0.0
        %v1243 = vadd.f32 %v1217, 0.0
        %v1244 = vadd.f32 %v1218, 0.0
        %v1245 = vadd.f32 %v1219, 0.0
        %v1246 = vadd.f32 %v1220, 0.0
        %v1247 = vadd.f32 %v1221, 0.0
        %v1248 = vadd.f32 %v1222, 0.0
        %v1249 = vadd.f32 %v1223, 0.0
        %v1250 = vadd.f32 %v1224, 0.0
        %v1251 = vadd.f32 %v1225, 0.0
        %v1252 = vadd.f32 %v1226, 0.0
        %v1253 = vadd.f32 %v1227, 0.0
        %v1254 = vadd.f32 %v1228, 0.0
        %v1255 = vadd.f32 %v1229, 0.0
        %v1256 = vadd.f32 %v1230, 0.0
        %v1257 = vadd.f32 %v1231, 0.0
        %v1258 = vadd.f32 %v1232, 0.0
        %v1259 = vadd.f32 %v1233, 0.0
        %v1260 = vadd.f32 %v1234, 0.0
        %v1261 = vadd.f32 %v1235, 0.0
        %v1262 = vadd.f32 %v1236, 0.0
        %v1263 = vadd.f32 %v1237, 0.0
        %v1264 = vsel %vm1108, %v1238, 0.0
        %v1265 = vsel %vm1109, %v1239, 0.0
        %v1266 = vsel %vm1110, %v1240, 0.0
        %v1267 = vsel %vm1111, %v1241, 0.0
        %v1268 = vsel %vm1112, %v1242, 0.0
        %v1269 = vsel %vm1113, %v1243, 0.0
        %v1270 = vsel %vm1114, %v1244, 0.0
        %v1271 = vsel %vm1115, %v1245, 0.0
        %v1272 = vsel %vm1116, %v1246, 0.0
        %v1273 = vsel %vm1117, %v1247, 0.0
        %v1274 = vsel %vm1118, %v1248, 0.0
        %v1275 = vsel %vm1119, %v1249, 0.0
        %v1276 = vsel %vm1120, %v1250, 0.0
        %v1277 = vsel %vm1121, %v1251, 0.0
        %v1278 = vsel %vm1122, %v1252, 0.0
        %v1279 = vsel %vm1123, %v1253, 0.0
        %v1280 = vsel %vm1124, %v1254, 0.0
        %v1281 = vsel %vm1125, %v1255, 0.0
        %v1282 = vsel %vm1126, %v1256, 0.0
        %v1283 = vsel %vm1127, %v1257, 0.0
        %v1284 = vsel %vm1128, %v1258, 0.0
        %v1285 = vsel %vm1129, %v1259, 0.0
        %v1286 = vsel %vm1130, %v1260, 0.0
        %v1287 = vsel %vm1131, %v1261, 0.0
        %v1288 = vsel %vm1132, %v1262, 0.0
        %v1289 = vsel %vm1133, %v1263, 0.0
        %v1290 = vsel %vm1108, 1e+30, %v1030
        %v1291 = vsel %vm1109, 1e+30, %v1031
        %v1292 = vsel %vm1110, 1e+30, %v1032
        %v1293 = vsel %vm1111, 1e+30, %v1033
        %v1294 = vsel %vm1112, 1e+30, %v1034
        %v1295 = vsel %vm1113, 1e+30, %v1035
        %v1296 = vsel %vm1114, 1e+30, %v1036
        %v1297 = vsel %vm1115, 1e+30, %v1037
        %v1298 = vsel %vm1116, 1e+30, %v1038
        %v1299 = vsel %vm1117, 1e+30, %v1039
        %v1300 = vsel %vm1118, 1e+30, %v1040
        %v1301 = vsel %vm1119, 1e+30, %v1041
        %v1302 = vsel %vm1120, 1e+30, %v1042
        %v1303 = vsel %vm1121, 1e+30, %v1043
        %v1304 = vsel %vm1122, 1e+30, %v1044
        %v1305 = vsel %vm1123, 1e+30, %v1045
        %v1306 = vsel %vm1124, 1e+30, %v1046
        %v1307 = vsel %vm1125, 1e+30, %v1047
        %v1308 = vsel %vm1126, 1e+30, %v1048
        %v1309 = vsel %vm1127, 1e+30, %v1049
        %v1310 = vsel %vm1128, 1e+30, %v1050
        %v1311 = vsel %vm1129, 1e+30, %v1051
        %v1312 = vsel %vm1130, 1e+30, %v1052
        %v1313 = vsel %vm1131, 1e+30, %v1053
        %v1314 = vsel %vm1132, 1e+30, %v1054
        %v1315 = vsel %vm1133, 1e+30, %v1055
        %1316 = vmin.xlane.f32.xlu0 %v1290
        %v1317 = vpop.xlane.xlu0 %1316
        %1318 = vmin.xlane.f32.xlu0 %v1291
        %v1319 = vpop.xlane.xlu0 %1318
        %1320 = vmin.xlane.f32.xlu0 %v1292
        %v1321 = vpop.xlane.xlu0 %1320
        %1322 = vmin.xlane.f32.xlu0 %v1293
        %v1323 = vpop.xlane.xlu0 %1322
        %1324 = vmin.xlane.f32.xlu0 %v1294
        %v1325 = vpop.xlane.xlu0 %1324
        %1326 = vmin.xlane.f32.xlu0 %v1295
        %v1327 = vpop.xlane.xlu0 %1326
        %1328 = vmin.xlane.f32.xlu0 %v1296
        %v1329 = vpop.xlane.xlu0 %1328
        %1330 = vmin.xlane.f32.xlu0 %v1297
        %v1331 = vpop.xlane.xlu0 %1330
        %1332 = vmin.xlane.f32.xlu0 %v1298
        %v1333 = vpop.xlane.xlu0 %1332
        %1334 = vmin.xlane.f32.xlu0 %v1299
        %v1335 = vpop.xlane.xlu0 %1334
        %1336 = vmin.xlane.f32.xlu0 %v1300
        %v1337 = vpop.xlane.xlu0 %1336
        %1338 = vmin.xlane.f32.xlu0 %v1301
        %v1339 = vpop.xlane.xlu0 %1338
        %1340 = vmin.xlane.f32.xlu0 %v1302
        %v1341 = vpop.xlane.xlu0 %1340
        %1342 = vmin.xlane.f32.xlu0 %v1303
        %v1343 = vpop.xlane.xlu0 %1342
        %1344 = vmin.xlane.f32.xlu0 %v1304
        %v1345 = vpop.xlane.xlu0 %1344
        %1346 = vmin.xlane.f32.xlu0 %v1305
        %v1347 = vpop.xlane.xlu0 %1346
        %1348 = vmin.xlane.f32.xlu0 %v1306
        %v1349 = vpop.xlane.xlu0 %1348
        %1350 = vmin.xlane.f32.xlu0 %v1307
        %v1351 = vpop.xlane.xlu0 %1350
        %1352 = vmin.xlane.f32.xlu0 %v1308
        %v1353 = vpop.xlane.xlu0 %1352
        %1354 = vmin.xlane.f32.xlu0 %v1309
        %v1355 = vpop.xlane.xlu0 %1354
        %1356 = vmin.xlane.f32.xlu0 %v1310
        %v1357 = vpop.xlane.xlu0 %1356
        %1358 = vmin.xlane.f32.xlu0 %v1311
        %v1359 = vpop.xlane.xlu0 %1358
        %1360 = vmin.xlane.f32.xlu0 %v1312
        %v1361 = vpop.xlane.xlu0 %1360
        %1362 = vmin.xlane.f32.xlu0 %v1313
        %v1363 = vpop.xlane.xlu0 %1362
        %1364 = vmin.xlane.f32.xlu0 %v1314
        %v1365 = vpop.xlane.xlu0 %1364
        %1366 = vmin.xlane.f32.xlu0 %v1315
        %v1367 = vpop.xlane.xlu0 %1366
        %vm1368 = vcmp.eq.f32.partialorder %v1290, %v1317
        %vm1369 = vcmp.eq.f32.partialorder %v1291, %v1319
        %vm1370 = vcmp.eq.f32.partialorder %v1292, %v1321
        %vm1371 = vcmp.eq.f32.partialorder %v1293, %v1323
        %vm1372 = vcmp.eq.f32.partialorder %v1294, %v1325
        %vm1373 = vcmp.eq.f32.partialorder %v1295, %v1327
        %vm1374 = vcmp.eq.f32.partialorder %v1296, %v1329
        %vm1375 = vcmp.eq.f32.partialorder %v1297, %v1331
        %vm1376 = vcmp.eq.f32.partialorder %v1298, %v1333
        %vm1377 = vcmp.eq.f32.partialorder %v1299, %v1335
        %vm1378 = vcmp.eq.f32.partialorder %v1300, %v1337
        %vm1379 = vcmp.eq.f32.partialorder %v1301, %v1339
        %vm1380 = vcmp.eq.f32.partialorder %v1302, %v1341
        %vm1381 = vcmp.eq.f32.partialorder %v1303, %v1343
        %vm1382 = vcmp.eq.f32.partialorder %v1304, %v1345
        %vm1383 = vcmp.eq.f32.partialorder %v1305, %v1347
        %vm1384 = vcmp.eq.f32.partialorder %v1306, %v1349
        %vm1385 = vcmp.eq.f32.partialorder %v1307, %v1351
        %vm1386 = vcmp.eq.f32.partialorder %v1308, %v1353
        %vm1387 = vcmp.eq.f32.partialorder %v1309, %v1355
        %vm1388 = vcmp.eq.f32.partialorder %v1310, %v1357
        %vm1389 = vcmp.eq.f32.partialorder %v1311, %v1359
        %vm1390 = vcmp.eq.f32.partialorder %v1312, %v1361
        %vm1391 = vcmp.eq.f32.partialorder %v1313, %v1363
        %vm1392 = vcmp.eq.f32.partialorder %v1314, %v1365
        %vm1393 = vcmp.eq.f32.partialorder %v1315, %v1367
        %vm1394 = vcmp.ge.f32.partialorder %v1317, 1e+30
        %vm1395 = vcmp.ge.f32.partialorder %v1319, 1e+30
        %vm1396 = vcmp.ge.f32.partialorder %v1321, 1e+30
        %vm1397 = vcmp.ge.f32.partialorder %v1323, 1e+30
        %vm1398 = vcmp.ge.f32.partialorder %v1325, 1e+30
        %vm1399 = vcmp.ge.f32.partialorder %v1327, 1e+30
        %vm1400 = vcmp.ge.f32.partialorder %v1329, 1e+30
        %vm1401 = vcmp.ge.f32.partialorder %v1331, 1e+30
        %vm1402 = vcmp.ge.f32.partialorder %v1333, 1e+30
        %vm1403 = vcmp.ge.f32.partialorder %v1335, 1e+30
        %vm1404 = vcmp.ge.f32.partialorder %v1337, 1e+30
        %vm1405 = vcmp.ge.f32.partialorder %v1339, 1e+30
        %vm1406 = vcmp.ge.f32.partialorder %v1341, 1e+30
        %vm1407 = vcmp.ge.f32.partialorder %v1343, 1e+30
        %vm1408 = vcmp.ge.f32.partialorder %v1345, 1e+30
        %vm1409 = vcmp.ge.f32.partialorder %v1347, 1e+30
        %vm1410 = vcmp.ge.f32.partialorder %v1349, 1e+30
        %vm1411 = vcmp.ge.f32.partialorder %v1351, 1e+30
        %vm1412 = vcmp.ge.f32.partialorder %v1353, 1e+30
        %vm1413 = vcmp.ge.f32.partialorder %v1355, 1e+30
        %vm1414 = vcmp.ge.f32.partialorder %v1357, 1e+30
        %vm1415 = vcmp.ge.f32.partialorder %v1359, 1e+30
        %vm1416 = vcmp.ge.f32.partialorder %v1361, 1e+30
        %vm1417 = vcmp.ge.f32.partialorder %v1363, 1e+30
        %vm1418 = vcmp.ge.f32.partialorder %v1365, 1e+30
        %vm1419 = vcmp.ge.f32.partialorder %v1367, 1e+30
        %v1420 = vmax.f32 %v1317, 1e-16
        %v1421 = vmax.f32 %v1319, 1e-16
        %v1422 = vmax.f32 %v1321, 1e-16
        %v1423 = vmax.f32 %v1323, 1e-16
        %v1424 = vmax.f32 %v1325, 1e-16
        %v1425 = vmax.f32 %v1327, 1e-16
        %v1426 = vmax.f32 %v1329, 1e-16
        %v1427 = vmax.f32 %v1331, 1e-16
        %v1428 = vmax.f32 %v1333, 1e-16
        %v1429 = vmax.f32 %v1335, 1e-16
        %v1430 = vmax.f32 %v1337, 1e-16
        %v1431 = vmax.f32 %v1339, 1e-16
        %v1432 = vmax.f32 %v1341, 1e-16
        %v1433 = vmax.f32 %v1343, 1e-16
        %v1434 = vmax.f32 %v1345, 1e-16
        %v1435 = vmax.f32 %v1347, 1e-16
        %v1436 = vmax.f32 %v1349, 1e-16
        %v1437 = vmax.f32 %v1351, 1e-16
        %v1438 = vmax.f32 %v1353, 1e-16
        %v1439 = vmax.f32 %v1355, 1e-16
        %v1440 = vmax.f32 %v1357, 1e-16
        %v1441 = vmax.f32 %v1359, 1e-16
        %v1442 = vmax.f32 %v1361, 1e-16
        %v1443 = vmax.f32 %v1363, 1e-16
        %v1444 = vmax.f32 %v1365, 1e-16
        %v1445 = vmax.f32 %v1367, 1e-16
        %v1446 = vrcp.pop %v1420
        %v1447 = vrcp.pop %v1421
        %v1448 = vrcp.pop %v1422
        %v1449 = vrcp.pop %v1423
        %v1450 = vrcp.pop %v1424
        %v1451 = vrcp.pop %v1425
        %v1452 = vrcp.pop %v1426
        %v1453 = vrcp.pop %v1427
        %v1454 = vrcp.pop %v1428
        %v1455 = vrcp.pop %v1429
        %v1456 = vrcp.pop %v1430
        %v1457 = vrcp.pop %v1431
        %v1458 = vrcp.pop %v1432
        %v1459 = vrcp.pop %v1433
        %v1460 = vrcp.pop %v1434
        %v1461 = vrcp.pop %v1435
        %v1462 = vrcp.pop %v1436
        %v1463 = vrcp.pop %v1437
        %v1464 = vrcp.pop %v1438
        %v1465 = vrcp.pop %v1439
        %v1466 = vrcp.pop %v1440
        %v1467 = vrcp.pop %v1441
        %v1468 = vrcp.pop %v1442
        %v1469 = vrcp.pop %v1443
        %v1470 = vrcp.pop %v1444
        %v1471 = vrcp.pop %v1445
        %v1472 = vsel %vm1394, 0.0, %v1446
        %v1473 = vsel %vm1395, 0.0, %v1447
        %v1474 = vsel %vm1396, 0.0, %v1448
        %v1475 = vsel %vm1397, 0.0, %v1449
        %v1476 = vsel %vm1398, 0.0, %v1450
        %v1477 = vsel %vm1399, 0.0, %v1451
        %v1478 = vsel %vm1400, 0.0, %v1452
        %v1479 = vsel %vm1401, 0.0, %v1453
        %v1480 = vsel %vm1402, 0.0, %v1454
        %v1481 = vsel %vm1403, 0.0, %v1455
        %v1482 = vsel %vm1404, 0.0, %v1456
        %v1483 = vsel %vm1405, 0.0, %v1457
        %v1484 = vsel %vm1406, 0.0, %v1458
        %v1485 = vsel %vm1407, 0.0, %v1459
        %v1486 = vsel %vm1408, 0.0, %v1460
        %v1487 = vsel %vm1409, 0.0, %v1461
        %v1488 = vsel %vm1410, 0.0, %v1462
        %v1489 = vsel %vm1411, 0.0, %v1463
        %v1490 = vsel %vm1412, 0.0, %v1464
        %v1491 = vsel %vm1413, 0.0, %v1465
        %v1492 = vsel %vm1414, 0.0, %v1466
        %v1493 = vsel %vm1415, 0.0, %v1467
        %v1494 = vsel %vm1416, 0.0, %v1468
        %v1495 = vsel %vm1417, 0.0, %v1469
        %v1496 = vsel %vm1418, 0.0, %v1470
        %v1497 = vsel %vm1419, 0.0, %v1471
        %v1498 = vadd.f32 %v1264, %v1472
        %v1499 = vadd.f32 %v1265, %v1473
        %v1500 = vadd.f32 %v1266, %v1474
        %v1501 = vadd.f32 %v1267, %v1475
        %v1502 = vadd.f32 %v1268, %v1476
        %v1503 = vadd.f32 %v1269, %v1477
        %v1504 = vadd.f32 %v1270, %v1478
        %v1505 = vadd.f32 %v1271, %v1479
        %v1506 = vadd.f32 %v1272, %v1480
        %v1507 = vadd.f32 %v1273, %v1481
        %v1508 = vadd.f32 %v1274, %v1482
        %v1509 = vadd.f32 %v1275, %v1483
        %v1510 = vadd.f32 %v1276, %v1484
        %v1511 = vadd.f32 %v1277, %v1485
        %v1512 = vadd.f32 %v1278, %v1486
        %v1513 = vadd.f32 %v1279, %v1487
        %v1514 = vadd.f32 %v1280, %v1488
        %v1515 = vadd.f32 %v1281, %v1489
        %v1516 = vadd.f32 %v1282, %v1490
        %v1517 = vadd.f32 %v1283, %v1491
        %v1518 = vadd.f32 %v1284, %v1492
        %v1519 = vadd.f32 %v1285, %v1493
        %v1520 = vadd.f32 %v1286, %v1494
        %v1521 = vadd.f32 %v1287, %v1495
        %v1522 = vadd.f32 %v1288, %v1496
        %v1523 = vadd.f32 %v1289, %v1497
        %v1524 = vsel %vm1368, %v1498, %v1264
        %v1525 = vsel %vm1369, %v1499, %v1265
        %v1526 = vsel %vm1370, %v1500, %v1266
        %v1527 = vsel %vm1371, %v1501, %v1267
        %v1528 = vsel %vm1372, %v1502, %v1268
        %v1529 = vsel %vm1373, %v1503, %v1269
        %v1530 = vsel %vm1374, %v1504, %v1270
        %v1531 = vsel %vm1375, %v1505, %v1271
        %v1532 = vsel %vm1376, %v1506, %v1272
        %v1533 = vsel %vm1377, %v1507, %v1273
        %v1534 = vsel %vm1378, %v1508, %v1274
        %v1535 = vsel %vm1379, %v1509, %v1275
        %v1536 = vsel %vm1380, %v1510, %v1276
        %v1537 = vsel %vm1381, %v1511, %v1277
        %v1538 = vsel %vm1382, %v1512, %v1278
        %v1539 = vsel %vm1383, %v1513, %v1279
        %v1540 = vsel %vm1384, %v1514, %v1280
        %v1541 = vsel %vm1385, %v1515, %v1281
        %v1542 = vsel %vm1386, %v1516, %v1282
        %v1543 = vsel %vm1387, %v1517, %v1283
        %v1544 = vsel %vm1388, %v1518, %v1284
        %v1545 = vsel %vm1389, %v1519, %v1285
        %v1546 = vsel %vm1390, %v1520, %v1286
        %v1547 = vsel %vm1391, %v1521, %v1287
        %v1548 = vsel %vm1392, %v1522, %v1288
        %v1549 = vsel %vm1393, %v1523, %v1289
        %v1550 = vsel %vm1368, 1e+30, %v1290
        %v1551 = vsel %vm1369, 1e+30, %v1291
        %v1552 = vsel %vm1370, 1e+30, %v1292
        %v1553 = vsel %vm1371, 1e+30, %v1293
        %v1554 = vsel %vm1372, 1e+30, %v1294
        %v1555 = vsel %vm1373, 1e+30, %v1295
        %v1556 = vsel %vm1374, 1e+30, %v1296
        %v1557 = vsel %vm1375, 1e+30, %v1297
        %v1558 = vsel %vm1376, 1e+30, %v1298
        %v1559 = vsel %vm1377, 1e+30, %v1299
        %v1560 = vsel %vm1378, 1e+30, %v1300
        %v1561 = vsel %vm1379, 1e+30, %v1301
        %v1562 = vsel %vm1380, 1e+30, %v1302
        %v1563 = vsel %vm1381, 1e+30, %v1303
        %v1564 = vsel %vm1382, 1e+30, %v1304
        %v1565 = vsel %vm1383, 1e+30, %v1305
        %v1566 = vsel %vm1384, 1e+30, %v1306
        %v1567 = vsel %vm1385, 1e+30, %v1307
        %v1568 = vsel %vm1386, 1e+30, %v1308
        %v1569 = vsel %vm1387, 1e+30, %v1309
        %v1570 = vsel %vm1388, 1e+30, %v1310
        %v1571 = vsel %vm1389, 1e+30, %v1311
        %v1572 = vsel %vm1390, 1e+30, %v1312
        %v1573 = vsel %vm1391, 1e+30, %v1313
        %v1574 = vsel %vm1392, 1e+30, %v1314
        %v1575 = vsel %vm1393, 1e+30, %v1315
        %1576 = vmin.xlane.f32.xlu0 %v1550
        %v1577 = vpop.xlane.xlu0 %1576
        %1578 = vmin.xlane.f32.xlu0 %v1551
        %v1579 = vpop.xlane.xlu0 %1578
        %1580 = vmin.xlane.f32.xlu0 %v1552
        %v1581 = vpop.xlane.xlu0 %1580
        %1582 = vmin.xlane.f32.xlu0 %v1553
        %v1583 = vpop.xlane.xlu0 %1582
        %1584 = vmin.xlane.f32.xlu0 %v1554
        %v1585 = vpop.xlane.xlu0 %1584
        %1586 = vmin.xlane.f32.xlu0 %v1555
        %v1587 = vpop.xlane.xlu0 %1586
        %1588 = vmin.xlane.f32.xlu0 %v1556
        %v1589 = vpop.xlane.xlu0 %1588
        %1590 = vmin.xlane.f32.xlu0 %v1557
        %v1591 = vpop.xlane.xlu0 %1590
        %1592 = vmin.xlane.f32.xlu0 %v1558
        %v1593 = vpop.xlane.xlu0 %1592
        %1594 = vmin.xlane.f32.xlu0 %v1559
        %v1595 = vpop.xlane.xlu0 %1594
        %1596 = vmin.xlane.f32.xlu0 %v1560
        %v1597 = vpop.xlane.xlu0 %1596
        %1598 = vmin.xlane.f32.xlu0 %v1561
        %v1599 = vpop.xlane.xlu0 %1598
        %1600 = vmin.xlane.f32.xlu0 %v1562
        %v1601 = vpop.xlane.xlu0 %1600
        %1602 = vmin.xlane.f32.xlu0 %v1563
        %v1603 = vpop.xlane.xlu0 %1602
        %1604 = vmin.xlane.f32.xlu0 %v1564
        %v1605 = vpop.xlane.xlu0 %1604
        %1606 = vmin.xlane.f32.xlu0 %v1565
        %v1607 = vpop.xlane.xlu0 %1606
        %1608 = vmin.xlane.f32.xlu0 %v1566
        %v1609 = vpop.xlane.xlu0 %1608
        %1610 = vmin.xlane.f32.xlu0 %v1567
        %v1611 = vpop.xlane.xlu0 %1610
        %1612 = vmin.xlane.f32.xlu0 %v1568
        %v1613 = vpop.xlane.xlu0 %1612
        %1614 = vmin.xlane.f32.xlu0 %v1569
        %v1615 = vpop.xlane.xlu0 %1614
        %1616 = vmin.xlane.f32.xlu0 %v1570
        %v1617 = vpop.xlane.xlu0 %1616
        %1618 = vmin.xlane.f32.xlu0 %v1571
        %v1619 = vpop.xlane.xlu0 %1618
        %1620 = vmin.xlane.f32.xlu0 %v1572
        %v1621 = vpop.xlane.xlu0 %1620
        %1622 = vmin.xlane.f32.xlu0 %v1573
        %v1623 = vpop.xlane.xlu0 %1622
        %1624 = vmin.xlane.f32.xlu0 %v1574
        %v1625 = vpop.xlane.xlu0 %1624
        %1626 = vmin.xlane.f32.xlu0 %v1575
        %v1627 = vpop.xlane.xlu0 %1626
        %vm1628 = vcmp.eq.f32.partialorder %v1550, %v1577
        %vm1629 = vcmp.eq.f32.partialorder %v1551, %v1579
        %vm1630 = vcmp.eq.f32.partialorder %v1552, %v1581
        %vm1631 = vcmp.eq.f32.partialorder %v1553, %v1583
        %vm1632 = vcmp.eq.f32.partialorder %v1554, %v1585
        %vm1633 = vcmp.eq.f32.partialorder %v1555, %v1587
        %vm1634 = vcmp.eq.f32.partialorder %v1556, %v1589
        %vm1635 = vcmp.eq.f32.partialorder %v1557, %v1591
        %vm1636 = vcmp.eq.f32.partialorder %v1558, %v1593
        %vm1637 = vcmp.eq.f32.partialorder %v1559, %v1595
        %vm1638 = vcmp.eq.f32.partialorder %v1560, %v1597
        %vm1639 = vcmp.eq.f32.partialorder %v1561, %v1599
        %vm1640 = vcmp.eq.f32.partialorder %v1562, %v1601
        %vm1641 = vcmp.eq.f32.partialorder %v1563, %v1603
        %vm1642 = vcmp.eq.f32.partialorder %v1564, %v1605
        %vm1643 = vcmp.eq.f32.partialorder %v1565, %v1607
        %vm1644 = vcmp.eq.f32.partialorder %v1566, %v1609
        %vm1645 = vcmp.eq.f32.partialorder %v1567, %v1611
        %vm1646 = vcmp.eq.f32.partialorder %v1568, %v1613
        %vm1647 = vcmp.eq.f32.partialorder %v1569, %v1615
        %vm1648 = vcmp.eq.f32.partialorder %v1570, %v1617
        %vm1649 = vcmp.eq.f32.partialorder %v1571, %v1619
        %vm1650 = vcmp.eq.f32.partialorder %v1572, %v1621
        %vm1651 = vcmp.eq.f32.partialorder %v1573, %v1623
        %vm1652 = vcmp.eq.f32.partialorder %v1574, %v1625
        %vm1653 = vcmp.eq.f32.partialorder %v1575, %v1627
        %vm1654 = vcmp.ge.f32.partialorder %v1577, 1e+30
        %vm1655 = vcmp.ge.f32.partialorder %v1579, 1e+30
        %vm1656 = vcmp.ge.f32.partialorder %v1581, 1e+30
        %vm1657 = vcmp.ge.f32.partialorder %v1583, 1e+30
        %vm1658 = vcmp.ge.f32.partialorder %v1585, 1e+30
        %vm1659 = vcmp.ge.f32.partialorder %v1587, 1e+30
        %vm1660 = vcmp.ge.f32.partialorder %v1589, 1e+30
        %vm1661 = vcmp.ge.f32.partialorder %v1591, 1e+30
        %vm1662 = vcmp.ge.f32.partialorder %v1593, 1e+30
        %vm1663 = vcmp.ge.f32.partialorder %v1595, 1e+30
        %vm1664 = vcmp.ge.f32.partialorder %v1597, 1e+30
        %vm1665 = vcmp.ge.f32.partialorder %v1599, 1e+30
        %vm1666 = vcmp.ge.f32.partialorder %v1601, 1e+30
        %vm1667 = vcmp.ge.f32.partialorder %v1603, 1e+30
        %vm1668 = vcmp.ge.f32.partialorder %v1605, 1e+30
        %vm1669 = vcmp.ge.f32.partialorder %v1607, 1e+30
        %vm1670 = vcmp.ge.f32.partialorder %v1609, 1e+30
        %vm1671 = vcmp.ge.f32.partialorder %v1611, 1e+30
        %vm1672 = vcmp.ge.f32.partialorder %v1613, 1e+30
        %vm1673 = vcmp.ge.f32.partialorder %v1615, 1e+30
        %vm1674 = vcmp.ge.f32.partialorder %v1617, 1e+30
        %vm1675 = vcmp.ge.f32.partialorder %v1619, 1e+30
        %vm1676 = vcmp.ge.f32.partialorder %v1621, 1e+30
        %vm1677 = vcmp.ge.f32.partialorder %v1623, 1e+30
        %vm1678 = vcmp.ge.f32.partialorder %v1625, 1e+30
        %vm1679 = vcmp.ge.f32.partialorder %v1627, 1e+30
        %v1680 = vmax.f32 %v1577, 1e-16
        %v1681 = vmax.f32 %v1579, 1e-16
        %v1682 = vmax.f32 %v1581, 1e-16
        %v1683 = vmax.f32 %v1583, 1e-16
        %v1684 = vmax.f32 %v1585, 1e-16
        %v1685 = vmax.f32 %v1587, 1e-16
        %v1686 = vmax.f32 %v1589, 1e-16
        %v1687 = vmax.f32 %v1591, 1e-16
        %v1688 = vmax.f32 %v1593, 1e-16
        %v1689 = vmax.f32 %v1595, 1e-16
        %v1690 = vmax.f32 %v1597, 1e-16
        %v1691 = vmax.f32 %v1599, 1e-16
        %v1692 = vmax.f32 %v1601, 1e-16
        %v1693 = vmax.f32 %v1603, 1e-16
        %v1694 = vmax.f32 %v1605, 1e-16
        %v1695 = vmax.f32 %v1607, 1e-16
        %v1696 = vmax.f32 %v1609, 1e-16
        %v1697 = vmax.f32 %v1611, 1e-16
        %v1698 = vmax.f32 %v1613, 1e-16
        %v1699 = vmax.f32 %v1615, 1e-16
        %v1700 = vmax.f32 %v1617, 1e-16
        %v1701 = vmax.f32 %v1619, 1e-16
        %v1702 = vmax.f32 %v1621, 1e-16
        %v1703 = vmax.f32 %v1623, 1e-16
        %v1704 = vmax.f32 %v1625, 1e-16
        %v1705 = vmax.f32 %v1627, 1e-16
        %v1706 = vrcp.pop %v1680
        %v1707 = vrcp.pop %v1681
        %v1708 = vrcp.pop %v1682
        %v1709 = vrcp.pop %v1683
        %v1710 = vrcp.pop %v1684
        %v1711 = vrcp.pop %v1685
        %v1712 = vrcp.pop %v1686
        %v1713 = vrcp.pop %v1687
        %v1714 = vrcp.pop %v1688
        %v1715 = vrcp.pop %v1689
        %v1716 = vrcp.pop %v1690
        %v1717 = vrcp.pop %v1691
        %v1718 = vrcp.pop %v1692
        %v1719 = vrcp.pop %v1693
        %v1720 = vrcp.pop %v1694
        %v1721 = vrcp.pop %v1695
        %v1722 = vrcp.pop %v1696
        %v1723 = vrcp.pop %v1697
        %v1724 = vrcp.pop %v1698
        %v1725 = vrcp.pop %v1699
        %v1726 = vrcp.pop %v1700
        %v1727 = vrcp.pop %v1701
        %v1728 = vrcp.pop %v1702
        %v1729 = vrcp.pop %v1703
        %v1730 = vrcp.pop %v1704
        %v1731 = vrcp.pop %v1705
        %v1732 = vsel %vm1654, 0.0, %v1706
        %v1733 = vsel %vm1655, 0.0, %v1707
        %v1734 = vsel %vm1656, 0.0, %v1708
        %v1735 = vsel %vm1657, 0.0, %v1709
        %v1736 = vsel %vm1658, 0.0, %v1710
        %v1737 = vsel %vm1659, 0.0, %v1711
        %v1738 = vsel %vm1660, 0.0, %v1712
        %v1739 = vsel %vm1661, 0.0, %v1713
        %v1740 = vsel %vm1662, 0.0, %v1714
        %v1741 = vsel %vm1663, 0.0, %v1715
        %v1742 = vsel %vm1664, 0.0, %v1716
        %v1743 = vsel %vm1665, 0.0, %v1717
        %v1744 = vsel %vm1666, 0.0, %v1718
        %v1745 = vsel %vm1667, 0.0, %v1719
        %v1746 = vsel %vm1668, 0.0, %v1720
        %v1747 = vsel %vm1669, 0.0, %v1721
        %v1748 = vsel %vm1670, 0.0, %v1722
        %v1749 = vsel %vm1671, 0.0, %v1723
        %v1750 = vsel %vm1672, 0.0, %v1724
        %v1751 = vsel %vm1673, 0.0, %v1725
        %v1752 = vsel %vm1674, 0.0, %v1726
        %v1753 = vsel %vm1675, 0.0, %v1727
        %v1754 = vsel %vm1676, 0.0, %v1728
        %v1755 = vsel %vm1677, 0.0, %v1729
        %v1756 = vsel %vm1678, 0.0, %v1730
        %v1757 = vsel %vm1679, 0.0, %v1731
        %v1758 = vadd.f32 %v1524, %v1732
        %v1759 = vadd.f32 %v1525, %v1733
        %v1760 = vadd.f32 %v1526, %v1734
        %v1761 = vadd.f32 %v1527, %v1735
        %v1762 = vadd.f32 %v1528, %v1736
        %v1763 = vadd.f32 %v1529, %v1737
        %v1764 = vadd.f32 %v1530, %v1738
        %v1765 = vadd.f32 %v1531, %v1739
        %v1766 = vadd.f32 %v1532, %v1740
        %v1767 = vadd.f32 %v1533, %v1741
        %v1768 = vadd.f32 %v1534, %v1742
        %v1769 = vadd.f32 %v1535, %v1743
        %v1770 = vadd.f32 %v1536, %v1744
        %v1771 = vadd.f32 %v1537, %v1745
        %v1772 = vadd.f32 %v1538, %v1746
        %v1773 = vadd.f32 %v1539, %v1747
        %v1774 = vadd.f32 %v1540, %v1748
        %v1775 = vadd.f32 %v1541, %v1749
        %v1776 = vadd.f32 %v1542, %v1750
        %v1777 = vadd.f32 %v1543, %v1751
        %v1778 = vadd.f32 %v1544, %v1752
        %v1779 = vadd.f32 %v1545, %v1753
        %v1780 = vadd.f32 %v1546, %v1754
        %v1781 = vadd.f32 %v1547, %v1755
        %v1782 = vadd.f32 %v1548, %v1756
        %v1783 = vadd.f32 %v1549, %v1757
        %v1784 = vsel %vm1628, %v1758, %v1524
        %v1785 = vsel %vm1629, %v1759, %v1525
        %v1786 = vsel %vm1630, %v1760, %v1526
        %v1787 = vsel %vm1631, %v1761, %v1527
        %v1788 = vsel %vm1632, %v1762, %v1528
        %v1789 = vsel %vm1633, %v1763, %v1529
        %v1790 = vsel %vm1634, %v1764, %v1530
        %v1791 = vsel %vm1635, %v1765, %v1531
        %v1792 = vsel %vm1636, %v1766, %v1532
        %v1793 = vsel %vm1637, %v1767, %v1533
        %v1794 = vsel %vm1638, %v1768, %v1534
        %v1795 = vsel %vm1639, %v1769, %v1535
        %v1796 = vsel %vm1640, %v1770, %v1536
        %v1797 = vsel %vm1641, %v1771, %v1537
        %v1798 = vsel %vm1642, %v1772, %v1538
        %v1799 = vsel %vm1643, %v1773, %v1539
        %v1800 = vsel %vm1644, %v1774, %v1540
        %v1801 = vsel %vm1645, %v1775, %v1541
        %v1802 = vsel %vm1646, %v1776, %v1542
        %v1803 = vsel %vm1647, %v1777, %v1543
        %v1804 = vsel %vm1648, %v1778, %v1544
        %v1805 = vsel %vm1649, %v1779, %v1545
        %v1806 = vsel %vm1650, %v1780, %v1546
        %v1807 = vsel %vm1651, %v1781, %v1547
        %v1808 = vsel %vm1652, %v1782, %v1548
        %v1809 = vsel %vm1653, %v1783, %v1549
        %1810 = vadd.xlane.f32.xlu0 %v1784
        %v1811 = vpop.xlane.xlu0 %1810
        %1812 = vadd.xlane.f32.xlu0 %v1785
        %v1813 = vpop.xlane.xlu0 %1812
        %1814 = vadd.xlane.f32.xlu0 %v1786
        %v1815 = vpop.xlane.xlu0 %1814
        %1816 = vadd.xlane.f32.xlu0 %v1787
        %v1817 = vpop.xlane.xlu0 %1816
        %1818 = vadd.xlane.f32.xlu0 %v1788
        %v1819 = vpop.xlane.xlu0 %1818
        %1820 = vadd.xlane.f32.xlu0 %v1789
        %v1821 = vpop.xlane.xlu0 %1820
        %1822 = vadd.xlane.f32.xlu0 %v1790
        %v1823 = vpop.xlane.xlu0 %1822
        %1824 = vadd.xlane.f32.xlu0 %v1791
        %v1825 = vpop.xlane.xlu0 %1824
        %1826 = vadd.xlane.f32.xlu0 %v1792
        %v1827 = vpop.xlane.xlu0 %1826
        %1828 = vadd.xlane.f32.xlu0 %v1793
        %v1829 = vpop.xlane.xlu0 %1828
        %1830 = vadd.xlane.f32.xlu0 %v1794
        %v1831 = vpop.xlane.xlu0 %1830
        %1832 = vadd.xlane.f32.xlu0 %v1795
        %v1833 = vpop.xlane.xlu0 %1832
        %1834 = vadd.xlane.f32.xlu0 %v1796
        %v1835 = vpop.xlane.xlu0 %1834
        %1836 = vadd.xlane.f32.xlu0 %v1797
        %v1837 = vpop.xlane.xlu0 %1836
        %1838 = vadd.xlane.f32.xlu0 %v1798
        %v1839 = vpop.xlane.xlu0 %1838
        %1840 = vadd.xlane.f32.xlu0 %v1799
        %v1841 = vpop.xlane.xlu0 %1840
        %1842 = vadd.xlane.f32.xlu0 %v1800
        %v1843 = vpop.xlane.xlu0 %1842
        %1844 = vadd.xlane.f32.xlu0 %v1801
        %v1845 = vpop.xlane.xlu0 %1844
        %1846 = vadd.xlane.f32.xlu0 %v1802
        %v1847 = vpop.xlane.xlu0 %1846
        %1848 = vadd.xlane.f32.xlu0 %v1803
        %v1849 = vpop.xlane.xlu0 %1848
        %1850 = vadd.xlane.f32.xlu0 %v1804
        %v1851 = vpop.xlane.xlu0 %1850
        %1852 = vadd.xlane.f32.xlu0 %v1805
        %v1853 = vpop.xlane.xlu0 %1852
        %1854 = vadd.xlane.f32.xlu0 %v1806
        %v1855 = vpop.xlane.xlu0 %1854
        %1856 = vadd.xlane.f32.xlu0 %v1807
        %v1857 = vpop.xlane.xlu0 %1856
        %1858 = vadd.xlane.f32.xlu0 %v1808
        %v1859 = vpop.xlane.xlu0 %1858
        %1860 = vadd.xlane.f32.xlu0 %v1809
        %v1861 = vpop.xlane.xlu0 %1860
        %v1862 = vpack.c.bf16 %v1785, %v1784
        %v1863 = vpack.c.bf16 %v1787, %v1786
        %v1864 = vpack.c.bf16 %v1789, %v1788
        %v1865 = vpack.c.bf16 %v1791, %v1790
        %v1866 = vpack.c.bf16 %v1793, %v1792
        %v1867 = vpack.c.bf16 %v1795, %v1794
        %v1868 = vpack.c.bf16 %v1797, %v1796
        %v1869 = vpack.c.bf16 %v1799, %v1798
        %v1870 = vpack.c.bf16 %v1801, %v1800
        %v1871 = vpack.c.bf16 %v1803, %v1802
        %v1872 = vpack.c.bf16 %v1805, %v1804
        %v1873 = vpack.c.bf16 %v1807, %v1806
        %v1874 = vpack.c.bf16 %v1809, %v1808
        %v1875 = vld [vmem:[%s5] sm:$0xf]
        %v1876 = vld [vmem:[%s5 + $0x4] sm:$0xf]
        %v1877 = vld [vmem:[%s5 + $0x8] sm:$0xf]
        %v1878 = vld [vmem:[%s5 + $0xc] sm:$0xf]
        %v1879 = vld [vmem:[%s5 + $0x10] sm:$0xf]
        %v1880 = vld [vmem:[%s5 + $0x14] sm:$0xf]
        %v1881 = vld [vmem:[%s5 + $0x18] sm:$0xf]
        %v1882 = vld [vmem:[%s5 + $0x1c] sm:$0xf]
        %v1883 = vld [vmem:[%s5 + $0x20] sm:$0xf]
        %v1884 = vld [vmem:[%s5 + $0x24] sm:$0xf]
        %v1885 = vld [vmem:[%s5 + $0x28] sm:$0xf]
        %v1886 = vld [vmem:[%s5 + $0x2c] sm:$0xf]
        %v1887 = vld [vmem:[%s5 + $0x30] sm:$0xf]
        %v1888 = vld [vmem:[%s5 + $0x34] sm:$0xf]
        %v1889 = vld [vmem:[%s5 + $0x38] sm:$0xf]
        %v1890 = vld [vmem:[%s5 + $0x3c] sm:$0xf]
        %v1907 = vunpack.c.l.b16 %v1875
        %v1908 = vunpack.c.l.b16 %v1876
        %v1909 = vunpack.c.l.b16 %v1877
        %v1910 = vunpack.c.l.b16 %v1878
        %v1911 = vunpack.c.l.b16 %v1879
        %v1912 = vunpack.c.l.b16 %v1880
        %v1913 = vunpack.c.l.b16 %v1881
        %v1914 = vunpack.c.l.b16 %v1882
        %v1915 = vunpack.c.l.b16 %v1883
        %v1916 = vunpack.c.l.b16 %v1884
        %v1917 = vunpack.c.l.b16 %v1885
        %v1918 = vunpack.c.l.b16 %v1886
        %v1919 = vunpack.c.l.b16 %v1887
        %v1920 = vunpack.c.l.b16 %v1888
        %v1921 = vunpack.c.l.b16 %v1889
        %v1922 = vunpack.c.l.b16 %v1890
        %v1923 = vpack.c.b16 %v1908, %v1907
        %v1924 = vpack.c.b16 %v1910, %v1909
        %v1925 = vpack.c.b16 %v1912, %v1911
        %v1926 = vpack.c.b16 %v1914, %v1913
        %v1927 = vpack.c.b16 %v1916, %v1915
        %v1928 = vpack.c.b16 %v1918, %v1917
        %v1929 = vpack.c.b16 %v1920, %v1919
        %v1930 = vpack.c.b16 %v1922, %v1921
        %1939 = vmatprep.subr.bf16.mxu0 0
        %1940 = vmatpush1.bf16.msra.mxu0 %v1923
        %1941 = vmatprep.subr.bf16.mxu0 0
        %1942 = vmatpush1.bf16.msra.mxu0 %v1924
        %1943 = vmatprep.subr.bf16.mxu0 0
        %1944 = vmatpush1.bf16.msra.mxu0 %v1925
        %1945 = vmatprep.subr.bf16.mxu0 0
        %1946 = vmatpush1.bf16.msra.mxu0 %v1926
        %1947 = vmatprep.subr.bf16.mxu0 0
        %1948 = vmatpush1.bf16.msra.mxu0 %v1927
        %1949 = vmatprep.subr.bf16.mxu0 0
        %1950 = vmatpush1.bf16.msra.mxu0 %v1928
        %1951 = vmatprep.subr.bf16.mxu0 0
        %1952 = vmatpush1.bf16.msra.mxu0 %v1929
        %1953 = vmatprep.subr.bf16.mxu0 0
        %1954 = vmatpush1.bf16.msra.mxu0 %v1930
        %1955 = vmatprep.subr.bf16.mxu0 0
        %1956 = vmatpush1.bf16.msra.mxu0 0
        %1957 = vmatprep.subr.bf16.mxu0 0
        %1958 = vmatpush1.bf16.msra.mxu0 0
        %1959 = vmatprep.subr.bf16.mxu0 0
        %1960 = vmatpush1.bf16.msra.mxu0 0
        %1961 = vmatprep.subr.bf16.mxu0 0
        %1962 = vmatpush1.bf16.msra.mxu0 0
        %1963 = vmatprep.subr.bf16.mxu0 0
        %1964 = vmatpush1.bf16.msra.mxu0 0
        %1965 = vmatprep.subr.bf16.mxu0 0
        %1966 = vmatpush1.bf16.msra.mxu0 0
        %1967 = vmatprep.subr.bf16.mxu0 0
        %1968 = vmatpush1.bf16.msra.mxu0 0
        %1969 = vmatprep.subr.bf16.mxu0 0
        %1970 = vmatpush1.bf16.msra.mxu0 0
        %1971 = vmatprep.mubr.bf16.mxu0 0
        %1972 = vmatmul.mubr.bf16.gmra.mrb[0].mxu0 %v1862
        %v1973 = vpop.f32.mrb[0].mxu0
        %v1974 = vadd.f32 0.0, %v1973
        %v1975 = vpop.f32.mrb[0].mxu0
        %v1976 = vpop.f32.mrb[0].mxu0
        %v1977 = vadd.f32 0.0, %v1976
        %v1978 = vpop.f32.mrb[0].mxu0
        %1979 = vmatprep.mubr.bf16.mxu0 0
        %1980 = vmatmul.mubr.bf16.gmra.mrb[0].mxu0 %v1863
        %v1981 = vpop.f32.mrb[0].mxu0
        %v1982 = vadd.f32 0.0, %v1981
        %v1983 = vpop.f32.mrb[0].mxu0
        %v1984 = vpop.f32.mrb[0].mxu0
        %v1985 = vadd.f32 0.0, %v1984
        %v1986 = vpop.f32.mrb[0].mxu0
        %1987 = vmatprep.mubr.bf16.mxu0 0
        %1988 = vmatmul.mubr.bf16.gmra.mrb[0].mxu0 %v1864
        %v1989 = vpop.f32.mrb[0].mxu0
        %v1990 = vadd.f32 0.0, %v1989
        %v1991 = vpop.f32.mrb[0].mxu0
        %v1992 = vpop.f32.mrb[0].mxu0
        %v1993 = vadd.f32 0.0, %v1992
        %v1994 = vpop.f32.mrb[0].mxu0
        %1995 = vmatprep.mubr.bf16.mxu0 0
        %1996 = vmatmul.mubr.bf16.gmra.mrb[0].mxu0 %v1865
        %v1997 = vpop.f32.mrb[0].mxu0
        %v1998 = vadd.f32 0.0, %v1997
        %v1999 = vpop.f32.mrb[0].mxu0
        %v2000 = vpop.f32.mrb[0].mxu0
        %v2001 = vadd.f32 0.0, %v2000
        %v2002 = vpop.f32.mrb[0].mxu0
        %2003 = vmatprep.mubr.bf16.mxu0 0
        %2004 = vmatmul.mubr.bf16.gmra.mrb[0].mxu0 %v1866
        %v2005 = vpop.f32.mrb[0].mxu0
        %v2006 = vadd.f32 0.0, %v2005
        %v2007 = vpop.f32.mrb[0].mxu0
        %v2008 = vpop.f32.mrb[0].mxu0
        %v2009 = vadd.f32 0.0, %v2008
        %v2010 = vpop.f32.mrb[0].mxu0
        %2011 = vmatprep.mubr.bf16.mxu0 0
        %2012 = vmatmul.mubr.bf16.gmra.mrb[0].mxu0 %v1867
        %v2013 = vpop.f32.mrb[0].mxu0
        %v2014 = vadd.f32 0.0, %v2013
        %v2015 = vpop.f32.mrb[0].mxu0
        %v2016 = vpop.f32.mrb[0].mxu0
        %v2017 = vadd.f32 0.0, %v2016
        %v2018 = vpop.f32.mrb[0].mxu0
        %2019 = vmatprep.mubr.bf16.mxu0 0
        %2020 = vmatmul.mubr.bf16.gmra.mrb[0].mxu0 %v1868
        %v2021 = vpop.f32.mrb[0].mxu0
        %v2022 = vadd.f32 0.0, %v2021
        %v2023 = vpop.f32.mrb[0].mxu0
        %v2024 = vpop.f32.mrb[0].mxu0
        %v2025 = vadd.f32 0.0, %v2024
        %v2026 = vpop.f32.mrb[0].mxu0
        %2027 = vmatprep.mubr.bf16.mxu0 0
        %2028 = vmatmul.mubr.bf16.gmra.mrb[0].mxu0 %v1869
        %v2029 = vpop.f32.mrb[0].mxu0
        %v2030 = vadd.f32 0.0, %v2029
        %v2031 = vpop.f32.mrb[0].mxu0
        %v2032 = vpop.f32.mrb[0].mxu0
        %v2033 = vadd.f32 0.0, %v2032
        %v2034 = vpop.f32.mrb[0].mxu0
        %2035 = vmatprep.mubr.bf16.mxu0 0
        %2036 = vmatmul.mubr.bf16.gmra.mrb[0].mxu0 %v1870
        %v2037 = vpop.f32.mrb[0].mxu0
        %v2038 = vadd.f32 0.0, %v2037
        %v2039 = vpop.f32.mrb[0].mxu0
        %v2040 = vpop.f32.mrb[0].mxu0
        %v2041 = vadd.f32 0.0, %v2040
        %v2042 = vpop.f32.mrb[0].mxu0
        %2043 = vmatprep.mubr.bf16.mxu0 0
        %2044 = vmatmul.mubr.bf16.gmra.mrb[0].mxu0 %v1871
        %v2045 = vpop.f32.mrb[0].mxu0
        %v2046 = vadd.f32 0.0, %v2045
        %v2047 = vpop.f32.mrb[0].mxu0
        %v2048 = vpop.f32.mrb[0].mxu0
        %v2049 = vadd.f32 0.0, %v2048
        %v2050 = vpop.f32.mrb[0].mxu0
        %2051 = vmatprep.mubr.bf16.mxu0 0
        %2052 = vmatmul.mubr.bf16.gmra.mrb[0].mxu0 %v1872
        %v2053 = vpop.f32.mrb[0].mxu0
        %v2054 = vadd.f32 0.0, %v2053
        %v2055 = vpop.f32.mrb[0].mxu0
        %v2056 = vpop.f32.mrb[0].mxu0
        %v2057 = vadd.f32 0.0, %v2056
        %v2058 = vpop.f32.mrb[0].mxu0
        %2059 = vmatprep.mubr.bf16.mxu0 0
        %2060 = vmatmul.mubr.bf16.gmra.mrb[0].mxu0 %v1873
        %v2061 = vpop.f32.mrb[0].mxu0
        %v2062 = vadd.f32 0.0, %v2061
        %v2063 = vpop.f32.mrb[0].mxu0
        %v2064 = vpop.f32.mrb[0].mxu0
        %v2065 = vadd.f32 0.0, %v2064
        %v2066 = vpop.f32.mrb[0].mxu0
        %2067 = vmatprep.mubr.bf16.mxu0 0
        %2068 = vmatmul.mubr.bf16.gmra.mrb[0].mxu0 %v1874
        %v2069 = vpop.f32.mrb[0].mxu0
        %v2070 = vadd.f32 0.0, %v2069
        %v2071 = vpop.f32.mrb[0].mxu0
        %v2072 = vpop.f32.mrb[0].mxu0
        %v2073 = vadd.f32 0.0, %v2072
        %v2074 = vpop.f32.mrb[0].mxu0
        %2075 = vdwg.mxu0
        %v2076 = vmax.f32 %v1811, 1e-16
        %v2077 = vmax.f32 %v1813, 1e-16
        %v2078 = vmax.f32 %v1815, 1e-16
        %v2079 = vmax.f32 %v1817, 1e-16
        %v2080 = vmax.f32 %v1819, 1e-16
        %v2081 = vmax.f32 %v1821, 1e-16
        %v2082 = vmax.f32 %v1823, 1e-16
        %v2083 = vmax.f32 %v1825, 1e-16
        %v2084 = vmax.f32 %v1827, 1e-16
        %v2085 = vmax.f32 %v1829, 1e-16
        %v2086 = vmax.f32 %v1831, 1e-16
        %v2087 = vmax.f32 %v1833, 1e-16
        %v2088 = vmax.f32 %v1835, 1e-16
        %v2089 = vmax.f32 %v1837, 1e-16
        %v2090 = vmax.f32 %v1839, 1e-16
        %v2091 = vmax.f32 %v1841, 1e-16
        %v2092 = vmax.f32 %v1843, 1e-16
        %v2093 = vmax.f32 %v1845, 1e-16
        %v2094 = vmax.f32 %v1847, 1e-16
        %v2095 = vmax.f32 %v1849, 1e-16
        %v2096 = vmax.f32 %v1851, 1e-16
        %v2097 = vmax.f32 %v1853, 1e-16
        %v2098 = vmax.f32 %v1855, 1e-16
        %v2099 = vmax.f32 %v1857, 1e-16
        %v2100 = vmax.f32 %v1859, 1e-16
        %v2101 = vmax.f32 %v1861, 1e-16
        %v2102 = vrcp.pop %v2076
        %v2103 = vrcp.pop %v2077
        %v2104 = vrcp.pop %v2078
        %v2105 = vrcp.pop %v2079
        %v2106 = vrcp.pop %v2080
        %v2107 = vrcp.pop %v2081
        %v2108 = vrcp.pop %v2082
        %v2109 = vrcp.pop %v2083
        %v2110 = vrcp.pop %v2084
        %v2111 = vrcp.pop %v2085
        %v2112 = vrcp.pop %v2086
        %v2113 = vrcp.pop %v2087
        %v2114 = vrcp.pop %v2088
        %v2115 = vrcp.pop %v2089
        %v2116 = vrcp.pop %v2090
        %v2117 = vrcp.pop %v2091
        %v2118 = vrcp.pop %v2092
        %v2119 = vrcp.pop %v2093
        %v2120 = vrcp.pop %v2094
        %v2121 = vrcp.pop %v2095
        %v2122 = vrcp.pop %v2096
        %v2123 = vrcp.pop %v2097
        %v2124 = vrcp.pop %v2098
        %v2125 = vrcp.pop %v2099
        %v2126 = vrcp.pop %v2100
        %v2127 = vrcp.pop %v2101
        %v2128 = vmul.f32 %v1974, %v2102
        %v2129 = vmul.f32 %v1977, %v2103
        %v2130 = vmul.f32 %v1982, %v2104
        %v2131 = vmul.f32 %v1985, %v2105
        %v2132 = vmul.f32 %v1990, %v2106
        %v2133 = vmul.f32 %v1993, %v2107
        %v2134 = vmul.f32 %v1998, %v2108
        %v2135 = vmul.f32 %v2001, %v2109
        %v2136 = vmul.f32 %v2006, %v2110
        %v2137 = vmul.f32 %v2009, %v2111
        %v2138 = vmul.f32 %v2014, %v2112
        %v2139 = vmul.f32 %v2017, %v2113
        %v2140 = vmul.f32 %v2022, %v2114
        %v2141 = vmul.f32 %v2025, %v2115
        %v2142 = vmul.f32 %v2030, %v2116
        %v2143 = vmul.f32 %v2033, %v2117
        %v2144 = vmul.f32 %v2038, %v2118
        %v2145 = vmul.f32 %v2041, %v2119
        %v2146 = vmul.f32 %v2046, %v2120
        %v2147 = vmul.f32 %v2049, %v2121
        %v2148 = vmul.f32 %v2054, %v2122
        %v2149 = vmul.f32 %v2057, %v2123
        %v2150 = vmul.f32 %v2062, %v2124
        %v2151 = vmul.f32 %v2065, %v2125
        %v2152 = vmul.f32 %v2070, %v2126
        %v2153 = vmul.f32 %v2073, %v2127
        %v2154 = vld [vmem:[%s375] sm:$0xf]
        %v2155 = vld [vmem:[%s375 + $0x4] sm:$0xf]
        %v2156 = vld [vmem:[%s375 + $0x8] sm:$0xf]
        %v2157 = vld [vmem:[%s375 + $0xc] sm:$0xf]
        %v2158 = vld [vmem:[%s375 + $0x10] sm:$0xf]
        %v2159 = vld [vmem:[%s375 + $0x14] sm:$0xf]
        %v2160 = vld [vmem:[%s375 + $0x18] sm:$0xf]
        %v2161 = vld [vmem:[%s375 + $0x1c] sm:$0xf]
        %v2162 = vld [vmem:[%s375 + $0x20] sm:$0xf]
        %v2163 = vld [vmem:[%s375 + $0x24] sm:$0xf]
        %v2164 = vld [vmem:[%s375 + $0x28] sm:$0xf]
        %v2165 = vld [vmem:[%s375 + $0x2c] sm:$0xf]
        %v2166 = vld [vmem:[%s375 + $0x30] sm:$0xf]
        %v2167 = vld [vmem:[%s375 + $0x34] sm:$0xf]
        %v2168 = vld [vmem:[%s375 + $0x38] sm:$0xf]
        %v2169 = vld [vmem:[%s375 + $0x3c] sm:$0xf]
        %v2170 = vld [vmem:[%s375 + $0x40] sm:$0xf]
        %v2171 = vld [vmem:[%s375 + $0x44] sm:$0xf]
        %v2172 = vld [vmem:[%s375 + $0x48] sm:$0xf]
        %v2173 = vld [vmem:[%s375 + $0x4c] sm:$0xf]
        %v2174 = vld [vmem:[%s375 + $0x50] sm:$0xf]
        %v2175 = vld [vmem:[%s375 + $0x54] sm:$0xf]
        %v2176 = vld [vmem:[%s375 + $0x58] sm:$0xf]
        %v2177 = vld [vmem:[%s375 + $0x5c] sm:$0xf]
        %v2178 = vld [vmem:[%s375 + $0x60] sm:$0xf]
        %v2179 = vld [vmem:[%s375 + $0x64] sm:$0xf]
        %v2180 = vunpack.c.l.bf16 %v2154
        %v2181 = vunpack.c.l.bf16 %v2155
        %v2182 = vunpack.c.l.bf16 %v2156
        %v2183 = vunpack.c.l.bf16 %v2157
        %v2184 = vunpack.c.l.bf16 %v2158
        %v2185 = vunpack.c.l.bf16 %v2159
        %v2186 = vunpack.c.l.bf16 %v2160
        %v2187 = vunpack.c.l.bf16 %v2161
        %v2188 = vunpack.c.l.bf16 %v2162
        %v2189 = vunpack.c.l.bf16 %v2163
        %v2190 = vunpack.c.l.bf16 %v2164
        %v2191 = vunpack.c.l.bf16 %v2165
        %v2192 = vunpack.c.l.bf16 %v2166
        %v2193 = vunpack.c.l.bf16 %v2167
        %v2194 = vunpack.c.l.bf16 %v2168
        %v2195 = vunpack.c.l.bf16 %v2169
        %v2196 = vunpack.c.l.bf16 %v2170
        %v2197 = vunpack.c.l.bf16 %v2171
        %v2198 = vunpack.c.l.bf16 %v2172
        %v2199 = vunpack.c.l.bf16 %v2173
        %v2200 = vunpack.c.l.bf16 %v2174
        %v2201 = vunpack.c.l.bf16 %v2175
        %v2202 = vunpack.c.l.bf16 %v2176
        %v2203 = vunpack.c.l.bf16 %v2177
        %v2204 = vunpack.c.l.bf16 %v2178
        %v2205 = vunpack.c.l.bf16 %v2179
        %v2206 = vadd.f32 %v2128, %v2180
        %v2207 = vadd.f32 %v2129, %v2181
        %v2208 = vadd.f32 %v2130, %v2182
        %v2209 = vadd.f32 %v2131, %v2183
        %v2210 = vadd.f32 %v2132, %v2184
        %v2211 = vadd.f32 %v2133, %v2185
        %v2212 = vadd.f32 %v2134, %v2186
        %v2213 = vadd.f32 %v2135, %v2187
        %v2214 = vadd.f32 %v2136, %v2188
        %v2215 = vadd.f32 %v2137, %v2189
        %v2216 = vadd.f32 %v2138, %v2190
        %v2217 = vadd.f32 %v2139, %v2191
        %v2218 = vadd.f32 %v2140, %v2192
        %v2219 = vadd.f32 %v2141, %v2193
        %v2220 = vadd.f32 %v2142, %v2194
        %v2221 = vadd.f32 %v2143, %v2195
        %v2222 = vadd.f32 %v2144, %v2196
        %v2223 = vadd.f32 %v2145, %v2197
        %v2224 = vadd.f32 %v2146, %v2198
        %v2225 = vadd.f32 %v2147, %v2199
        %v2226 = vadd.f32 %v2148, %v2200
        %v2227 = vadd.f32 %v2149, %v2201
        %v2228 = vadd.f32 %v2150, %v2202
        %v2229 = vadd.f32 %v2151, %v2203
        %v2230 = vadd.f32 %v2152, %v2204
        %v2231 = vadd.f32 %v2153, %v2205
        %v2232 = vpack.c.bf16 %v2207, %v2206
        %v2233 = vpack.c.bf16 %v2209, %v2208
        %v2234 = vpack.c.bf16 %v2211, %v2210
        %v2235 = vpack.c.bf16 %v2213, %v2212
        %v2236 = vpack.c.bf16 %v2215, %v2214
        %v2237 = vpack.c.bf16 %v2217, %v2216
        %v2238 = vpack.c.bf16 %v2219, %v2218
        %v2239 = vpack.c.bf16 %v2221, %v2220
        %v2240 = vpack.c.bf16 %v2223, %v2222
        %v2241 = vpack.c.bf16 %v2225, %v2224
        %v2242 = vpack.c.bf16 %v2227, %v2226
        %v2243 = vpack.c.bf16 %v2229, %v2228
        %v2244 = vpack.c.bf16 %v2231, %v2230
        %v2245 = vld [vmem:[%s7] sm:$0xf]
        %v2246 = vld [vmem:[%s7 + $0x4] sm:$0xf]
        %v2247 = vld [vmem:[%s7 + $0x8] sm:$0xf]
        %v2248 = vld [vmem:[%s7 + $0xc] sm:$0xf]
        %v2249 = vld [vmem:[%s7 + $0x10] sm:$0xf]
        %v2250 = vld [vmem:[%s7 + $0x14] sm:$0xf]
        %v2251 = vld [vmem:[%s7 + $0x18] sm:$0xf]
        %v2252 = vld [vmem:[%s7 + $0x1c] sm:$0xf]
        %v2253 = vld [vmem:[%s7 + $0x20] sm:$0xf]
        %v2254 = vld [vmem:[%s7 + $0x24] sm:$0xf]
        %v2255 = vld [vmem:[%s7 + $0x28] sm:$0xf]
        %v2256 = vld [vmem:[%s7 + $0x2c] sm:$0xf]
        %v2257 = vld [vmem:[%s7 + $0x30] sm:$0xf]
        %v2258 = vld [vmem:[%s7 + $0x34] sm:$0xf]
        %v2259 = vld [vmem:[%s7 + $0x38] sm:$0xf]
        %v2260 = vld [vmem:[%s7 + $0x3c] sm:$0xf]
        %v2261 = vld [vmem:[%s8] sm:$0x1]
        %v2263 = vlaneseq
        %v2264 = vshrl.u32 %v2263, 7
        %v2265 = vsub.s32 0, %v2264
        %v2266 = vrot.slane %v2261, %v2265
        %v2284 = vunpack.c.l.b16 %v2245
        %v2285 = vunpack.c.l.b16 %v2246
        %v2286 = vunpack.c.l.b16 %v2247
        %v2287 = vunpack.c.l.b16 %v2248
        %v2288 = vunpack.c.l.b16 %v2249
        %v2289 = vunpack.c.l.b16 %v2250
        %v2290 = vunpack.c.l.b16 %v2251
        %v2291 = vunpack.c.l.b16 %v2252
        %v2292 = vunpack.c.l.b16 %v2253
        %v2293 = vunpack.c.l.b16 %v2254
        %v2294 = vunpack.c.l.b16 %v2255
        %v2295 = vunpack.c.l.b16 %v2256
        %v2296 = vunpack.c.l.b16 %v2257
        %v2297 = vunpack.c.l.b16 %v2258
        %v2298 = vunpack.c.l.b16 %v2259
        %v2299 = vunpack.c.l.b16 %v2260
        %v2300 = vpack.c.b16 %v2285, %v2284
        %v2301 = vpack.c.b16 %v2287, %v2286
        %v2302 = vpack.c.b16 %v2289, %v2288
        %v2303 = vpack.c.b16 %v2291, %v2290
        %v2304 = vpack.c.b16 %v2293, %v2292
        %v2305 = vpack.c.b16 %v2295, %v2294
        %v2306 = vpack.c.b16 %v2297, %v2296
        %v2307 = vpack.c.b16 %v2299, %v2298
        %2316 = vmatprep.subr.bf16.mxu0 0
        %2317 = vmatpush1.bf16.msra.mxu0 %v2300
        %2318 = vmatprep.subr.bf16.mxu0 0
        %2319 = vmatpush1.bf16.msra.mxu0 %v2301
        %2320 = vmatprep.subr.bf16.mxu0 0
        %2321 = vmatpush1.bf16.msra.mxu0 %v2302
        %2322 = vmatprep.subr.bf16.mxu0 0
        %2323 = vmatpush1.bf16.msra.mxu0 %v2303
        %2324 = vmatprep.subr.bf16.mxu0 0
        %2325 = vmatpush1.bf16.msra.mxu0 %v2304
        %2326 = vmatprep.subr.bf16.mxu0 0
        %2327 = vmatpush1.bf16.msra.mxu0 %v2305
        %2328 = vmatprep.subr.bf16.mxu0 0
        %2329 = vmatpush1.bf16.msra.mxu0 %v2306
        %2330 = vmatprep.subr.bf16.mxu0 0
        %2331 = vmatpush1.bf16.msra.mxu0 %v2307
        %2332 = vmatprep.subr.bf16.mxu0 0
        %2333 = vmatpush1.bf16.msra.mxu0 0
        %2334 = vmatprep.subr.bf16.mxu0 0
        %2335 = vmatpush1.bf16.msra.mxu0 0
        %2336 = vmatprep.subr.bf16.mxu0 0
        %2337 = vmatpush1.bf16.msra.mxu0 0
        %2338 = vmatprep.subr.bf16.mxu0 0
        %2339 = vmatpush1.bf16.msra.mxu0 0
        %2340 = vmatprep.subr.bf16.mxu0 0
        %2341 = vmatpush1.bf16.msra.mxu0 0
        %2342 = vmatprep.subr.bf16.mxu0 0
        %2343 = vmatpush1.bf16.msra.mxu0 0
        %2344 = vmatprep.subr.bf16.mxu0 0
        %2345 = vmatpush1.bf16.msra.mxu0 0
        %2346 = vmatprep.subr.bf16.mxu0 0
        %2347 = vmatpush1.bf16.msra.mxu0 0
        %2348 = vmatprep.mubr.bf16.mxu0 0
        %2349 = vmatmul.mubr.bf16.gmra.mrb[0].mxu0 %v2232
        %v2350 = vpop.f32.mrb[0].mxu0
        %v2351 = vadd.f32 %v2266, %v2350
        %v2352 = vpop.f32.mrb[0].mxu0
        %v2353 = vpop.f32.mrb[0].mxu0
        %v2354 = vadd.f32 %v2266, %v2353
        %v2355 = vpop.f32.mrb[0].mxu0
        %2356 = vmatprep.mubr.bf16.mxu0 0
        %2357 = vmatmul.mubr.bf16.gmra.mrb[0].mxu0 %v2233
        %v2358 = vpop.f32.mrb[0].mxu0
        %v2359 = vadd.f32 %v2266, %v2358
        %v2360 = vpop.f32.mrb[0].mxu0
        %v2361 = vpop.f32.mrb[0].mxu0
        %v2362 = vadd.f32 %v2266, %v2361
        %v2363 = vpop.f32.mrb[0].mxu0
        %2364 = vmatprep.mubr.bf16.mxu0 0
        %2365 = vmatmul.mubr.bf16.gmra.mrb[0].mxu0 %v2234
        %v2366 = vpop.f32.mrb[0].mxu0
        %v2367 = vadd.f32 %v2266, %v2366
        %v2368 = vpop.f32.mrb[0].mxu0
        %v2369 = vpop.f32.mrb[0].mxu0
        %v2370 = vadd.f32 %v2266, %v2369
        %v2371 = vpop.f32.mrb[0].mxu0
        %2372 = vmatprep.mubr.bf16.mxu0 0
        %2373 = vmatmul.mubr.bf16.gmra.mrb[0].mxu0 %v2235
        %v2374 = vpop.f32.mrb[0].mxu0
        %v2375 = vadd.f32 %v2266, %v2374
        %v2376 = vpop.f32.mrb[0].mxu0
        %v2377 = vpop.f32.mrb[0].mxu0
        %v2378 = vadd.f32 %v2266, %v2377
        %v2379 = vpop.f32.mrb[0].mxu0
        %2380 = vmatprep.mubr.bf16.mxu0 0
        %2381 = vmatmul.mubr.bf16.gmra.mrb[0].mxu0 %v2236
        %v2382 = vpop.f32.mrb[0].mxu0
        %v2383 = vadd.f32 %v2266, %v2382
        %v2384 = vpop.f32.mrb[0].mxu0
        %v2385 = vpop.f32.mrb[0].mxu0
        %v2386 = vadd.f32 %v2266, %v2385
        %v2387 = vpop.f32.mrb[0].mxu0
        %2388 = vmatprep.mubr.bf16.mxu0 0
        %2389 = vmatmul.mubr.bf16.gmra.mrb[0].mxu0 %v2237
        %v2390 = vpop.f32.mrb[0].mxu0
        %v2391 = vadd.f32 %v2266, %v2390
        %v2392 = vpop.f32.mrb[0].mxu0
        %v2393 = vpop.f32.mrb[0].mxu0
        %v2394 = vadd.f32 %v2266, %v2393
        %v2395 = vpop.f32.mrb[0].mxu0
        %2396 = vmatprep.mubr.bf16.mxu0 0
        %2397 = vmatmul.mubr.bf16.gmra.mrb[0].mxu0 %v2238
        %v2398 = vpop.f32.mrb[0].mxu0
        %v2399 = vadd.f32 %v2266, %v2398
        %v2400 = vpop.f32.mrb[0].mxu0
        %v2401 = vpop.f32.mrb[0].mxu0
        %v2402 = vadd.f32 %v2266, %v2401
        %v2403 = vpop.f32.mrb[0].mxu0
        %2404 = vmatprep.mubr.bf16.mxu0 0
        %2405 = vmatmul.mubr.bf16.gmra.mrb[0].mxu0 %v2239
        %v2406 = vpop.f32.mrb[0].mxu0
        %v2407 = vadd.f32 %v2266, %v2406
        %v2408 = vpop.f32.mrb[0].mxu0
        %v2409 = vpop.f32.mrb[0].mxu0
        %v2410 = vadd.f32 %v2266, %v2409
        %v2411 = vpop.f32.mrb[0].mxu0
        %2412 = vmatprep.mubr.bf16.mxu0 0
        %2413 = vmatmul.mubr.bf16.gmra.mrb[0].mxu0 %v2240
        %v2414 = vpop.f32.mrb[0].mxu0
        %v2415 = vadd.f32 %v2266, %v2414
        %v2416 = vpop.f32.mrb[0].mxu0
        %v2417 = vpop.f32.mrb[0].mxu0
        %v2418 = vadd.f32 %v2266, %v2417
        %v2419 = vpop.f32.mrb[0].mxu0
        %2420 = vmatprep.mubr.bf16.mxu0 0
        %2421 = vmatmul.mubr.bf16.gmra.mrb[0].mxu0 %v2241
        %v2422 = vpop.f32.mrb[0].mxu0
        %v2423 = vadd.f32 %v2266, %v2422
        %v2424 = vpop.f32.mrb[0].mxu0
        %v2425 = vpop.f32.mrb[0].mxu0
        %v2426 = vadd.f32 %v2266, %v2425
        %v2427 = vpop.f32.mrb[0].mxu0
        %2428 = vmatprep.mubr.bf16.mxu0 0
        %2429 = vmatmul.mubr.bf16.gmra.mrb[0].mxu0 %v2242
        %v2430 = vpop.f32.mrb[0].mxu0
        %v2431 = vadd.f32 %v2266, %v2430
        %v2432 = vpop.f32.mrb[0].mxu0
        %v2433 = vpop.f32.mrb[0].mxu0
        %v2434 = vadd.f32 %v2266, %v2433
        %v2435 = vpop.f32.mrb[0].mxu0
        %2436 = vmatprep.mubr.bf16.mxu0 0
        %2437 = vmatmul.mubr.bf16.gmra.mrb[0].mxu0 %v2243
        %v2438 = vpop.f32.mrb[0].mxu0
        %v2439 = vadd.f32 %v2266, %v2438
        %v2440 = vpop.f32.mrb[0].mxu0
        %v2441 = vpop.f32.mrb[0].mxu0
        %v2442 = vadd.f32 %v2266, %v2441
        %v2443 = vpop.f32.mrb[0].mxu0
        %2444 = vmatprep.mubr.bf16.mxu0 0
        %2445 = vmatmul.mubr.bf16.gmra.mrb[0].mxu0 %v2244
        %v2446 = vpop.f32.mrb[0].mxu0
        %v2447 = vadd.f32 %v2266, %v2446
        %v2448 = vpop.f32.mrb[0].mxu0
        %v2449 = vpop.f32.mrb[0].mxu0
        %v2450 = vadd.f32 %v2266, %v2449
        %v2451 = vpop.f32.mrb[0].mxu0
        %2452 = vdwg.mxu0
        %v2453 = vmul.f32 %v2351, 0.2
        %v2454 = vmul.f32 %v2354, 0.2
        %v2455 = vmul.f32 %v2359, 0.2
        %v2456 = vmul.f32 %v2362, 0.2
        %v2457 = vmul.f32 %v2367, 0.2
        %v2458 = vmul.f32 %v2370, 0.2
        %v2459 = vmul.f32 %v2375, 0.2
        %v2460 = vmul.f32 %v2378, 0.2
        %v2461 = vmul.f32 %v2383, 0.2
        %v2462 = vmul.f32 %v2386, 0.2
        %v2463 = vmul.f32 %v2391, 0.2
        %v2464 = vmul.f32 %v2394, 0.2
        %v2465 = vmul.f32 %v2399, 0.2
        %v2466 = vmul.f32 %v2402, 0.2
        %v2467 = vmul.f32 %v2407, 0.2
        %v2468 = vmul.f32 %v2410, 0.2
        %v2469 = vmul.f32 %v2415, 0.2
        %v2470 = vmul.f32 %v2418, 0.2
        %v2471 = vmul.f32 %v2423, 0.2
        %v2472 = vmul.f32 %v2426, 0.2
        %v2473 = vmul.f32 %v2431, 0.2
        %v2474 = vmul.f32 %v2434, 0.2
        %v2475 = vmul.f32 %v2439, 0.2
        %v2476 = vmul.f32 %v2442, 0.2
        %v2477 = vmul.f32 %v2447, 0.2
        %v2478 = vmul.f32 %v2450, 0.2
        %v2479 = vmax.f32 %v2351, %v2453
        %v2480 = vmax.f32 %v2354, %v2454
        %v2481 = vmax.f32 %v2359, %v2455
        %v2482 = vmax.f32 %v2362, %v2456
        %v2483 = vmax.f32 %v2367, %v2457
        %v2484 = vmax.f32 %v2370, %v2458
        %v2485 = vmax.f32 %v2375, %v2459
        %v2486 = vmax.f32 %v2378, %v2460
        %v2487 = vmax.f32 %v2383, %v2461
        %v2488 = vmax.f32 %v2386, %v2462
        %v2489 = vmax.f32 %v2391, %v2463
        %v2490 = vmax.f32 %v2394, %v2464
        %v2491 = vmax.f32 %v2399, %v2465
        %v2492 = vmax.f32 %v2402, %v2466
        %v2493 = vmax.f32 %v2407, %v2467
        %v2494 = vmax.f32 %v2410, %v2468
        %v2495 = vmax.f32 %v2415, %v2469
        %v2496 = vmax.f32 %v2418, %v2470
        %v2497 = vmax.f32 %v2423, %v2471
        %v2498 = vmax.f32 %v2426, %v2472
        %v2499 = vmax.f32 %v2431, %v2473
        %v2500 = vmax.f32 %v2434, %v2474
        %v2501 = vmax.f32 %v2439, %v2475
        %v2502 = vmax.f32 %v2442, %v2476
        %v2503 = vmax.f32 %v2447, %v2477
        %v2504 = vmax.f32 %v2450, %v2478
        %2505 = vst [vmem:[%s358] sm:$0xff] %v2479
        %2506 = vst [vmem:[%s358 + $0x8] sm:$0xff] %v2480
        %2507 = vst [vmem:[%s358 + $0x10] sm:$0xff] %v2481
        %2508 = vst [vmem:[%s358 + $0x18] sm:$0xff] %v2482
        %2509 = vst [vmem:[%s358 + $0x20] sm:$0xff] %v2483
        %2510 = vst [vmem:[%s358 + $0x28] sm:$0xff] %v2484
        %2511 = vst [vmem:[%s358 + $0x30] sm:$0xff] %v2485
        %2512 = vst [vmem:[%s358 + $0x38] sm:$0xff] %v2486
        %2513 = vst [vmem:[%s358 + $0x40] sm:$0xff] %v2487
        %2514 = vst [vmem:[%s358 + $0x48] sm:$0xff] %v2488
        %2515 = vst [vmem:[%s358 + $0x50] sm:$0xff] %v2489
        %2516 = vst [vmem:[%s358 + $0x58] sm:$0xff] %v2490
        %2517 = vst [vmem:[%s358 + $0x60] sm:$0xff] %v2491
        %2518 = vst [vmem:[%s358 + $0x68] sm:$0xff] %v2492
        %2519 = vst [vmem:[%s358 + $0x70] sm:$0xff] %v2493
        %2520 = vst [vmem:[%s358 + $0x78] sm:$0xff] %v2494
        %2521 = vst [vmem:[%s358 + $0x80] sm:$0xff] %v2495
        %2522 = vst [vmem:[%s358 + $0x88] sm:$0xff] %v2496
        %2523 = vst [vmem:[%s358 + $0x90] sm:$0xff] %v2497
        %2524 = vst [vmem:[%s358 + $0x98] sm:$0xff] %v2498
        %2525 = vst [vmem:[%s358 + $0xa0] sm:$0xff] %v2499
        %2526 = vst [vmem:[%s358 + $0xa8] sm:$0xff] %v2500
        %2527 = vst [vmem:[%s358 + $0xb0] sm:$0xff] %v2501
        %2528 = vst [vmem:[%s358 + $0xb8] sm:$0xff] %v2502
        %2529 = vst [vmem:[%s358 + $0xc0] sm:$0xff] %v2503
        %2530 = vst [vmem:[%s358 + $0xc8] sm:$0xff] %v2504
        %s2531 = sand.u32 %s235, 1
        %s2532 = scalar_lea.sflag [#allocation3], %s2531
        %s2533 = sand.u32 %s235, 1
        %s2534 = smul.addr %s2533, 208
        %s2535 = scalar_lea.vmem [#allocation2], %s2534
        // Predicated region
        $region57: #{tpu_custom_call.1} parent=55 // pred_check
          %p2536 = pneg %p245
        $region58: #{tpu_custom_call.1} parent=55 // pred_check_branch
          %2538 = sbr.rel (%p2536) target = $region60
        $region59: #{tpu_custom_call.1} parent=55 // pred_region
          %s2539 = smul.u32 26, %s23
          %s2541 = ssub.s32 3328, 3328
          %2542 = vsyncadd %s2532, %s2541
          %s2543 = smul.addr %s2539, 128
          %s2544 = scalar_lea.hbm %s9, %s2543
          %s2545 = sshll.u32 %s2535, 4
          %s2546 = int_to_ptr.vmem [resolvable:$true] %s2545
          %2551 = dma.vmem_to_hbm [thread:$0]  %s2546, 3328, %s2544, %s2532, 128, 128, 8
        $region60: #{tpu_custom_call.1} parent=55 // pred_fallthru
          _
      $region56: #{tpu_custom_call.1} parent=5 // pred_fallthru
        _
      %p2552 = scmp.le.s32.totalorder 2, %s18
      // Predicated region
      $region61: #{tpu_custom_call.1} parent=5 // pred_check
        %p2553 = pneg %p2552
      $region62: #{tpu_custom_call.1} parent=5 // pred_check_branch
        %2555 = sbr.rel (%p2553) target = $region64
      $region63: #{tpu_custom_call.1} parent=5 // pred_region
        %s2556 = ssub.s32 %s18, 2
        // Predicated region
        $region65: #{tpu_custom_call.1} parent=63 // pred_check
          %p2557 = pneg %p251
        $region66: #{tpu_custom_call.1} parent=63 // pred_check_branch
          %2559 = sbr.rel (%p2557) target = $region68
        $region67: #{tpu_custom_call.1} parent=63 // pred_region
          %s2560 = sand.u32 %s236, 1
          %s2561 = scalar_lea.sflag [#allocation3], %s2560
          %s2562 = sand.u32 %s236, 1
          %s2563 = smul.addr %s2562, 208
          %s2564 = scalar_lea.vmem [#allocation2], %s2563
          %2565 = dma.done %s2561, 3328
        $region68: #{tpu_custom_call.1} parent=63 // pred_fallthru
          _
      $region64: #{tpu_custom_call.1} parent=5 // pred_fallthru
        _
    $region6: #{tpu_custom_call.1} parent=1 // loop_footer
      %s22 = sadd.s32 1, %s18
    $region7: #{tpu_custom_call.1} parent=1 // loop_footer_branch
      %17 = sbr.rel target = $region3
    $region8: #{tpu_custom_call.1} parent=1 // loop_exit
      _
    %2566 = vsyncpa [#allocation3], 1
    %s2567 = scalar_lea.sflag [#allocation3], 1
    %2568 = vsyncpa %s2567, 1

</llo_original>
